<compile_context>
chip_gen: v7x
topology: tpu7x:2x2x1
jax: 0.10.0
libtpu: 0.0.40
codegen_flags: <defaults>
</compile_context>

<pallas_src>
import jax
import jax.numpy as jnp
from jax.experimental import pallas as pl
from jax.experimental.pallas import tpu as pltpu

H_IN = W_IN = 100
KS = 5
C_OUT = 128
POOL = 80                      # AvgPool(20) then AvgPool(4) == mean over [:80,:80]
N_POS = POOL * POOL            # 6400 conv output pixels actually used
N_CLASSES = 3
CLS_PAD = 8                    # sublane-padded class dimension


def _model_kernel(p_ref, cw_ref, cb_ref, dw_ref, db_ref, out_ref):
    p = p_ref[0]                                                      # (25, 6400)

    # conv1 as im2col matmul + bias + ReLU:  (128,25) @ (25,6400) -> (128,6400)
    y = jnp.dot(cw_ref[...], p, preferred_element_type=jnp.float32)
    y = jnp.maximum(y + cb_ref[...], 0.0)                             # cb (128,1) bcast

    # AvgPool(20) -> AvgPool(4) == mean over all 6400 retained conv outputs.
    # 1/6400 is folded into dw; do the reduction on VPU/XLU (MXU is the
    # binding unit here).
    pooled = jnp.sum(y, axis=1, keepdims=True)                        # (128, 1)

    # dense (128 -> 3, padded to 8 rows) + masked softmax over the 3 classes
    logits = jnp.dot(dw_ref[...], pooled,
                     preferred_element_type=jnp.float32) + db_ref[...]  # (8, 1)
    row = jax.lax.broadcasted_iota(jnp.int32, (CLS_PAD, 1), 0)
    valid = row < N_CLASSES
    logits = jnp.where(valid, logits, -1e30)
    m = jnp.max(logits, axis=0, keepdims=True)
    e = jnp.where(valid, jnp.exp(logits - m), 0.0)
    probs = e / jnp.sum(e, axis=0, keepdims=True)                     # (8, 1)
    out_ref[...] = probs[None]                                        # (1, 8, 1)


def model_forward(x, params):
    """x: (N, 1, 100, 100) float32 (already resized + grayscaled)."""
    cw, cb, dw, db = params["cw"], params["cb"], params["dw"], params["db"]
    N = x.shape[0]
    xs = x[:, 0].astype(jnp.float32)                                  # (N, 100, 100)

    # im2col glue over the pooled 80x80 region only (pure data rearrangement).
    # Layout (N, 25, 6400): contraction dim in sublanes, positions lane-dense.
    # row index k = dh*5 + dw, column index p = h*80 + w.
    slices = [xs[:, dh:dh + POOL, dw_:dw_ + POOL].reshape(N, 1, N_POS)
              for dh in range(KS) for dw_ in range(KS)]
    patches = jnp.concatenate(slices, axis=1)                         # (N, 25, 6400)

    cw_mat = cw.reshape(C_OUT, KS * KS).astype(jnp.float32)           # (128, 25)
    cb_col = cb.reshape(C_OUT, 1).astype(jnp.float32)                 # (128, 1)
    dw_pad = jnp.zeros((CLS_PAD, C_OUT), jnp.float32).at[:N_CLASSES].set(
        dw.astype(jnp.float32) * (1.0 / N_POS))                       # pool scale folded in
    db_col = jnp.zeros((CLS_PAD, 1), jnp.float32).at[:N_CLASSES, 0].set(
        db.astype(jnp.float32))

    out = pl.pallas_call(
        _model_kernel,
        out_shape=jax.ShapeDtypeStruct((N, CLS_PAD, 1), jnp.float32),
        grid_spec=pltpu.PrefetchScalarGridSpec(
            num_scalar_prefetch=0,
            grid=(N,),
            in_specs=[
                pl.BlockSpec((1, KS * KS, N_POS), lambda b: (b, 0, 0)),
                pl.BlockSpec((C_OUT, KS * KS), lambda b: (0, 0)),
                pl.BlockSpec((C_OUT, 1), lambda b: (0, 0)),
                pl.BlockSpec((CLS_PAD, C_OUT), lambda b: (0, 0)),
                pl.BlockSpec((CLS_PAD, 1), lambda b: (0, 0)),
            ],
            out_specs=pl.BlockSpec((1, CLS_PAD, 1), lambda b: (b, 0, 0)),
        ),
        compiler_params=pltpu.CompilerParams(
            dimension_semantics=("parallel",),
            vmem_limit_bytes=32 << 20),
    )(patches, cw_mat, cb_col, dw_pad, db_col)
    return out[:, :N_CLASSES, 0]                                      # (N, 3)


def _reference(x, params):
    cw, cb, dw, db = params["cw"], params["cb"], params["dw"], params["db"]
    conv = jax.lax.conv_general_dilated(
        x, cw, window_strides=(1, 1), padding="VALID",
        dimension_numbers=("NCHW", "OIHW", "NCHW"))
    conv = jnp.maximum(conv + cb[None, :, None, None], 0.0)
    pooled = conv[:, :, :POOL, :POOL].mean(axis=(2, 3))               # (N, 128)
    logits = pooled @ dw.T + db
    return jax.nn.softmax(logits, axis=-1)


def _init_params(key):
    k1, k2, k3, k4 = jax.random.split(key, 4)
    return {
        "cw": jax.random.normal(k1, (C_OUT, 1, KS, KS), jnp.float32) * 0.1,
        "cb": jax.random.normal(k2, (C_OUT,), jnp.float32) * 0.1,
        "dw": jax.random.normal(k3, (N_CLASSES, C_OUT), jnp.float32) * 0.1,
        "db": jax.random.normal(k4, (N_CLASSES,), jnp.float32) * 0.1,
    }


if __name__ == "__main__":
    key = jax.random.PRNGKey(0)
    kp, kx = jax.random.split(key)
    params = _init_params(kp)
    x = jax.random.uniform(kx, (2, 1, H_IN, W_IN), jnp.float32)       # preprocessed input

    probs = jax.block_until_ready(model_forward(x, params))
    ref = jax.block_until_ready(_reference(x, params))

    assert probs.shape == (2, N_CLASSES)
    assert jnp.allclose(jnp.sum(probs, axis=-1), 1.0, atol=1e-5)
    assert jnp.allclose(probs, ref, atol=1e-4, rtol=1e-4), (probs, ref)
    print("KERNEL_OK")
</pallas_src>

<mosaic_0001>
module attributes {stable_mosaic.version = 11 : i64} {
  func.func @_model_kernel(%arg0: i32, %arg1: memref<1x25x6400xf32, #tpu.memory_space<vmem>>, %arg2: memref<128x25xf32, #tpu.memory_space<vmem>>, %arg3: memref<128x1xf32, #tpu.memory_space<vmem>>, %arg4: memref<8x128xf32, #tpu.memory_space<vmem>>, %arg5: memref<8x1xf32, #tpu.memory_space<vmem>>, %arg6: memref<1x8x1xf32, #tpu.memory_space<vmem>>) attributes {dimension_semantics = [#tpu.dimension_semantics<parallel>], iteration_bounds = array<i64: 2>, scalar_prefetch = 0 : i64, scratch_operands = 0 : i64, tpu.core_type = #tpu.core_type<tc>, window_params = [{transform_indices = @transform_0, window_bounds = array<i64: 1, 25, 6400>}, {pipeline_mode = #tpu.pipeline_mode<synchronous>, transform_indices = @transform_1, window_bounds = array<i64: 128, 25>}, {pipeline_mode = #tpu.pipeline_mode<synchronous>, transform_indices = @transform_2, window_bounds = array<i64: 128, 1>}, {pipeline_mode = #tpu.pipeline_mode<synchronous>, transform_indices = @transform_3, window_bounds = array<i64: 8, 128>}, {pipeline_mode = #tpu.pipeline_mode<synchronous>, transform_indices = @transform_4, window_bounds = array<i64: 8, 1>}, {transform_indices = @transform_5, window_bounds = array<i64: 1, 8, 1>}]} {
    %c0 = arith.constant 0 : index
    %c0_0 = arith.constant 0 : index
    %c0_1 = arith.constant 0 : index
    %0 = vector.load %arg1[%c0, %c0_0, %c0_1] : memref<1x25x6400xf32, #tpu.memory_space<vmem>>, vector<1x25x6400xf32>
    %1 = vector.shape_cast %0 : vector<1x25x6400xf32> to vector<25x6400xf32>
    %c0_2 = arith.constant 0 : index
    %c0_3 = arith.constant 0 : index
    %2 = vector.load %arg2[%c0_2, %c0_3] : memref<128x25xf32, #tpu.memory_space<vmem>>, vector<128x25xf32>
    %cst = arith.constant dense<0.000000e+00> : vector<128x6400xf32>
    %3 = tpu.matmul %2, %1, %cst {dimension_numbers = #tpu.dot_dimension_numbers<[1], [0], [0], [1], [0, 0, 1, 1], [], []>} : vector<128x25xf32>, vector<25x6400xf32>, vector<128x6400xf32> -> vector<128x6400xf32>
    %c0_4 = arith.constant 0 : index
    %c0_5 = arith.constant 0 : index
    %4 = vector.load %arg3[%c0_4, %c0_5] : memref<128x1xf32, #tpu.memory_space<vmem>>, vector<128x1xf32>
    %5 = vector.broadcast %4 : vector<128x1xf32> to vector<128x6400xf32>
    %6 = arith.addf %3, %5 : vector<128x6400xf32>
    %cst_6 = arith.constant 0.000000e+00 : f32
    %7 = vector.broadcast %cst_6 : f32 to vector<128x6400xf32>
    %8 = arith.maximumf %6, %7 : vector<128x6400xf32>
    %cst_7 = arith.constant dense<0.000000e+00> : vector<128xf32>
    %9 = vector.multi_reduction <add>, %8, %cst_7 [1] : vector<128x6400xf32> to vector<128xf32>
    %10 = vector.shape_cast %9 : vector<128xf32> to vector<128x1xf32>
    %c0_8 = arith.constant 0 : index
    %c0_9 = arith.constant 0 : index
    %11 = vector.load %arg4[%c0_8, %c0_9] : memref<8x128xf32, #tpu.memory_space<vmem>>, vector<8x128xf32>
    %cst_10 = arith.constant dense<0.000000e+00> : vector<8x1xf32>
    %12 = tpu.matmul %11, %10, %cst_10 {dimension_numbers = #tpu.dot_dimension_numbers<[1], [0], [0], [1], [0, 0, 1, 1], [], []>} : vector<8x128xf32>, vector<128x1xf32>, vector<8x1xf32> -> vector<8x1xf32>
    %c0_11 = arith.constant 0 : index
    %c0_12 = arith.constant 0 : index
    %13 = vector.load %arg5[%c0_11, %c0_12] : memref<8x1xf32, #tpu.memory_space<vmem>>, vector<8x1xf32>
    %14 = arith.addf %12, %13 : vector<8x1xf32>
    %15 = tpu.iota {dimensions = array<i32: 0>} : vector<8x1xi32>
    %c3_i32 = arith.constant 3 : i32
    %16 = vector.broadcast %c3_i32 : i32 to vector<8x1xi32>
    %17 = arith.cmpi slt, %15, %16 : vector<8x1xi32>
    %cst_13 = arith.constant -1.000000e+30 : f32
    %18 = vector.broadcast %cst_13 : f32 to vector<8x1xf32>
    %19 = arith.select %17, %14, %18 : vector<8x1xi1>, vector<8x1xf32>
    %cst_14 = arith.constant dense<0xFF800000> : vector<1xf32>
    %20 = vector.multi_reduction <maximumf>, %19, %cst_14 [0] : vector<8x1xf32> to vector<1xf32>
    %21 = vector.shape_cast %20 : vector<1xf32> to vector<1x1xf32>
    %22 = vector.broadcast %21 : vector<1x1xf32> to vector<8x1xf32>
    %23 = arith.subf %19, %22 : vector<8x1xf32>
    %24 = math.exp %23 : vector<8x1xf32>
    %cst_15 = arith.constant 0.000000e+00 : f32
    %25 = vector.broadcast %cst_15 : f32 to vector<8x1xf32>
    %26 = arith.select %17, %24, %25 : vector<8x1xi1>, vector<8x1xf32>
    %cst_16 = arith.constant dense<0.000000e+00> : vector<1xf32>
    %27 = vector.multi_reduction <add>, %26, %cst_16 [0] : vector<8x1xf32> to vector<1xf32>
    %28 = vector.shape_cast %27 : vector<1xf32> to vector<1x1xf32>
    %29 = vector.broadcast %28 : vector<1x1xf32> to vector<8x1xf32>
    %30 = arith.divf %26, %29 : vector<8x1xf32>
    %31 = vector.shape_cast %30 : vector<8x1xf32> to vector<1x8x1xf32>
    %c0_17 = arith.constant 0 : index
    %c0_18 = arith.constant 0 : index
    %c0_19 = arith.constant 0 : index
    %32 = vector.load %arg6[%c0_17, %c0_18, %c0_19] : memref<1x8x1xf32, #tpu.memory_space<vmem>>, vector<1x8x1xf32>
    tpu.vector_store %arg6[%c0_17, %c0_18, %c0_19], %31 {strides = array<i32>} : memref<1x8x1xf32, #tpu.memory_space<vmem>>, vector<1x8x1xf32>,
    return
  }
  func.func @transform_0(%arg0: i32) -> (i32, i32, i32) {
    %c0_i32 = arith.constant 0 : i32
    %c0_i32_0 = arith.constant 0 : i32
    %c0_i32_1 = arith.constant 0 : i32
    return %arg0, %c0_i32, %c0_i32_0 : i32, i32, i32
  }
  func.func @transform_1(%arg0: i32) -> (i32, i32) {
    %c0_i32 = arith.constant 0 : i32
    %c0_i32_0 = arith.constant 0 : i32
    %c0_i32_1 = arith.constant 0 : i32
    return %c0_i32, %c0_i32_0 : i32, i32
  }
  func.func @transform_2(%arg0: i32) -> (i32, i32) {
    %c0_i32 = arith.constant 0 : i32
    %c0_i32_0 = arith.constant 0 : i32
    %c0_i32_1 = arith.constant 0 : i32
    return %c0_i32, %c0_i32_0 : i32, i32
  }
  func.func @transform_3(%arg0: i32) -> (i32, i32) {
    %c0_i32 = arith.constant 0 : i32
    %c0_i32_0 = arith.constant 0 : i32
    %c0_i32_1 = arith.constant 0 : i32
    return %c0_i32, %c0_i32_0 : i32, i32
  }
  func.func @transform_4(%arg0: i32) -> (i32, i32) {
    %c0_i32 = arith.constant 0 : i32
    %c0_i32_0 = arith.constant 0 : i32
    %c0_i32_1 = arith.constant 0 : i32
    return %c0_i32, %c0_i32_0 : i32, i32
  }
  func.func @transform_5(%arg0: i32) -> (i32, i32, i32) {
    %c0_i32 = arith.constant 0 : i32
    %c0_i32_0 = arith.constant 0 : i32
    %c0_i32_1 = arith.constant 0 : i32
    return %arg0, %c0_i32, %c0_i32_0 : i32, i32, i32
  }
}

</mosaic_0001>

<llo_original>
// kernel: tpu_custom_call.1
$region0: #{tpu_custom_call.1}
  #allocation0 [shape = 'u32[]', space=smem, size = 0x4, offset = 0x4, fixed_abs, tag = 'smem constant byte address 0x4 - core index']
  #allocation1 [shape = 'u32[144,128]{1,0:T(1,128)}', space=vmem, size = 0x12000, scoped, tag = 'internal scratch']
  %s0 = inlined_call_operand.vmem [shape: f32[2,25,6400], index: 0, kind: input, shape index: {}]
  %s1 = inlined_call_operand.vmem [shape: f32[128,25], index: 1, kind: input, shape index: {}]
  %s2 = inlined_call_operand.vmem [shape: f32[128,1], index: 2, kind: input, shape index: {}]
  %s3 = inlined_call_operand.vmem [shape: f32[8,128], index: 3, kind: input, shape index: {}]
  %s4 = inlined_call_operand.vmem [shape: f32[8,1], index: 4, kind: input, shape index: {}]
  %s5 = inlined_call_operand.vmem [shape: f32[2,8,1], index: 5, kind: output, shape index: {}]
  %s6 = sld [smem:[#allocation0]]
  $region53: #{tpu_custom_call.1} parent=0
    _
  %s8 = ssub.s32 1, %s6
  %s9 = scalar_select 0, %s8, %s6
  loop: start=0, step=1, limit=4
  $region2: #{tpu_custom_call.1} parent=0 // loop_pre_header
    _
  $region3: #{tpu_custom_call.1} parent=0 // loop_header
    %s11 = sphi 0, %s15
    %p12 = scmp.ge.s32.totalorder %s11, 4
    %s21 = sphi 0, %s23
    %s24 = sphi 0, %s21
    %s25 = sphi 0, %s24
    %s41 = sphi 0, %s25
    %s45 = sphi 0, %s45
    %s47 = sphi 0, %s45
    %s48 = sphi 0, %s47
    %s62 = sphi 0, %s48
    %s66 = sphi 0, %s66
    %s68 = sphi 0, %s66
    %s69 = sphi 0, %s68
    %s83 = sphi 0, %s69
    %s87 = sphi 0, %s87
    %s89 = sphi 0, %s87
    %s90 = sphi 0, %s89
    %s104 = sphi 0, %s90
    %s108 = sphi 0, %s108
    %s110 = sphi 0, %s108
    %s111 = sphi 0, %s110
    %s125 = sphi 0, %s111
    %s131 = sphi 0, %s133
    %s134 = sphi 0, %s131
    %s135 = sphi 0, %s134
    %s151 = sphi 0, %s135
  $region4: #{tpu_custom_call.1} parent=0 // loop_header_branch
    %14 = sbr.rel (%p12) target = $region8
  $region5: #{tpu_custom_call.1} parent=0 // loop_body
    %s16 = ssub.s32 %s11, 1
    %s17 = ssub.s32 %s11, 2
    %s18 = sadd.s32 %s11, 1
    %s19 = ssub.s32 %s11, %s18
    %p20 = scmp.eq.s32.totalorder %s19, 0
    %s22 = sadd.s32 %s21, 1
    %s23 = scalar_select %p20, %s21, %s22
    %p26 = pneg %p20
    %p27 = scmp.eq.s32.totalorder %s11, 1
    %p28 = por %p26, %p27
    %p29 = scmp.ne.s32.totalorder %s21, %s24
    %p30 = scmp.eq.s32.totalorder %s11, 0
    %p31 = por %p29, %p30
    %p32 = scmp.ne.s32.totalorder %s21, %s24
    %p33 = scmp.eq.s32.totalorder %s16, 1
    %p34 = por %p32, %p33
    %p35 = scmp.ne.s32.totalorder %s24, %s25
    %p36 = scmp.eq.s32.totalorder %s16, 0
    %p37 = por %p35, %p36
    %p38 = scmp.ne.s32.totalorder %s24, %s25
    %p39 = scmp.eq.s32.totalorder %s17, 1
    %p40 = por %p38, %p39
    %p42 = scmp.ne.s32.totalorder %s25, %s41
    %p43 = scmp.eq.s32.totalorder %s17, 0
    %p44 = por %p42, %p43
    %s46 = sadd.s32 %s45, 1
    %p49 = scmp.eq.s32.totalorder %s11, 1
    %p50 = scmp.ne.s32.totalorder %s45, %s47
    %p51 = scmp.eq.s32.totalorder %s11, 0
    %p52 = por %p50, %p51
    %p53 = scmp.ne.s32.totalorder %s45, %s47
    %p54 = scmp.eq.s32.totalorder %s16, 1
    %p55 = por %p53, %p54
    %p56 = scmp.ne.s32.totalorder %s47, %s48
    %p57 = scmp.eq.s32.totalorder %s16, 0
    %p58 = por %p56, %p57
    %p59 = scmp.ne.s32.totalorder %s47, %s48
    %p60 = scmp.eq.s32.totalorder %s17, 1
    %p61 = por %p59, %p60
    %p63 = scmp.ne.s32.totalorder %s48, %s62
    %p64 = scmp.eq.s32.totalorder %s17, 0
    %p65 = por %p63, %p64
    %s67 = sadd.s32 %s66, 1
    %p70 = scmp.eq.s32.totalorder %s11, 1
    %p71 = scmp.ne.s32.totalorder %s66, %s68
    %p72 = scmp.eq.s32.totalorder %s11, 0
    %p73 = por %p71, %p72
    %p74 = scmp.ne.s32.totalorder %s66, %s68
    %p75 = scmp.eq.s32.totalorder %s16, 1
    %p76 = por %p74, %p75
    %p77 = scmp.ne.s32.totalorder %s68, %s69
    %p78 = scmp.eq.s32.totalorder %s16, 0
    %p79 = por %p77, %p78
    %p80 = scmp.ne.s32.totalorder %s68, %s69
    %p81 = scmp.eq.s32.totalorder %s17, 1
    %p82 = por %p80, %p81
    %p84 = scmp.ne.s32.totalorder %s69, %s83
    %p85 = scmp.eq.s32.totalorder %s17, 0
    %p86 = por %p84, %p85
    %s88 = sadd.s32 %s87, 1
    %p91 = scmp.eq.s32.totalorder %s11, 1
    %p92 = scmp.ne.s32.totalorder %s87, %s89
    %p93 = scmp.eq.s32.totalorder %s11, 0
    %p94 = por %p92, %p93
    %p95 = scmp.ne.s32.totalorder %s87, %s89
    %p96 = scmp.eq.s32.totalorder %s16, 1
    %p97 = por %p95, %p96
    %p98 = scmp.ne.s32.totalorder %s89, %s90
    %p99 = scmp.eq.s32.totalorder %s16, 0
    %p100 = por %p98, %p99
    %p101 = scmp.ne.s32.totalorder %s89, %s90
    %p102 = scmp.eq.s32.totalorder %s17, 1
    %p103 = por %p101, %p102
    %p105 = scmp.ne.s32.totalorder %s90, %s104
    %p106 = scmp.eq.s32.totalorder %s17, 0
    %p107 = por %p105, %p106
    %s109 = sadd.s32 %s108, 1
    %p112 = scmp.eq.s32.totalorder %s11, 1
    %p113 = scmp.ne.s32.totalorder %s108, %s110
    %p114 = scmp.eq.s32.totalorder %s11, 0
    %p115 = por %p113, %p114
    %p116 = scmp.ne.s32.totalorder %s108, %s110
    %p117 = scmp.eq.s32.totalorder %s16, 1
    %p118 = por %p116, %p117
    %p119 = scmp.ne.s32.totalorder %s110, %s111
    %p120 = scmp.eq.s32.totalorder %s16, 0
    %p121 = por %p119, %p120
    %p122 = scmp.ne.s32.totalorder %s110, %s111
    %p123 = scmp.eq.s32.totalorder %s17, 1
    %p124 = por %p122, %p123
    %p126 = scmp.ne.s32.totalorder %s111, %s125
    %p127 = scmp.eq.s32.totalorder %s17, 0
    %p128 = por %p126, %p127
    %s129 = ssub.s32 %s11, %s18
    %p130 = scmp.eq.s32.totalorder %s129, 0
    %s132 = sadd.s32 %s131, 1
    %s133 = scalar_select %p130, %s131, %s132
    %p136 = pneg %p130
    %p137 = scmp.eq.s32.totalorder %s11, 1
    %p138 = por %p136, %p137
    %p139 = scmp.ne.s32.totalorder %s131, %s134
    %p140 = scmp.eq.s32.totalorder %s11, 0
    %p141 = por %p139, %p140
    %p142 = scmp.ne.s32.totalorder %s131, %s134
    %p143 = scmp.eq.s32.totalorder %s16, 1
    %p144 = por %p142, %p143
    %p145 = scmp.ne.s32.totalorder %s134, %s135
    %p146 = scmp.eq.s32.totalorder %s16, 0
    %p147 = por %p145, %p146
    %p148 = scmp.ne.s32.totalorder %s134, %s135
    %p149 = scmp.eq.s32.totalorder %s17, 1
    %p150 = por %p148, %p149
    %p152 = scmp.ne.s32.totalorder %s135, %s151
    %p153 = scmp.eq.s32.totalorder %s17, 0
    %p154 = por %p152, %p153
    %p155 = scmp.le.s32.totalorder 1, %s11
    %p156 = scmp.lt.s32.totalorder %s11, 3
    %p157 = pnand %p155, %p156
    %p158 = pneg %p157
    // Predicated region
    $region9: #{tpu_custom_call.1} parent=5 // pred_check
      _
    $region10: #{tpu_custom_call.1} parent=5 // pred_check_branch
      %160 = sbr.rel (%p157) target = $region12
    $region11: #{tpu_custom_call.1} parent=5 // pred_region
      %s161 = ssub.s32 %s11, 1
      // Predicated region
      $region13: #{tpu_custom_call.1} parent=11 // pred_check
        %p162 = pneg %p58
      $region14: #{tpu_custom_call.1} parent=11 // pred_check_branch
        %164 = sbr.rel (%p162) target = $region16
      $region15: #{tpu_custom_call.1} parent=11 // pred_region
        _
      $region16: #{tpu_custom_call.1} parent=11 // pred_fallthru
        _
      // Predicated region
      $region17: #{tpu_custom_call.1} parent=11 // pred_check
        %p165 = pneg %p79
      $region18: #{tpu_custom_call.1} parent=11 // pred_check_branch
        %167 = sbr.rel (%p165) target = $region20
      $region19: #{tpu_custom_call.1} parent=11 // pred_region
        _
      $region20: #{tpu_custom_call.1} parent=11 // pred_fallthru
        _
      // Predicated region
      $region21: #{tpu_custom_call.1} parent=11 // pred_check
        %p168 = pneg %p100
      $region22: #{tpu_custom_call.1} parent=11 // pred_check_branch
        %170 = sbr.rel (%p168) target = $region24
      $region23: #{tpu_custom_call.1} parent=11 // pred_region
        _
      $region24: #{tpu_custom_call.1} parent=11 // pred_fallthru
        _
      // Predicated region
      $region25: #{tpu_custom_call.1} parent=11 // pred_check
        %p171 = pneg %p121
      $region26: #{tpu_custom_call.1} parent=11 // pred_check_branch
        %173 = sbr.rel (%p171) target = $region28
      $region27: #{tpu_custom_call.1} parent=11 // pred_region
        _
      $region28: #{tpu_custom_call.1} parent=11 // pred_fallthru
        _
    $region12: #{tpu_custom_call.1} parent=5 // pred_fallthru
      _
    %p174 = scmp.lt.s32.totalorder %s11, 2
    // Predicated region
    $region29: #{tpu_custom_call.1} parent=5 // pred_check
      %p175 = pneg %p174
    $region30: #{tpu_custom_call.1} parent=5 // pred_check_branch
      %177 = sbr.rel (%p175) target = $region32
    $region31: #{tpu_custom_call.1} parent=5 // pred_region
      // Predicated region
      $region33: #{tpu_custom_call.1} parent=31 // pred_check
        %p178 = pneg %p31
      $region34: #{tpu_custom_call.1} parent=31 // pred_check_branch
        %180 = sbr.rel (%p178) target = $region36
      $region35: #{tpu_custom_call.1} parent=31 // pred_region
        %p181 = scmp.lt.s32.totalorder %s11, 1
        %s182 = scalar_select %p181, %s11, 1
        %s183 = smul.addr %s182, 200
        %s184 = smul.addr %s183, 8
        %s185 = scalar_lea.vmem %s0, %s184
      $region36: #{tpu_custom_call.1} parent=31 // pred_fallthru
        _
    $region32: #{tpu_custom_call.1} parent=5 // pred_fallthru
      _
    %p186 = scmp.le.s32.totalorder 1, %s11
    %p187 = scmp.lt.s32.totalorder %s11, 3
    %p188 = pnand %p186, %p187
    %p189 = pneg %p188
    // Predicated region
    $region37: #{tpu_custom_call.1} parent=5 // pred_check
      _
    $region38: #{tpu_custom_call.1} parent=5 // pred_check_branch
      %191 = sbr.rel (%p188) target = $region40
    $region39: #{tpu_custom_call.1} parent=5 // pred_region
      %s192 = ssub.s32 %s11, 1
      %p193 = scmp.lt.s32.totalorder %s16, 1
      %s194 = scalar_select %p193, %s16, 1
      %s195 = smul.addr %s194, 200
      %s196 = smul.addr %s195, 8
      %s197 = scalar_lea.vmem %s0, %s196
      %p198 = pneg %p37
      %p199 = pneg %p34
      %p200 = pneg %p58
      %p201 = pneg %p55
      %p202 = pneg %p79
      %p203 = pneg %p76
      %p204 = pneg %p100
      %p205 = pneg %p97
      %p206 = pneg %p121
      %p207 = pneg %p118
      %p208 = pneg %p147
      %p209 = pneg %p144
      %p210 = scmp.lt.s32.totalorder %s16, 1
      %s211 = scalar_select %p210, %s16, 1
      %s212 = smul.addr %s211, 8
      %s213 = scalar_lea.vmem %s5, %s212
      %p214 = scmp.lt.s32.totalorder %s16, 1
      %s215 = scalar_select %p214, %s16, 1
      %s216 = smul.addr %s215, 200
      %s217 = smul.addr %s216, 8
      %s218 = scalar_lea.vmem %s0, %s217
      %p219 = scmp.lt.s32.totalorder %s16, 1
      %s220 = scalar_select %p219, %s16, 1
      %s221 = smul.addr %s220, 8
      %s222 = scalar_lea.vmem %s5, %s221
      %v223 = vld [vmem:[%s218] sm:$0xff]
      %v224 = vld [vmem:[%s218 + $0x8] sm:$0xff]
      %v225 = vld [vmem:[%s218 + $0x10] sm:$0xff]
      %v226 = vld [vmem:[%s218 + $0x18] sm:$0xff]
      %v227 = vld [vmem:[%s218 + $0x20] sm:$0xff]
      %v228 = vld [vmem:[%s218 + $0x28] sm:$0xff]
      %v229 = vld [vmem:[%s218 + $0x30] sm:$0xff]
      %v230 = vld [vmem:[%s218 + $0x38] sm:$0xff]
      %v231 = vld [vmem:[%s218 + $0x40] sm:$0xff]
      %v232 = vld [vmem:[%s218 + $0x48] sm:$0xff]
      %v233 = vld [vmem:[%s218 + $0x50] sm:$0xff]
      %v234 = vld [vmem:[%s218 + $0x58] sm:$0xff]
      %v235 = vld [vmem:[%s218 + $0x60] sm:$0xff]
      %v236 = vld [vmem:[%s218 + $0x68] sm:$0xff]
      %v237 = vld [vmem:[%s218 + $0x70] sm:$0xff]
      %v238 = vld [vmem:[%s218 + $0x78] sm:$0xff]
      %v239 = vld [vmem:[%s218 + $0x80] sm:$0xff]
      %v240 = vld [vmem:[%s218 + $0x88] sm:$0xff]
      %v241 = vld [vmem:[%s218 + $0x90] sm:$0xff]
      %v242 = vld [vmem:[%s218 + $0x98] sm:$0xff]
      %v243 = vld [vmem:[%s218 + $0xa0] sm:$0xff]
      %v244 = vld [vmem:[%s218 + $0xa8] sm:$0xff]
      %v245 = vld [vmem:[%s218 + $0xb0] sm:$0xff]
      %v246 = vld [vmem:[%s218 + $0xb8] sm:$0xff]
      %v247 = vld [vmem:[%s218 + $0xc0] sm:$0xff]
      %v248 = vld [vmem:[%s218 + $0xc8] sm:$0xff]
      %v249 = vld [vmem:[%s218 + $0xd0] sm:$0xff]
      %v250 = vld [vmem:[%s218 + $0xd8] sm:$0xff]
      %v251 = vld [vmem:[%s218 + $0xe0] sm:$0xff]
      %v252 = vld [vmem:[%s218 + $0xe8] sm:$0xff]
      %v253 = vld [vmem:[%s218 + $0xf0] sm:$0xff]
      %v254 = vld [vmem:[%s218 + $0xf8] sm:$0xff]
      %v255 = vld [vmem:[%s218 + $0x100] sm:$0xff]
      %v256 = vld [vmem:[%s218 + $0x108] sm:$0xff]
      %v257 = vld [vmem:[%s218 + $0x110] sm:$0xff]
      %v258 = vld [vmem:[%s218 + $0x118] sm:$0xff]
      %v259 = vld [vmem:[%s218 + $0x120] sm:$0xff]
      %v260 = vld [vmem:[%s218 + $0x128] sm:$0xff]
      %v261 = vld [vmem:[%s218 + $0x130] sm:$0xff]
      %v262 = vld [vmem:[%s218 + $0x138] sm:$0xff]
      %v263 = vld [vmem:[%s218 + $0x140] sm:$0xff]
      %v264 = vld [vmem:[%s218 + $0x148] sm:$0xff]
      %v265 = vld [vmem:[%s218 + $0x150] sm:$0xff]
      %v266 = vld [vmem:[%s218 + $0x158] sm:$0xff]
      %v267 = vld [vmem:[%s218 + $0x160] sm:$0xff]
      %v268 = vld [vmem:[%s218 + $0x168] sm:$0xff]
      %v269 = vld [vmem:[%s218 + $0x170] sm:$0xff]
      %v270 = vld [vmem:[%s218 + $0x178] sm:$0xff]
      %v271 = vld [vmem:[%s218 + $0x180] sm:$0xff]
      %v272 = vld [vmem:[%s218 + $0x188] sm:$0xff]
      %v273 = vld [vmem:[%s218 + $0x190] sm:$0xff]
      %v274 = vld [vmem:[%s218 + $0x198] sm:$0xff]
      %v275 = vld [vmem:[%s218 + $0x1a0] sm:$0xff]
      %v276 = vld [vmem:[%s218 + $0x1a8] sm:$0xff]
      %v277 = vld [vmem:[%s218 + $0x1b0] sm:$0xff]
      %v278 = vld [vmem:[%s218 + $0x1b8] sm:$0xff]
      %v279 = vld [vmem:[%s218 + $0x1c0] sm:$0xff]
      %v280 = vld [vmem:[%s218 + $0x1c8] sm:$0xff]
      %v281 = vld [vmem:[%s218 + $0x1d0] sm:$0xff]
      %v282 = vld [vmem:[%s218 + $0x1d8] sm:$0xff]
      %v283 = vld [vmem:[%s218 + $0x1e0] sm:$0xff]
      %v284 = vld [vmem:[%s218 + $0x1e8] sm:$0xff]
      %v285 = vld [vmem:[%s218 + $0x1f0] sm:$0xff]
      %v286 = vld [vmem:[%s218 + $0x1f8] sm:$0xff]
      %v287 = vld [vmem:[%s218 + $0x200] sm:$0xff]
      %v288 = vld [vmem:[%s218 + $0x208] sm:$0xff]
      %v289 = vld [vmem:[%s218 + $0x210] sm:$0xff]
      %v290 = vld [vmem:[%s218 + $0x218] sm:$0xff]
      %v291 = vld [vmem:[%s218 + $0x220] sm:$0xff]
      %v292 = vld [vmem:[%s218 + $0x228] sm:$0xff]
      %v293 = vld [vmem:[%s218 + $0x230] sm:$0xff]
      %v294 = vld [vmem:[%s218 + $0x238] sm:$0xff]
      %v295 = vld [vmem:[%s218 + $0x240] sm:$0xff]
      %v296 = vld [vmem:[%s218 + $0x248] sm:$0xff]
      %v297 = vld [vmem:[%s218 + $0x250] sm:$0xff]
      %v298 = vld [vmem:[%s218 + $0x258] sm:$0xff]
      %v299 = vld [vmem:[%s218 + $0x260] sm:$0xff]
      %v300 = vld [vmem:[%s218 + $0x268] sm:$0xff]
      %v301 = vld [vmem:[%s218 + $0x270] sm:$0xff]
      %v302 = vld [vmem:[%s218 + $0x278] sm:$0xff]
      %v303 = vld [vmem:[%s218 + $0x280] sm:$0xff]
      %v304 = vld [vmem:[%s218 + $0x288] sm:$0xff]
      %v305 = vld [vmem:[%s218 + $0x290] sm:$0xff]
      %v306 = vld [vmem:[%s218 + $0x298] sm:$0xff]
      %v307 = vld [vmem:[%s218 + $0x2a0] sm:$0xff]
      %v308 = vld [vmem:[%s218 + $0x2a8] sm:$0xff]
      %v309 = vld [vmem:[%s218 + $0x2b0] sm:$0xff]
      %v310 = vld [vmem:[%s218 + $0x2b8] sm:$0xff]
      %v311 = vld [vmem:[%s218 + $0x2c0] sm:$0xff]
      %v312 = vld [vmem:[%s218 + $0x2c8] sm:$0xff]
      %v313 = vld [vmem:[%s218 + $0x2d0] sm:$0xff]
      %v314 = vld [vmem:[%s218 + $0x2d8] sm:$0xff]
      %v315 = vld [vmem:[%s218 + $0x2e0] sm:$0xff]
      %v316 = vld [vmem:[%s218 + $0x2e8] sm:$0xff]
      %v317 = vld [vmem:[%s218 + $0x2f0] sm:$0xff]
      %v318 = vld [vmem:[%s218 + $0x2f8] sm:$0xff]
      %v319 = vld [vmem:[%s218 + $0x300] sm:$0xff]
      %v320 = vld [vmem:[%s218 + $0x308] sm:$0xff]
      %v321 = vld [vmem:[%s218 + $0x310] sm:$0xff]
      %v322 = vld [vmem:[%s218 + $0x318] sm:$0xff]
      %v323 = vld [vmem:[%s218 + $0x320] sm:$0xff]
      %v324 = vld [vmem:[%s218 + $0x328] sm:$0xff]
      %v325 = vld [vmem:[%s218 + $0x330] sm:$0xff]
      %v326 = vld [vmem:[%s218 + $0x338] sm:$0xff]
      %v327 = vld [vmem:[%s218 + $0x340] sm:$0xff]
      %v328 = vld [vmem:[%s218 + $0x348] sm:$0xff]
      %v329 = vld [vmem:[%s218 + $0x350] sm:$0xff]
      %v330 = vld [vmem:[%s218 + $0x358] sm:$0xff]
      %v331 = vld [vmem:[%s218 + $0x360] sm:$0xff]
      %v332 = vld [vmem:[%s218 + $0x368] sm:$0xff]
      %v333 = vld [vmem:[%s218 + $0x370] sm:$0xff]
      %v334 = vld [vmem:[%s218 + $0x378] sm:$0xff]
      %v335 = vld [vmem:[%s218 + $0x380] sm:$0xff]
      %v336 = vld [vmem:[%s218 + $0x388] sm:$0xff]
      %v337 = vld [vmem:[%s218 + $0x390] sm:$0xff]
      %v338 = vld [vmem:[%s218 + $0x398] sm:$0xff]
      %v339 = vld [vmem:[%s218 + $0x3a0] sm:$0xff]
      %v340 = vld [vmem:[%s218 + $0x3a8] sm:$0xff]
      %v341 = vld [vmem:[%s218 + $0x3b0] sm:$0xff]
      %v342 = vld [vmem:[%s218 + $0x3b8] sm:$0xff]
      %v343 = vld [vmem:[%s218 + $0x3c0] sm:$0xff]
      %v344 = vld [vmem:[%s218 + $0x3c8] sm:$0xff]
      %v345 = vld [vmem:[%s218 + $0x3d0] sm:$0xff]
      %v346 = vld [vmem:[%s218 + $0x3d8] sm:$0xff]
      %v347 = vld [vmem:[%s218 + $0x3e0] sm:$0xff]
      %v348 = vld [vmem:[%s218 + $0x3e8] sm:$0xff]
      %v349 = vld [vmem:[%s218 + $0x3f0] sm:$0xff]
      %v350 = vld [vmem:[%s218 + $0x3f8] sm:$0xff]
      %v351 = vld [vmem:[%s218 + $0x400] sm:$0xff]
      %v352 = vld [vmem:[%s218 + $0x408] sm:$0xff]
      %v353 = vld [vmem:[%s218 + $0x410] sm:$0xff]
      %v354 = vld [vmem:[%s218 + $0x418] sm:$0xff]
      %v355 = vld [vmem:[%s218 + $0x420] sm:$0xff]
      %v356 = vld [vmem:[%s218 + $0x428] sm:$0xff]
      %v357 = vld [vmem:[%s218 + $0x430] sm:$0xff]
      %v358 = vld [vmem:[%s218 + $0x438] sm:$0xff]
      %v359 = vld [vmem:[%s218 + $0x440] sm:$0xff]
      %v360 = vld [vmem:[%s218 + $0x448] sm:$0xff]
      %v361 = vld [vmem:[%s218 + $0x450] sm:$0xff]
      %v362 = vld [vmem:[%s218 + $0x458] sm:$0xff]
      %v363 = vld [vmem:[%s218 + $0x460] sm:$0xff]
      %v364 = vld [vmem:[%s218 + $0x468] sm:$0xff]
      %v365 = vld [vmem:[%s218 + $0x470] sm:$0xff]
      %v366 = vld [vmem:[%s218 + $0x478] sm:$0xff]
      %v367 = vld [vmem:[%s218 + $0x480] sm:$0xff]
      %v368 = vld [vmem:[%s218 + $0x488] sm:$0xff]
      %v369 = vld [vmem:[%s218 + $0x490] sm:$0xff]
      %v370 = vld [vmem:[%s218 + $0x498] sm:$0xff]
      %v371 = vld [vmem:[%s218 + $0x4a0] sm:$0xff]
      %v372 = vld [vmem:[%s218 + $0x4a8] sm:$0xff]
      %v373 = vld [vmem:[%s218 + $0x4b0] sm:$0x1]
      %v374 = vld [vmem:[%s218 + $0x4b8] sm:$0x1]
      %v375 = vld [vmem:[%s218 + $0x4c0] sm:$0x1]
      %v376 = vld [vmem:[%s218 + $0x4c8] sm:$0x1]
      %v377 = vld [vmem:[%s218 + $0x4d0] sm:$0x1]
      %v378 = vld [vmem:[%s218 + $0x4d8] sm:$0x1]
      %v379 = vld [vmem:[%s218 + $0x4e0] sm:$0x1]
      %v380 = vld [vmem:[%s218 + $0x4e8] sm:$0x1]
      %v381 = vld [vmem:[%s218 + $0x4f0] sm:$0x1]
      %v382 = vld [vmem:[%s218 + $0x4f8] sm:$0x1]
      %v383 = vld [vmem:[%s218 + $0x500] sm:$0x1]
      %v384 = vld [vmem:[%s218 + $0x508] sm:$0x1]
      %v385 = vld [vmem:[%s218 + $0x510] sm:$0x1]
      %v386 = vld [vmem:[%s218 + $0x518] sm:$0x1]
      %v387 = vld [vmem:[%s218 + $0x520] sm:$0x1]
      %v388 = vld [vmem:[%s218 + $0x528] sm:$0x1]
      %v389 = vld [vmem:[%s218 + $0x530] sm:$0x1]
      %v390 = vld [vmem:[%s218 + $0x538] sm:$0x1]
      %v391 = vld [vmem:[%s218 + $0x540] sm:$0x1]
      %v392 = vld [vmem:[%s218 + $0x548] sm:$0x1]
      %v393 = vld [vmem:[%s218 + $0x550] sm:$0x1]
      %v394 = vld [vmem:[%s218 + $0x558] sm:$0x1]
      %v395 = vld [vmem:[%s218 + $0x560] sm:$0x1]
      %v396 = vld [vmem:[%s218 + $0x568] sm:$0x1]
      %v397 = vld [vmem:[%s218 + $0x570] sm:$0x1]
      %v398 = vld [vmem:[%s218 + $0x578] sm:$0x1]
      %v399 = vld [vmem:[%s218 + $0x580] sm:$0x1]
      %v400 = vld [vmem:[%s218 + $0x588] sm:$0x1]
      %v401 = vld [vmem:[%s218 + $0x590] sm:$0x1]
      %v402 = vld [vmem:[%s218 + $0x598] sm:$0x1]
      %v403 = vld [vmem:[%s218 + $0x5a0] sm:$0x1]
      %v404 = vld [vmem:[%s218 + $0x5a8] sm:$0x1]
      %v405 = vld [vmem:[%s218 + $0x5b0] sm:$0x1]
      %v406 = vld [vmem:[%s218 + $0x5b8] sm:$0x1]
      %v407 = vld [vmem:[%s218 + $0x5c0] sm:$0x1]
      %v408 = vld [vmem:[%s218 + $0x5c8] sm:$0x1]
      %v409 = vld [vmem:[%s218 + $0x5d0] sm:$0x1]
      %v410 = vld [vmem:[%s218 + $0x5d8] sm:$0x1]
      %v411 = vld [vmem:[%s218 + $0x5e0] sm:$0x1]
      %v412 = vld [vmem:[%s218 + $0x5e8] sm:$0x1]
      %v413 = vld [vmem:[%s218 + $0x5f0] sm:$0x1]
      %v414 = vld [vmem:[%s218 + $0x5f8] sm:$0x1]
      %v415 = vld [vmem:[%s218 + $0x600] sm:$0x1]
      %v416 = vld [vmem:[%s218 + $0x608] sm:$0x1]
      %v417 = vld [vmem:[%s218 + $0x610] sm:$0x1]
      %v418 = vld [vmem:[%s218 + $0x618] sm:$0x1]
      %v419 = vld [vmem:[%s218 + $0x620] sm:$0x1]
      %v420 = vld [vmem:[%s218 + $0x628] sm:$0x1]
      %v421 = vld [vmem:[%s218 + $0x630] sm:$0x1]
      %v422 = vld [vmem:[%s218 + $0x638] sm:$0x1]
      %v423 = vld [vmem:[%s1] sm:$0xff]
      %v424 = vld [vmem:[%s1 + $0x8] sm:$0xff]
      %v425 = vld [vmem:[%s1 + $0x10] sm:$0xff]
      %v426 = vld [vmem:[%s1 + $0x18] sm:$0xff]
      %v427 = vld [vmem:[%s1 + $0x20] sm:$0xff]
      %v428 = vld [vmem:[%s1 + $0x28] sm:$0xff]
      %v429 = vld [vmem:[%s1 + $0x30] sm:$0xff]
      %v430 = vld [vmem:[%s1 + $0x38] sm:$0xff]
      %v431 = vld [vmem:[%s1 + $0x40] sm:$0xff]
      %v432 = vld [vmem:[%s1 + $0x48] sm:$0xff]
      %v433 = vld [vmem:[%s1 + $0x50] sm:$0xff]
      %v434 = vld [vmem:[%s1 + $0x58] sm:$0xff]
      %v435 = vld [vmem:[%s1 + $0x60] sm:$0xff]
      %v436 = vld [vmem:[%s1 + $0x68] sm:$0xff]
      %v437 = vld [vmem:[%s1 + $0x70] sm:$0xff]
      %v438 = vld [vmem:[%s1 + $0x78] sm:$0xff]
      %v439 = vld [vmem:[%s2] sm:$0xff]
      %v440 = vld [vmem:[%s2 + $0x8] sm:$0xff]
      %v441 = vld [vmem:[%s2 + $0x10] sm:$0xff]
      %v442 = vld [vmem:[%s2 + $0x18] sm:$0xff]
      %v443 = vld [vmem:[%s2 + $0x20] sm:$0xff]
      %v444 = vld [vmem:[%s2 + $0x28] sm:$0xff]
      %v445 = vld [vmem:[%s2 + $0x30] sm:$0xff]
      %v446 = vld [vmem:[%s2 + $0x38] sm:$0xff]
      %v447 = vld [vmem:[%s2 + $0x40] sm:$0xff]
      %v448 = vld [vmem:[%s2 + $0x48] sm:$0xff]
      %v449 = vld [vmem:[%s2 + $0x50] sm:$0xff]
      %v450 = vld [vmem:[%s2 + $0x58] sm:$0xff]
      %v451 = vld [vmem:[%s2 + $0x60] sm:$0xff]
      %v452 = vld [vmem:[%s2 + $0x68] sm:$0xff]
      %v453 = vld [vmem:[%s2 + $0x70] sm:$0xff]
      %v454 = vld [vmem:[%s2 + $0x78] sm:$0xff]
      %456 = vset.pattern.permute.xlu0 0
      %457 = vperm.xlu0 %456, %v439
      %v458 = vpop.permute.xlu0 %457
      %461 = vset.pattern.permute.xlu0 0
      %462 = vperm.xlu0 %461, %v440
      %v463 = vpop.permute.xlu0 %462
      %466 = vset.pattern.permute.xlu0 0
      %467 = vperm.xlu0 %466, %v441
      %v468 = vpop.permute.xlu0 %467
      %471 = vset.pattern.permute.xlu0 0
      %472 = vperm.xlu0 %471, %v442
      %v473 = vpop.permute.xlu0 %472
      %476 = vset.pattern.permute.xlu0 0
      %477 = vperm.xlu0 %476, %v443
      %v478 = vpop.permute.xlu0 %477
      %481 = vset.pattern.permute.xlu0 0
      %482 = vperm.xlu0 %481, %v444
      %v483 = vpop.permute.xlu0 %482
      %486 = vset.pattern.permute.xlu0 0
      %487 = vperm.xlu0 %486, %v445
      %v488 = vpop.permute.xlu0 %487
      %491 = vset.pattern.permute.xlu0 0
      %492 = vperm.xlu0 %491, %v446
      %v493 = vpop.permute.xlu0 %492
      %496 = vset.pattern.permute.xlu0 0
      %497 = vperm.xlu0 %496, %v447
      %v498 = vpop.permute.xlu0 %497
      %501 = vset.pattern.permute.xlu0 0
      %502 = vperm.xlu0 %501, %v448
      %v503 = vpop.permute.xlu0 %502
      %506 = vset.pattern.permute.xlu0 0
      %507 = vperm.xlu0 %506, %v449
      %v508 = vpop.permute.xlu0 %507
      %511 = vset.pattern.permute.xlu0 0
      %512 = vperm.xlu0 %511, %v450
      %v513 = vpop.permute.xlu0 %512
      %516 = vset.pattern.permute.xlu0 0
      %517 = vperm.xlu0 %516, %v451
      %v518 = vpop.permute.xlu0 %517
      %521 = vset.pattern.permute.xlu0 0
      %522 = vperm.xlu0 %521, %v452
      %v523 = vpop.permute.xlu0 %522
      %526 = vset.pattern.permute.xlu0 0
      %527 = vperm.xlu0 %526, %v453
      %v528 = vpop.permute.xlu0 %527
      %531 = vset.pattern.permute.xlu0 0
      %532 = vperm.xlu0 %531, %v454
      %v533 = vpop.permute.xlu0 %532
      %vm535 = vcmask 203776
      %v537 = vsel %vm535, %v423, 0
      %v540 = vsel %vm535, %v424, 0
      %v543 = vsel %vm535, %v425, 0
      %v546 = vsel %vm535, %v426, 0
      %v549 = vsel %vm535, %v427, 0
      %v552 = vsel %vm535, %v428, 0
      %v555 = vsel %vm535, %v429, 0
      %v558 = vsel %vm535, %v430, 0
      %v561 = vsel %vm535, %v431, 0
      %v564 = vsel %vm535, %v432, 0
      %v567 = vsel %vm535, %v433, 0
      %v570 = vsel %vm535, %v434, 0
      %v573 = vsel %vm535, %v435, 0
      %v576 = vsel %vm535, %v436, 0
      %v579 = vsel %vm535, %v437, 0
      %v582 = vsel %vm535, %v438, 0
      %vm584 = vcmask 1040384
      %v586 = vsel %vm584, %v373, 0
      %v589 = vsel %vm584, %v374, 0
      %v592 = vsel %vm584, %v375, 0
      %v595 = vsel %vm584, %v376, 0
      %v598 = vsel %vm584, %v377, 0
      %v601 = vsel %vm584, %v378, 0
      %v604 = vsel %vm584, %v379, 0
      %v607 = vsel %vm584, %v380, 0
      %v610 = vsel %vm584, %v381, 0
      %v613 = vsel %vm584, %v382, 0
      %v616 = vsel %vm584, %v383, 0
      %v619 = vsel %vm584, %v384, 0
      %v622 = vsel %vm584, %v385, 0
      %v625 = vsel %vm584, %v386, 0
      %v628 = vsel %vm584, %v387, 0
      %v631 = vsel %vm584, %v388, 0
      %v634 = vsel %vm584, %v389, 0
      %v637 = vsel %vm584, %v390, 0
      %v640 = vsel %vm584, %v391, 0
      %v643 = vsel %vm584, %v392, 0
      %v646 = vsel %vm584, %v393, 0
      %v649 = vsel %vm584, %v394, 0
      %v652 = vsel %vm584, %v395, 0
      %v655 = vsel %vm584, %v396, 0
      %v658 = vsel %vm584, %v397, 0
      %v661 = vsel %vm584, %v398, 0
      %v664 = vsel %vm584, %v399, 0
      %v667 = vsel %vm584, %v400, 0
      %v670 = vsel %vm584, %v401, 0
      %v673 = vsel %vm584, %v402, 0
      %v676 = vsel %vm584, %v403, 0
      %v679 = vsel %vm584, %v404, 0
      %v682 = vsel %vm584, %v405, 0
      %v685 = vsel %vm584, %v406, 0
      %v688 = vsel %vm584, %v407, 0
      %v691 = vsel %vm584, %v408, 0
      %v694 = vsel %vm584, %v409, 0
      %v697 = vsel %vm584, %v410, 0
      %v700 = vsel %vm584, %v411, 0
      %v703 = vsel %vm584, %v412, 0
      %v706 = vsel %vm584, %v413, 0
      %v709 = vsel %vm584, %v414, 0
      %v712 = vsel %vm584, %v415, 0
      %v715 = vsel %vm584, %v416, 0
      %v718 = vsel %vm584, %v417, 0
      %v721 = vsel %vm584, %v418, 0
      %v724 = vsel %vm584, %v419, 0
      %v727 = vsel %vm584, %v420, 0
      %v730 = vsel %vm584, %v421, 0
      %v733 = vsel %vm584, %v422, 0
      %735 = vmatprep.subr.mxu0 %v224
      %736 = vmatpush1.msra.mxu0 %v223
      %737 = vmatprep.subr.mxu0 %v274
      %738 = vmatpush1.msra.mxu0 %v273
      %739 = vmatprep.subr.mxu0 %v324
      %740 = vmatpush1.msra.mxu0 %v323
      %741 = vmatprep.subr.mxu0 %v589
      %742 = vmatpush1.msra.mxu0 %v586
      %743 = vmatprep.subr.mxu0 0.0
      %744 = vmatpush1.msra.mxu0 0.0
      %745 = vmatprep.subr.mxu0 0.0
      %746 = vmatpush1.msra.mxu0 0.0
      %747 = vmatprep.subr.mxu0 0.0
      %748 = vmatpush1.msra.mxu0 0.0
      %749 = vmatprep.subr.mxu0 0.0
      %750 = vmatpush1.msra.mxu0 0.0
      %751 = vmatprep.subr.mxu0 0.0
      %752 = vmatpush1.msra.mxu0 0.0
      %753 = vmatprep.subr.mxu0 0.0
      %754 = vmatpush1.msra.mxu0 0.0
      %755 = vmatprep.subr.mxu0 0.0
      %756 = vmatpush1.msra.mxu0 0.0
      %757 = vmatprep.subr.mxu0 0.0
      %758 = vmatpush1.msra.mxu0 0.0
      %759 = vmatprep.subr.mxu0 0.0
      %760 = vmatpush1.msra.mxu0 0.0
      %761 = vmatprep.subr.mxu0 0.0
      %762 = vmatpush1.msra.mxu0 0.0
      %763 = vmatprep.subr.mxu0 0.0
      %764 = vmatpush1.msra.mxu0 0.0
      %765 = vmatprep.subr.mxu0 0.0
      %766 = vmatpush1.msra.mxu0 0.0
      %767 = vmatprep.subr.mxu0 0.0
      %768 = vmatpush1.msra.mxu0 0.0
      %769 = vmatprep.subr.mxu0 0.0
      %770 = vmatpush1.msra.mxu0 0.0
      %771 = vmatprep.subr.mxu0 0.0
      %772 = vmatpush1.msra.mxu0 0.0
      %773 = vmatprep.subr.mxu0 0.0
      %774 = vmatpush1.msra.mxu0 0.0
      %775 = vmatprep.subr.mxu0 0.0
      %776 = vmatpush1.msra.mxu0 0.0
      %777 = vmatprep.subr.mxu0 0.0
      %778 = vmatpush1.msra.mxu0 0.0
      %779 = vmatprep.subr.mxu0 0.0
      %780 = vmatpush1.msra.mxu0 0.0
      %781 = vmatprep.subr.mxu0 0.0
      %782 = vmatpush1.msra.mxu0 0.0
      %783 = vmatprep.subr.mxu0 0.0
      %784 = vmatpush1.msra.mxu0 0.0
      %785 = vmatprep.subr.mxu0 0.0
      %786 = vmatpush1.msra.mxu0 0.0
      %787 = vmatprep.subr.mxu0 0.0
      %788 = vmatpush1.msra.mxu0 0.0
      %789 = vmatprep.subr.mxu0 0.0
      %790 = vmatpush1.msra.mxu0 0.0
      %791 = vmatprep.subr.mxu0 0.0
      %792 = vmatpush1.msra.mxu0 0.0
      %793 = vmatprep.subr.mxu0 0.0
      %794 = vmatpush1.msra.mxu0 0.0
      %795 = vmatprep.subr.mxu0 0.0
      %796 = vmatpush1.msra.mxu0 0.0
      %797 = vmatprep.subr.mxu0 0.0
      %798 = vmatpush1.msra.mxu0 0.0
      %799 = vmatprep.mubr.f32.mxu0 0.0
      %800 = vmatmul.mubr.f32.gmra.mrb[0].mxu0 %v537
      %v801 = vpop.f32.mrb[0].mxu0
      %v802 = vadd.f32 %v458, %v801
      %v803 = vpop.f32.mrb[0].mxu0
      %v804 = vadd.f32 %v458, %v803
      %805 = vmatprep.mubr.f32.mxu0 0.0
      %806 = vmatmul.mubr.f32.gmra.mrb[0].mxu0 %v540
      %v807 = vpop.f32.mrb[0].mxu0
      %v808 = vadd.f32 %v463, %v807
      %v809 = vpop.f32.mrb[0].mxu0
      %v810 = vadd.f32 %v463, %v809
      %811 = vmatprep.mubr.f32.mxu0 0.0
      %812 = vmatmul.mubr.f32.gmra.mrb[0].mxu0 %v543
      %v813 = vpop.f32.mrb[0].mxu0
      %v814 = vadd.f32 %v468, %v813
      %v815 = vpop.f32.mrb[0].mxu0
      %v816 = vadd.f32 %v468, %v815
      %817 = vmatprep.mubr.f32.mxu0 0.0
      %818 = vmatmul.mubr.f32.gmra.mrb[0].mxu0 %v546
      %v819 = vpop.f32.mrb[0].mxu0
      %v820 = vadd.f32 %v473, %v819
      %v821 = vpop.f32.mrb[0].mxu0
      %v822 = vadd.f32 %v473, %v821
      %823 = vmatprep.mubr.f32.mxu0 0.0
      %824 = vmatmul.mubr.f32.gmra.mrb[0].mxu0 %v549
      %v825 = vpop.f32.mrb[0].mxu0
      %v826 = vadd.f32 %v478, %v825
      %v827 = vpop.f32.mrb[0].mxu0
      %v828 = vadd.f32 %v478, %v827
      %829 = vmatprep.mubr.f32.mxu0 0.0
      %830 = vmatmul.mubr.f32.gmra.mrb[0].mxu0 %v552
      %v831 = vpop.f32.mrb[0].mxu0
      %v832 = vadd.f32 %v483, %v831
      %v833 = vpop.f32.mrb[0].mxu0
      %v834 = vadd.f32 %v483, %v833
      %835 = vmatprep.mubr.f32.mxu0 0.0
      %836 = vmatmul.mubr.f32.gmra.mrb[0].mxu0 %v555
      %v837 = vpop.f32.mrb[0].mxu0
      %v838 = vadd.f32 %v488, %v837
      %v839 = vpop.f32.mrb[0].mxu0
      %v840 = vadd.f32 %v488, %v839
      %841 = vmatprep.mubr.f32.mxu0 0.0
      %842 = vmatmul.mubr.f32.gmra.mrb[0].mxu0 %v558
      %v843 = vpop.f32.mrb[0].mxu0
      %v844 = vadd.f32 %v493, %v843
      %v845 = vpop.f32.mrb[0].mxu0
      %v846 = vadd.f32 %v493, %v845
      %847 = vmatprep.mubr.f32.mxu0 0.0
      %848 = vmatmul.mubr.f32.gmra.mrb[0].mxu0 %v561
      %v849 = vpop.f32.mrb[0].mxu0
      %v850 = vadd.f32 %v498, %v849
      %v851 = vpop.f32.mrb[0].mxu0
      %v852 = vadd.f32 %v498, %v851
      %853 = vmatprep.mubr.f32.mxu0 0.0
      %854 = vmatmul.mubr.f32.gmra.mrb[0].mxu0 %v564
      %v855 = vpop.f32.mrb[0].mxu0
      %v856 = vadd.f32 %v503, %v855
      %v857 = vpop.f32.mrb[0].mxu0
      %v858 = vadd.f32 %v503, %v857
      %859 = vmatprep.mubr.f32.mxu0 0.0
      %860 = vmatmul.mubr.f32.gmra.mrb[0].mxu0 %v567
      %v861 = vpop.f32.mrb[0].mxu0
      %v862 = vadd.f32 %v508, %v861
      %v863 = vpop.f32.mrb[0].mxu0
      %v864 = vadd.f32 %v508, %v863
      %865 = vmatprep.mubr.f32.mxu0 0.0
      %866 = vmatmul.mubr.f32.gmra.mrb[0].mxu0 %v570
      %v867 = vpop.f32.mrb[0].mxu0
      %v868 = vadd.f32 %v513, %v867
      %v869 = vpop.f32.mrb[0].mxu0
      %v870 = vadd.f32 %v513, %v869
      %871 = vmatprep.mubr.f32.mxu0 0.0
      %872 = vmatmul.mubr.f32.gmra.mrb[0].mxu0 %v573
      %v873 = vpop.f32.mrb[0].mxu0
      %v874 = vadd.f32 %v518, %v873
      %v875 = vpop.f32.mrb[0].mxu0
      %v876 = vadd.f32 %v518, %v875
      %877 = vmatprep.mubr.f32.mxu0 0.0
      %878 = vmatmul.mubr.f32.gmra.mrb[0].mxu0 %v576
      %v879 = vpop.f32.mrb[0].mxu0
      %v880 = vadd.f32 %v523, %v879
      %v881 = vpop.f32.mrb[0].mxu0
      %v882 = vadd.f32 %v523, %v881
      %883 = vmatprep.mubr.f32.mxu0 0.0
      %884 = vmatmul.mubr.f32.gmra.mrb[0].mxu0 %v579
      %v885 = vpop.f32.mrb[0].mxu0
      %v886 = vadd.f32 %v528, %v885
      %v887 = vpop.f32.mrb[0].mxu0
      %v888 = vadd.f32 %v528, %v887
      %889 = vmatprep.mubr.f32.mxu0 0.0
      %890 = vmatmul.mubr.f32.gmra.mrb[0].mxu0 %v582
      %v891 = vpop.f32.mrb[0].mxu0
      %v892 = vadd.f32 %v533, %v891
      %v893 = vpop.f32.mrb[0].mxu0
      %v894 = vadd.f32 %v533, %v893
      %895 = vdwg.mxu0
      %896 = vmatprep.subr.mxu0 %v226
      %897 = vmatpush1.msra.mxu0 %v225
      %898 = vmatprep.subr.mxu0 %v276
      %899 = vmatpush1.msra.mxu0 %v275
      %900 = vmatprep.subr.mxu0 %v326
      %901 = vmatpush1.msra.mxu0 %v325
      %902 = vmatprep.subr.mxu0 %v595
      %903 = vmatpush1.msra.mxu0 %v592
      %904 = vmatprep.subr.mxu0 0.0
      %905 = vmatpush1.msra.mxu0 0.0
      %906 = vmatprep.subr.mxu0 0.0
      %907 = vmatpush1.msra.mxu0 0.0
      %908 = vmatprep.subr.mxu0 0.0
      %909 = vmatpush1.msra.mxu0 0.0
      %910 = vmatprep.subr.mxu0 0.0
      %911 = vmatpush1.msra.mxu0 0.0
      %912 = vmatprep.subr.mxu0 0.0
      %913 = vmatpush1.msra.mxu0 0.0
      %914 = vmatprep.subr.mxu0 0.0
      %915 = vmatpush1.msra.mxu0 0.0
      %916 = vmatprep.subr.mxu0 0.0
      %917 = vmatpush1.msra.mxu0 0.0
      %918 = vmatprep.subr.mxu0 0.0
      %919 = vmatpush1.msra.mxu0 0.0
      %920 = vmatprep.subr.mxu0 0.0
      %921 = vmatpush1.msra.mxu0 0.0
      %922 = vmatprep.subr.mxu0 0.0
      %923 = vmatpush1.msra.mxu0 0.0
      %924 = vmatprep.subr.mxu0 0.0
      %925 = vmatpush1.msra.mxu0 0.0
      %926 = vmatprep.subr.mxu0 0.0
      %927 = vmatpush1.msra.mxu0 0.0
      %928 = vmatprep.subr.mxu0 0.0
      %929 = vmatpush1.msra.mxu0 0.0
      %930 = vmatprep.subr.mxu0 0.0
      %931 = vmatpush1.msra.mxu0 0.0
      %932 = vmatprep.subr.mxu0 0.0
      %933 = vmatpush1.msra.mxu0 0.0
      %934 = vmatprep.subr.mxu0 0.0
      %935 = vmatpush1.msra.mxu0 0.0
      %936 = vmatprep.subr.mxu0 0.0
      %937 = vmatpush1.msra.mxu0 0.0
      %938 = vmatprep.subr.mxu0 0.0
      %939 = vmatpush1.msra.mxu0 0.0
      %940 = vmatprep.subr.mxu0 0.0
      %941 = vmatpush1.msra.mxu0 0.0
      %942 = vmatprep.subr.mxu0 0.0
      %943 = vmatpush1.msra.mxu0 0.0
      %944 = vmatprep.subr.mxu0 0.0
      %945 = vmatpush1.msra.mxu0 0.0
      %946 = vmatprep.subr.mxu0 0.0
      %947 = vmatpush1.msra.mxu0 0.0
      %948 = vmatprep.subr.mxu0 0.0
      %949 = vmatpush1.msra.mxu0 0.0
      %950 = vmatprep.subr.mxu0 0.0
      %951 = vmatpush1.msra.mxu0 0.0
      %952 = vmatprep.subr.mxu0 0.0
      %953 = vmatpush1.msra.mxu0 0.0
      %954 = vmatprep.subr.mxu0 0.0
      %955 = vmatpush1.msra.mxu0 0.0
      %956 = vmatprep.subr.mxu0 0.0
      %957 = vmatpush1.msra.mxu0 0.0
      %958 = vmatprep.subr.mxu0 0.0
      %959 = vmatpush1.msra.mxu0 0.0
      %960 = vmatprep.mubr.f32.mxu0 0.0
      %961 = vmatmul.mubr.f32.gmra.mrb[0].mxu0 %v537
      %v962 = vpop.f32.mrb[0].mxu0
      %v963 = vadd.f32 %v458, %v962
      %v964 = vpop.f32.mrb[0].mxu0
      %v965 = vadd.f32 %v458, %v964
      %966 = vmatprep.mubr.f32.mxu0 0.0
      %967 = vmatmul.mubr.f32.gmra.mrb[0].mxu0 %v540
      %v968 = vpop.f32.mrb[0].mxu0
      %v969 = vadd.f32 %v463, %v968
      %v970 = vpop.f32.mrb[0].mxu0
      %v971 = vadd.f32 %v463, %v970
      %972 = vmatprep.mubr.f32.mxu0 0.0
      %973 = vmatmul.mubr.f32.gmra.mrb[0].mxu0 %v543
      %v974 = vpop.f32.mrb[0].mxu0
      %v975 = vadd.f32 %v468, %v974
      %v976 = vpop.f32.mrb[0].mxu0
      %v977 = vadd.f32 %v468, %v976
      %978 = vmatprep.mubr.f32.mxu0 0.0
      %979 = vmatmul.mubr.f32.gmra.mrb[0].mxu0 %v546
      %v980 = vpop.f32.mrb[0].mxu0
      %v981 = vadd.f32 %v473, %v980
      %v982 = vpop.f32.mrb[0].mxu0
      %v983 = vadd.f32 %v473, %v982
      %984 = vmatprep.mubr.f32.mxu0 0.0
      %985 = vmatmul.mubr.f32.gmra.mrb[0].mxu0 %v549
      %v986 = vpop.f32.mrb[0].mxu0
      %v987 = vadd.f32 %v478, %v986
      %v988 = vpop.f32.mrb[0].mxu0
      %v989 = vadd.f32 %v478, %v988
      %990 = vmatprep.mubr.f32.mxu0 0.0
      %991 = vmatmul.mubr.f32.gmra.mrb[0].mxu0 %v552
      %v992 = vpop.f32.mrb[0].mxu0
      %v993 = vadd.f32 %v483, %v992
      %v994 = vpop.f32.mrb[0].mxu0
      %v995 = vadd.f32 %v483, %v994
      %996 = vmatprep.mubr.f32.mxu0 0.0
      %997 = vmatmul.mubr.f32.gmra.mrb[0].mxu0 %v555
      %v998 = vpop.f32.mrb[0].mxu0
      %v999 = vadd.f32 %v488, %v998
      %v1000 = vpop.f32.mrb[0].mxu0
      %v1001 = vadd.f32 %v488, %v1000
      %1002 = vmatprep.mubr.f32.mxu0 0.0
      %1003 = vmatmul.mubr.f32.gmra.mrb[0].mxu0 %v558
      %v1004 = vpop.f32.mrb[0].mxu0
      %v1005 = vadd.f32 %v493, %v1004
      %v1006 = vpop.f32.mrb[0].mxu0
      %v1007 = vadd.f32 %v493, %v1006
      %1008 = vmatprep.mubr.f32.mxu0 0.0
      %1009 = vmatmul.mubr.f32.gmra.mrb[0].mxu0 %v561
      %v1010 = vpop.f32.mrb[0].mxu0
      %v1011 = vadd.f32 %v498, %v1010
      %v1012 = vpop.f32.mrb[0].mxu0
      %v1013 = vadd.f32 %v498, %v1012
      %1014 = vmatprep.mubr.f32.mxu0 0.0
      %1015 = vmatmul.mubr.f32.gmra.mrb[0].mxu0 %v564
      %v1016 = vpop.f32.mrb[0].mxu0
      %v1017 = vadd.f32 %v503, %v1016
      %v1018 = vpop.f32.mrb[0].mxu0
      %v1019 = vadd.f32 %v503, %v1018
      %1020 = vmatprep.mubr.f32.mxu0 0.0
      %1021 = vmatmul.mubr.f32.gmra.mrb[0].mxu0 %v567
      %v1022 = vpop.f32.mrb[0].mxu0
      %v1023 = vadd.f32 %v508, %v1022
      %v1024 = vpop.f32.mrb[0].mxu0
      %v1025 = vadd.f32 %v508, %v1024
      %1026 = vmatprep.mubr.f32.mxu0 0.0
      %1027 = vmatmul.mubr.f32.gmra.mrb[0].mxu0 %v570
      %v1028 = vpop.f32.mrb[0].mxu0
      %v1029 = vadd.f32 %v513, %v1028
      %v1030 = vpop.f32.mrb[0].mxu0
      %v1031 = vadd.f32 %v513, %v1030
      %1032 = vmatprep.mubr.f32.mxu0 0.0
      %1033 = vmatmul.mubr.f32.gmra.mrb[0].mxu0 %v573
      %v1034 = vpop.f32.mrb[0].mxu0
      %v1035 = vadd.f32 %v518, %v1034
      %v1036 = vpop.f32.mrb[0].mxu0
      %v1037 = vadd.f32 %v518, %v1036
      %1038 = vmatprep.mubr.f32.mxu0 0.0
      %1039 = vmatmul.mubr.f32.gmra.mrb[0].mxu0 %v576
      %v1040 = vpop.f32.mrb[0].mxu0
      %v1041 = vadd.f32 %v523, %v1040
      %v1042 = vpop.f32.mrb[0].mxu0
      %v1043 = vadd.f32 %v523, %v1042
      %1044 = vmatprep.mubr.f32.mxu0 0.0
      %1045 = vmatmul.mubr.f32.gmra.mrb[0].mxu0 %v579
      %v1046 = vpop.f32.mrb[0].mxu0
      %v1047 = vadd.f32 %v528, %v1046
      %v1048 = vpop.f32.mrb[0].mxu0
      %v1049 = vadd.f32 %v528, %v1048
      %1050 = vmatprep.mubr.f32.mxu0 0.0
      %1051 = vmatmul.mubr.f32.gmra.mrb[0].mxu0 %v582
      %v1052 = vpop.f32.mrb[0].mxu0
      %v1053 = vadd.f32 %v533, %v1052
      %v1054 = vpop.f32.mrb[0].mxu0
      %v1055 = vadd.f32 %v533, %v1054
      %1056 = vdwg.mxu0
      %1057 = vmatprep.subr.mxu0 %v228
      %1058 = vmatpush1.msra.mxu0 %v227
      %1059 = vmatprep.subr.mxu0 %v278
      %1060 = vmatpush1.msra.mxu0 %v277
      %1061 = vmatprep.subr.mxu0 %v328
      %1062 = vmatpush1.msra.mxu0 %v327
      %1063 = vmatprep.subr.mxu0 %v601
      %1064 = vmatpush1.msra.mxu0 %v598
      %1065 = vmatprep.subr.mxu0 0.0
      %1066 = vmatpush1.msra.mxu0 0.0
      %1067 = vmatprep.subr.mxu0 0.0
      %1068 = vmatpush1.msra.mxu0 0.0
      %1069 = vmatprep.subr.mxu0 0.0
      %1070 = vmatpush1.msra.mxu0 0.0
      %1071 = vmatprep.subr.mxu0 0.0
      %1072 = vmatpush1.msra.mxu0 0.0
      %1073 = vmatprep.subr.mxu0 0.0
      %1074 = vmatpush1.msra.mxu0 0.0
      %1075 = vmatprep.subr.mxu0 0.0
      %1076 = vmatpush1.msra.mxu0 0.0
      %1077 = vmatprep.subr.mxu0 0.0
      %1078 = vmatpush1.msra.mxu0 0.0
      %1079 = vmatprep.subr.mxu0 0.0
      %1080 = vmatpush1.msra.mxu0 0.0
      %1081 = vmatprep.subr.mxu0 0.0
      %1082 = vmatpush1.msra.mxu0 0.0
      %1083 = vmatprep.subr.mxu0 0.0
      %1084 = vmatpush1.msra.mxu0 0.0
      %1085 = vmatprep.subr.mxu0 0.0
      %1086 = vmatpush1.msra.mxu0 0.0
      %1087 = vmatprep.subr.mxu0 0.0
      %1088 = vmatpush1.msra.mxu0 0.0
      %1089 = vmatprep.subr.mxu0 0.0
      %1090 = vmatpush1.msra.mxu0 0.0
      %1091 = vmatprep.subr.mxu0 0.0
      %1092 = vmatpush1.msra.mxu0 0.0
      %1093 = vmatprep.subr.mxu0 0.0
      %1094 = vmatpush1.msra.mxu0 0.0
      %1095 = vmatprep.subr.mxu0 0.0
      %1096 = vmatpush1.msra.mxu0 0.0
      %1097 = vmatprep.subr.mxu0 0.0
      %1098 = vmatpush1.msra.mxu0 0.0
      %1099 = vmatprep.subr.mxu0 0.0
      %1100 = vmatpush1.msra.mxu0 0.0
      %1101 = vmatprep.subr.mxu0 0.0
      %1102 = vmatpush1.msra.mxu0 0.0
      %1103 = vmatprep.subr.mxu0 0.0
      %1104 = vmatpush1.msra.mxu0 0.0
      %1105 = vmatprep.subr.mxu0 0.0
      %1106 = vmatpush1.msra.mxu0 0.0
      %1107 = vmatprep.subr.mxu0 0.0
      %1108 = vmatpush1.msra.mxu0 0.0
      %1109 = vmatprep.subr.mxu0 0.0
      %1110 = vmatpush1.msra.mxu0 0.0
      %1111 = vmatprep.subr.mxu0 0.0
      %1112 = vmatpush1.msra.mxu0 0.0
      %1113 = vmatprep.subr.mxu0 0.0
      %1114 = vmatpush1.msra.mxu0 0.0
      %1115 = vmatprep.subr.mxu0 0.0
      %1116 = vmatpush1.msra.mxu0 0.0
      %1117 = vmatprep.subr.mxu0 0.0
      %1118 = vmatpush1.msra.mxu0 0.0
      %1119 = vmatprep.subr.mxu0 0.0
      %1120 = vmatpush1.msra.mxu0 0.0
      %1121 = vmatprep.mubr.f32.mxu0 0.0
      %1122 = vmatmul.mubr.f32.gmra.mrb[0].mxu0 %v537
      %v1123 = vpop.f32.mrb[0].mxu0
      %v1124 = vadd.f32 %v458, %v1123
      %v1125 = vpop.f32.mrb[0].mxu0
      %v1126 = vadd.f32 %v458, %v1125
      %1127 = vmatprep.mubr.f32.mxu0 0.0
      %1128 = vmatmul.mubr.f32.gmra.mrb[0].mxu0 %v540
      %v1129 = vpop.f32.mrb[0].mxu0
      %v1130 = vadd.f32 %v463, %v1129
      %v1131 = vpop.f32.mrb[0].mxu0
      %v1132 = vadd.f32 %v463, %v1131
      %1133 = vmatprep.mubr.f32.mxu0 0.0
      %1134 = vmatmul.mubr.f32.gmra.mrb[0].mxu0 %v543
      %v1135 = vpop.f32.mrb[0].mxu0
      %v1136 = vadd.f32 %v468, %v1135
      %v1137 = vpop.f32.mrb[0].mxu0
      %v1138 = vadd.f32 %v468, %v1137
      %1139 = vmatprep.mubr.f32.mxu0 0.0
      %1140 = vmatmul.mubr.f32.gmra.mrb[0].mxu0 %v546
      %v1141 = vpop.f32.mrb[0].mxu0
      %v1142 = vadd.f32 %v473, %v1141
      %v1143 = vpop.f32.mrb[0].mxu0
      %v1144 = vadd.f32 %v473, %v1143
      %1145 = vmatprep.mubr.f32.mxu0 0.0
      %1146 = vmatmul.mubr.f32.gmra.mrb[0].mxu0 %v549
      %v1147 = vpop.f32.mrb[0].mxu0
      %v1148 = vadd.f32 %v478, %v1147
      %v1149 = vpop.f32.mrb[0].mxu0
      %v1150 = vadd.f32 %v478, %v1149
      %1151 = vmatprep.mubr.f32.mxu0 0.0
      %1152 = vmatmul.mubr.f32.gmra.mrb[0].mxu0 %v552
      %v1153 = vpop.f32.mrb[0].mxu0
      %v1154 = vadd.f32 %v483, %v1153
      %v1155 = vpop.f32.mrb[0].mxu0
      %v1156 = vadd.f32 %v483, %v1155
      %1157 = vmatprep.mubr.f32.mxu0 0.0
      %1158 = vmatmul.mubr.f32.gmra.mrb[0].mxu0 %v555
      %v1159 = vpop.f32.mrb[0].mxu0
      %v1160 = vadd.f32 %v488, %v1159
      %v1161 = vpop.f32.mrb[0].mxu0
      %v1162 = vadd.f32 %v488, %v1161
      %1163 = vmatprep.mubr.f32.mxu0 0.0
      %1164 = vmatmul.mubr.f32.gmra.mrb[0].mxu0 %v558
      %v1165 = vpop.f32.mrb[0].mxu0
      %v1166 = vadd.f32 %v493, %v1165
      %v1167 = vpop.f32.mrb[0].mxu0
      %v1168 = vadd.f32 %v493, %v1167
      %1169 = vmatprep.mubr.f32.mxu0 0.0
      %1170 = vmatmul.mubr.f32.gmra.mrb[0].mxu0 %v561
      %v1171 = vpop.f32.mrb[0].mxu0
      %v1172 = vadd.f32 %v498, %v1171
      %v1173 = vpop.f32.mrb[0].mxu0
      %v1174 = vadd.f32 %v498, %v1173
      %1175 = vmatprep.mubr.f32.mxu0 0.0
      %1176 = vmatmul.mubr.f32.gmra.mrb[0].mxu0 %v564
      %v1177 = vpop.f32.mrb[0].mxu0
      %v1178 = vadd.f32 %v503, %v1177
      %v1179 = vpop.f32.mrb[0].mxu0
      %v1180 = vadd.f32 %v503, %v1179
      %1181 = vmatprep.mubr.f32.mxu0 0.0
      %1182 = vmatmul.mubr.f32.gmra.mrb[0].mxu0 %v567
      %v1183 = vpop.f32.mrb[0].mxu0
      %v1184 = vadd.f32 %v508, %v1183
      %v1185 = vpop.f32.mrb[0].mxu0
      %v1186 = vadd.f32 %v508, %v1185
      %1187 = vmatprep.mubr.f32.mxu0 0.0
      %1188 = vmatmul.mubr.f32.gmra.mrb[0].mxu0 %v570
      %v1189 = vpop.f32.mrb[0].mxu0
      %v1190 = vadd.f32 %v513, %v1189
      %v1191 = vpop.f32.mrb[0].mxu0
      %v1192 = vadd.f32 %v513, %v1191
      %1193 = vmatprep.mubr.f32.mxu0 0.0
      %1194 = vmatmul.mubr.f32.gmra.mrb[0].mxu0 %v573
      %v1195 = vpop.f32.mrb[0].mxu0
      %v1196 = vadd.f32 %v518, %v1195
      %v1197 = vpop.f32.mrb[0].mxu0
      %v1198 = vadd.f32 %v518, %v1197
      %1199 = vmatprep.mubr.f32.mxu0 0.0
      %1200 = vmatmul.mubr.f32.gmra.mrb[0].mxu0 %v576
      %v1201 = vpop.f32.mrb[0].mxu0
      %v1202 = vadd.f32 %v523, %v1201
      %v1203 = vpop.f32.mrb[0].mxu0
      %v1204 = vadd.f32 %v523, %v1203
      %1205 = vmatprep.mubr.f32.mxu0 0.0
      %1206 = vmatmul.mubr.f32.gmra.mrb[0].mxu0 %v579
      %v1207 = vpop.f32.mrb[0].mxu0
      %v1208 = vadd.f32 %v528, %v1207
      %v1209 = vpop.f32.mrb[0].mxu0
      %v1210 = vadd.f32 %v528, %v1209
      %1211 = vmatprep.mubr.f32.mxu0 0.0
      %1212 = vmatmul.mubr.f32.gmra.mrb[0].mxu0 %v582
      %v1213 = vpop.f32.mrb[0].mxu0
      %v1214 = vadd.f32 %v533, %v1213
      %v1215 = vpop.f32.mrb[0].mxu0
      %v1216 = vadd.f32 %v533, %v1215
      %1217 = vdwg.mxu0
      %1218 = vmatprep.subr.mxu0 %v230
      %1219 = vmatpush1.msra.mxu0 %v229
      %1220 = vmatprep.subr.mxu0 %v280
      %1221 = vmatpush1.msra.mxu0 %v279
      %1222 = vmatprep.subr.mxu0 %v330
      %1223 = vmatpush1.msra.mxu0 %v329
      %1224 = vmatprep.subr.mxu0 %v607
      %1225 = vmatpush1.msra.mxu0 %v604
      %1226 = vmatprep.subr.mxu0 0.0
      %1227 = vmatpush1.msra.mxu0 0.0
      %1228 = vmatprep.subr.mxu0 0.0
      %1229 = vmatpush1.msra.mxu0 0.0
      %1230 = vmatprep.subr.mxu0 0.0
      %1231 = vmatpush1.msra.mxu0 0.0
      %1232 = vmatprep.subr.mxu0 0.0
      %1233 = vmatpush1.msra.mxu0 0.0
      %1234 = vmatprep.subr.mxu0 0.0
      %1235 = vmatpush1.msra.mxu0 0.0
      %1236 = vmatprep.subr.mxu0 0.0
      %1237 = vmatpush1.msra.mxu0 0.0
      %1238 = vmatprep.subr.mxu0 0.0
      %1239 = vmatpush1.msra.mxu0 0.0
      %1240 = vmatprep.subr.mxu0 0.0
      %1241 = vmatpush1.msra.mxu0 0.0
      %1242 = vmatprep.subr.mxu0 0.0
      %1243 = vmatpush1.msra.mxu0 0.0
      %1244 = vmatprep.subr.mxu0 0.0
      %1245 = vmatpush1.msra.mxu0 0.0
      %1246 = vmatprep.subr.mxu0 0.0
      %1247 = vmatpush1.msra.mxu0 0.0
      %1248 = vmatprep.subr.mxu0 0.0
      %1249 = vmatpush1.msra.mxu0 0.0
      %1250 = vmatprep.subr.mxu0 0.0
      %1251 = vmatpush1.msra.mxu0 0.0
      %1252 = vmatprep.subr.mxu0 0.0
      %1253 = vmatpush1.msra.mxu0 0.0
      %1254 = vmatprep.subr.mxu0 0.0
      %1255 = vmatpush1.msra.mxu0 0.0
      %1256 = vmatprep.subr.mxu0 0.0
      %1257 = vmatpush1.msra.mxu0 0.0
      %1258 = vmatprep.subr.mxu0 0.0
      %1259 = vmatpush1.msra.mxu0 0.0
      %1260 = vmatprep.subr.mxu0 0.0
      %1261 = vmatpush1.msra.mxu0 0.0
      %1262 = vmatprep.subr.mxu0 0.0
      %1263 = vmatpush1.msra.mxu0 0.0
      %1264 = vmatprep.subr.mxu0 0.0
      %1265 = vmatpush1.msra.mxu0 0.0
      %1266 = vmatprep.subr.mxu0 0.0
      %1267 = vmatpush1.msra.mxu0 0.0
      %1268 = vmatprep.subr.mxu0 0.0
      %1269 = vmatpush1.msra.mxu0 0.0
      %1270 = vmatprep.subr.mxu0 0.0
      %1271 = vmatpush1.msra.mxu0 0.0
      %1272 = vmatprep.subr.mxu0 0.0
      %1273 = vmatpush1.msra.mxu0 0.0
      %1274 = vmatprep.subr.mxu0 0.0
      %1275 = vmatpush1.msra.mxu0 0.0
      %1276 = vmatprep.subr.mxu0 0.0
      %1277 = vmatpush1.msra.mxu0 0.0
      %1278 = vmatprep.subr.mxu0 0.0
      %1279 = vmatpush1.msra.mxu0 0.0
      %1280 = vmatprep.subr.mxu0 0.0
      %1281 = vmatpush1.msra.mxu0 0.0
      %1282 = vmatprep.mubr.f32.mxu0 0.0
      %1283 = vmatmul.mubr.f32.gmra.mrb[0].mxu0 %v537
      %v1284 = vpop.f32.mrb[0].mxu0
      %v1285 = vadd.f32 %v458, %v1284
      %v1286 = vpop.f32.mrb[0].mxu0
      %v1287 = vadd.f32 %v458, %v1286
      %1288 = vmatprep.mubr.f32.mxu0 0.0
      %1289 = vmatmul.mubr.f32.gmra.mrb[0].mxu0 %v540
      %v1290 = vpop.f32.mrb[0].mxu0
      %v1291 = vadd.f32 %v463, %v1290
      %v1292 = vpop.f32.mrb[0].mxu0
      %v1293 = vadd.f32 %v463, %v1292
      %1294 = vmatprep.mubr.f32.mxu0 0.0
      %1295 = vmatmul.mubr.f32.gmra.mrb[0].mxu0 %v543
      %v1296 = vpop.f32.mrb[0].mxu0
      %v1297 = vadd.f32 %v468, %v1296
      %v1298 = vpop.f32.mrb[0].mxu0
      %v1299 = vadd.f32 %v468, %v1298
      %1300 = vmatprep.mubr.f32.mxu0 0.0
      %1301 = vmatmul.mubr.f32.gmra.mrb[0].mxu0 %v546
      %v1302 = vpop.f32.mrb[0].mxu0
      %v1303 = vadd.f32 %v473, %v1302
      %v1304 = vpop.f32.mrb[0].mxu0
      %v1305 = vadd.f32 %v473, %v1304
      %1306 = vmatprep.mubr.f32.mxu0 0.0
      %1307 = vmatmul.mubr.f32.gmra.mrb[0].mxu0 %v549
      %v1308 = vpop.f32.mrb[0].mxu0
      %v1309 = vadd.f32 %v478, %v1308
      %v1310 = vpop.f32.mrb[0].mxu0
      %v1311 = vadd.f32 %v478, %v1310
      %1312 = vmatprep.mubr.f32.mxu0 0.0
      %1313 = vmatmul.mubr.f32.gmra.mrb[0].mxu0 %v552
      %v1314 = vpop.f32.mrb[0].mxu0
      %v1315 = vadd.f32 %v483, %v1314
      %v1316 = vpop.f32.mrb[0].mxu0
      %v1317 = vadd.f32 %v483, %v1316
      %1318 = vmatprep.mubr.f32.mxu0 0.0
      %1319 = vmatmul.mubr.f32.gmra.mrb[0].mxu0 %v555
      %v1320 = vpop.f32.mrb[0].mxu0
      %v1321 = vadd.f32 %v488, %v1320
      %v1322 = vpop.f32.mrb[0].mxu0
      %v1323 = vadd.f32 %v488, %v1322
      %1324 = vmatprep.mubr.f32.mxu0 0.0
      %1325 = vmatmul.mubr.f32.gmra.mrb[0].mxu0 %v558
      %v1326 = vpop.f32.mrb[0].mxu0
      %v1327 = vadd.f32 %v493, %v1326
      %v1328 = vpop.f32.mrb[0].mxu0
      %v1329 = vadd.f32 %v493, %v1328
      %1330 = vmatprep.mubr.f32.mxu0 0.0
      %1331 = vmatmul.mubr.f32.gmra.mrb[0].mxu0 %v561
      %v1332 = vpop.f32.mrb[0].mxu0
      %v1333 = vadd.f32 %v498, %v1332
      %v1334 = vpop.f32.mrb[0].mxu0
      %v1335 = vadd.f32 %v498, %v1334
      %1336 = vmatprep.mubr.f32.mxu0 0.0
      %1337 = vmatmul.mubr.f32.gmra.mrb[0].mxu0 %v564
      %v1338 = vpop.f32.mrb[0].mxu0
      %v1339 = vadd.f32 %v503, %v1338
      %v1340 = vpop.f32.mrb[0].mxu0
      %v1341 = vadd.f32 %v503, %v1340
      %1342 = vmatprep.mubr.f32.mxu0 0.0
      %1343 = vmatmul.mubr.f32.gmra.mrb[0].mxu0 %v567
      %v1344 = vpop.f32.mrb[0].mxu0
      %v1345 = vadd.f32 %v508, %v1344
      %v1346 = vpop.f32.mrb[0].mxu0
      %v1347 = vadd.f32 %v508, %v1346
      %1348 = vmatprep.mubr.f32.mxu0 0.0
      %1349 = vmatmul.mubr.f32.gmra.mrb[0].mxu0 %v570
      %v1350 = vpop.f32.mrb[0].mxu0
      %v1351 = vadd.f32 %v513, %v1350
      %v1352 = vpop.f32.mrb[0].mxu0
      %v1353 = vadd.f32 %v513, %v1352
      %1354 = vmatprep.mubr.f32.mxu0 0.0
      %1355 = vmatmul.mubr.f32.gmra.mrb[0].mxu0 %v573
      %v1356 = vpop.f32.mrb[0].mxu0
      %v1357 = vadd.f32 %v518, %v1356
      %v1358 = vpop.f32.mrb[0].mxu0
      %v1359 = vadd.f32 %v518, %v1358
      %1360 = vmatprep.mubr.f32.mxu0 0.0
      %1361 = vmatmul.mubr.f32.gmra.mrb[0].mxu0 %v576
      %v1362 = vpop.f32.mrb[0].mxu0
      %v1363 = vadd.f32 %v523, %v1362
      %v1364 = vpop.f32.mrb[0].mxu0
      %v1365 = vadd.f32 %v523, %v1364
      %1366 = vmatprep.mubr.f32.mxu0 0.0
      %1367 = vmatmul.mubr.f32.gmra.mrb[0].mxu0 %v579
      %v1368 = vpop.f32.mrb[0].mxu0
      %v1369 = vadd.f32 %v528, %v1368
      %v1370 = vpop.f32.mrb[0].mxu0
      %v1371 = vadd.f32 %v528, %v1370
      %1372 = vmatprep.mubr.f32.mxu0 0.0
      %1373 = vmatmul.mubr.f32.gmra.mrb[0].mxu0 %v582
      %v1374 = vpop.f32.mrb[0].mxu0
      %v1375 = vadd.f32 %v533, %v1374
      %v1376 = vpop.f32.mrb[0].mxu0
      %v1377 = vadd.f32 %v533, %v1376
      %1378 = vdwg.mxu0
      %1379 = vmatprep.subr.mxu0 %v232
      %1380 = vmatpush1.msra.mxu0 %v231
      %1381 = vmatprep.subr.mxu0 %v282
      %1382 = vmatpush1.msra.mxu0 %v281
      %1383 = vmatprep.subr.mxu0 %v332
      %1384 = vmatpush1.msra.mxu0 %v331
      %1385 = vmatprep.subr.mxu0 %v613
      %1386 = vmatpush1.msra.mxu0 %v610
      %1387 = vmatprep.subr.mxu0 0.0
      %1388 = vmatpush1.msra.mxu0 0.0
      %1389 = vmatprep.subr.mxu0 0.0
      %1390 = vmatpush1.msra.mxu0 0.0
      %1391 = vmatprep.subr.mxu0 0.0
      %1392 = vmatpush1.msra.mxu0 0.0
      %1393 = vmatprep.subr.mxu0 0.0
      %1394 = vmatpush1.msra.mxu0 0.0
      %1395 = vmatprep.subr.mxu0 0.0
      %1396 = vmatpush1.msra.mxu0 0.0
      %1397 = vmatprep.subr.mxu0 0.0
      %1398 = vmatpush1.msra.mxu0 0.0
      %1399 = vmatprep.subr.mxu0 0.0
      %1400 = vmatpush1.msra.mxu0 0.0
      %1401 = vmatprep.subr.mxu0 0.0
      %1402 = vmatpush1.msra.mxu0 0.0
      %1403 = vmatprep.subr.mxu0 0.0
      %1404 = vmatpush1.msra.mxu0 0.0
      %1405 = vmatprep.subr.mxu0 0.0
      %1406 = vmatpush1.msra.mxu0 0.0
      %1407 = vmatprep.subr.mxu0 0.0
      %1408 = vmatpush1.msra.mxu0 0.0
      %1409 = vmatprep.subr.mxu0 0.0
      %1410 = vmatpush1.msra.mxu0 0.0
      %1411 = vmatprep.subr.mxu0 0.0
      %1412 = vmatpush1.msra.mxu0 0.0
      %1413 = vmatprep.subr.mxu0 0.0
      %1414 = vmatpush1.msra.mxu0 0.0
      %1415 = vmatprep.subr.mxu0 0.0
      %1416 = vmatpush1.msra.mxu0 0.0
      %1417 = vmatprep.subr.mxu0 0.0
      %1418 = vmatpush1.msra.mxu0 0.0
      %1419 = vmatprep.subr.mxu0 0.0
      %1420 = vmatpush1.msra.mxu0 0.0
      %1421 = vmatprep.subr.mxu0 0.0
      %1422 = vmatpush1.msra.mxu0 0.0
      %1423 = vmatprep.subr.mxu0 0.0
      %1424 = vmatpush1.msra.mxu0 0.0
      %1425 = vmatprep.subr.mxu0 0.0
      %1426 = vmatpush1.msra.mxu0 0.0
      %1427 = vmatprep.subr.mxu0 0.0
      %1428 = vmatpush1.msra.mxu0 0.0
      %1429 = vmatprep.subr.mxu0 0.0
      %1430 = vmatpush1.msra.mxu0 0.0
      %1431 = vmatprep.subr.mxu0 0.0
      %1432 = vmatpush1.msra.mxu0 0.0
      %1433 = vmatprep.subr.mxu0 0.0
      %1434 = vmatpush1.msra.mxu0 0.0
      %1435 = vmatprep.subr.mxu0 0.0
      %1436 = vmatpush1.msra.mxu0 0.0
      %1437 = vmatprep.subr.mxu0 0.0
      %1438 = vmatpush1.msra.mxu0 0.0
      %1439 = vmatprep.subr.mxu0 0.0
      %1440 = vmatpush1.msra.mxu0 0.0
      %1441 = vmatprep.subr.mxu0 0.0
      %1442 = vmatpush1.msra.mxu0 0.0
      %1443 = vmatprep.mubr.f32.mxu0 0.0
      %1444 = vmatmul.mubr.f32.gmra.mrb[0].mxu0 %v537
      %v1445 = vpop.f32.mrb[0].mxu0
      %v1446 = vadd.f32 %v458, %v1445
      %v1447 = vpop.f32.mrb[0].mxu0
      %v1448 = vadd.f32 %v458, %v1447
      %1449 = vmatprep.mubr.f32.mxu0 0.0
      %1450 = vmatmul.mubr.f32.gmra.mrb[0].mxu0 %v540
      %v1451 = vpop.f32.mrb[0].mxu0
      %v1452 = vadd.f32 %v463, %v1451
      %v1453 = vpop.f32.mrb[0].mxu0
      %v1454 = vadd.f32 %v463, %v1453
      %1455 = vmatprep.mubr.f32.mxu0 0.0
      %1456 = vmatmul.mubr.f32.gmra.mrb[0].mxu0 %v543
      %v1457 = vpop.f32.mrb[0].mxu0
      %v1458 = vadd.f32 %v468, %v1457
      %v1459 = vpop.f32.mrb[0].mxu0
      %v1460 = vadd.f32 %v468, %v1459
      %1461 = vmatprep.mubr.f32.mxu0 0.0
      %1462 = vmatmul.mubr.f32.gmra.mrb[0].mxu0 %v546
      %v1463 = vpop.f32.mrb[0].mxu0
      %v1464 = vadd.f32 %v473, %v1463
      %v1465 = vpop.f32.mrb[0].mxu0
      %v1466 = vadd.f32 %v473, %v1465
      %1467 = vmatprep.mubr.f32.mxu0 0.0
      %1468 = vmatmul.mubr.f32.gmra.mrb[0].mxu0 %v549
      %v1469 = vpop.f32.mrb[0].mxu0
      %v1470 = vadd.f32 %v478, %v1469
      %v1471 = vpop.f32.mrb[0].mxu0
      %v1472 = vadd.f32 %v478, %v1471
      %1473 = vmatprep.mubr.f32.mxu0 0.0
      %1474 = vmatmul.mubr.f32.gmra.mrb[0].mxu0 %v552
      %v1475 = vpop.f32.mrb[0].mxu0
      %v1476 = vadd.f32 %v483, %v1475
      %v1477 = vpop.f32.mrb[0].mxu0
      %v1478 = vadd.f32 %v483, %v1477
      %1479 = vmatprep.mubr.f32.mxu0 0.0
      %1480 = vmatmul.mubr.f32.gmra.mrb[0].mxu0 %v555
      %v1481 = vpop.f32.mrb[0].mxu0
      %v1482 = vadd.f32 %v488, %v1481
      %v1483 = vpop.f32.mrb[0].mxu0
      %v1484 = vadd.f32 %v488, %v1483
      %1485 = vmatprep.mubr.f32.mxu0 0.0
      %1486 = vmatmul.mubr.f32.gmra.mrb[0].mxu0 %v558
      %v1487 = vpop.f32.mrb[0].mxu0
      %v1488 = vadd.f32 %v493, %v1487
      %v1489 = vpop.f32.mrb[0].mxu0
      %v1490 = vadd.f32 %v493, %v1489
      %1491 = vmatprep.mubr.f32.mxu0 0.0
      %1492 = vmatmul.mubr.f32.gmra.mrb[0].mxu0 %v561
      %v1493 = vpop.f32.mrb[0].mxu0
      %v1494 = vadd.f32 %v498, %v1493
      %v1495 = vpop.f32.mrb[0].mxu0
      %v1496 = vadd.f32 %v498, %v1495
      %1497 = vmatprep.mubr.f32.mxu0 0.0
      %1498 = vmatmul.mubr.f32.gmra.mrb[0].mxu0 %v564
      %v1499 = vpop.f32.mrb[0].mxu0
      %v1500 = vadd.f32 %v503, %v1499
      %v1501 = vpop.f32.mrb[0].mxu0
      %v1502 = vadd.f32 %v503, %v1501
      %1503 = vmatprep.mubr.f32.mxu0 0.0
      %1504 = vmatmul.mubr.f32.gmra.mrb[0].mxu0 %v567
      %v1505 = vpop.f32.mrb[0].mxu0
      %v1506 = vadd.f32 %v508, %v1505
      %v1507 = vpop.f32.mrb[0].mxu0
      %v1508 = vadd.f32 %v508, %v1507
      %1509 = vmatprep.mubr.f32.mxu0 0.0
      %1510 = vmatmul.mubr.f32.gmra.mrb[0].mxu0 %v570
      %v1511 = vpop.f32.mrb[0].mxu0
      %v1512 = vadd.f32 %v513, %v1511
      %v1513 = vpop.f32.mrb[0].mxu0
      %v1514 = vadd.f32 %v513, %v1513
      %1515 = vmatprep.mubr.f32.mxu0 0.0
      %1516 = vmatmul.mubr.f32.gmra.mrb[0].mxu0 %v573
      %v1517 = vpop.f32.mrb[0].mxu0
      %v1518 = vadd.f32 %v518, %v1517
      %v1519 = vpop.f32.mrb[0].mxu0
      %v1520 = vadd.f32 %v518, %v1519
      %1521 = vmatprep.mubr.f32.mxu0 0.0
      %1522 = vmatmul.mubr.f32.gmra.mrb[0].mxu0 %v576
      %v1523 = vpop.f32.mrb[0].mxu0
      %v1524 = vadd.f32 %v523, %v1523
      %v1525 = vpop.f32.mrb[0].mxu0
      %v1526 = vadd.f32 %v523, %v1525
      %1527 = vmatprep.mubr.f32.mxu0 0.0
      %1528 = vmatmul.mubr.f32.gmra.mrb[0].mxu0 %v579
      %v1529 = vpop.f32.mrb[0].mxu0
      %v1530 = vadd.f32 %v528, %v1529
      %v1531 = vpop.f32.mrb[0].mxu0
      %v1532 = vadd.f32 %v528, %v1531
      %1533 = vmatprep.mubr.f32.mxu0 0.0
      %1534 = vmatmul.mubr.f32.gmra.mrb[0].mxu0 %v582
      %v1535 = vpop.f32.mrb[0].mxu0
      %v1536 = vadd.f32 %v533, %v1535
      %v1537 = vpop.f32.mrb[0].mxu0
      %v1538 = vadd.f32 %v533, %v1537
      %1539 = vdwg.mxu0
      %1540 = vmatprep.subr.mxu0 %v234
      %1541 = vmatpush1.msra.mxu0 %v233
      %1542 = vmatprep.subr.mxu0 %v284
      %1543 = vmatpush1.msra.mxu0 %v283
      %1544 = vmatprep.subr.mxu0 %v334
      %1545 = vmatpush1.msra.mxu0 %v333
      %1546 = vmatprep.subr.mxu0 %v619
      %1547 = vmatpush1.msra.mxu0 %v616
      %1548 = vmatprep.subr.mxu0 0.0
      %1549 = vmatpush1.msra.mxu0 0.0
      %1550 = vmatprep.subr.mxu0 0.0
      %1551 = vmatpush1.msra.mxu0 0.0
      %1552 = vmatprep.subr.mxu0 0.0
      %1553 = vmatpush1.msra.mxu0 0.0
      %1554 = vmatprep.subr.mxu0 0.0
      %1555 = vmatpush1.msra.mxu0 0.0
      %1556 = vmatprep.subr.mxu0 0.0
      %1557 = vmatpush1.msra.mxu0 0.0
      %1558 = vmatprep.subr.mxu0 0.0
      %1559 = vmatpush1.msra.mxu0 0.0
      %1560 = vmatprep.subr.mxu0 0.0
      %1561 = vmatpush1.msra.mxu0 0.0
      %1562 = vmatprep.subr.mxu0 0.0
      %1563 = vmatpush1.msra.mxu0 0.0
      %1564 = vmatprep.subr.mxu0 0.0
      %1565 = vmatpush1.msra.mxu0 0.0
      %1566 = vmatprep.subr.mxu0 0.0
      %1567 = vmatpush1.msra.mxu0 0.0
      %1568 = vmatprep.subr.mxu0 0.0
      %1569 = vmatpush1.msra.mxu0 0.0
      %1570 = vmatprep.subr.mxu0 0.0
      %1571 = vmatpush1.msra.mxu0 0.0
      %1572 = vmatprep.subr.mxu0 0.0
      %1573 = vmatpush1.msra.mxu0 0.0
      %1574 = vmatprep.subr.mxu0 0.0
      %1575 = vmatpush1.msra.mxu0 0.0
      %1576 = vmatprep.subr.mxu0 0.0
      %1577 = vmatpush1.msra.mxu0 0.0
      %1578 = vmatprep.subr.mxu0 0.0
      %1579 = vmatpush1.msra.mxu0 0.0
      %1580 = vmatprep.subr.mxu0 0.0
      %1581 = vmatpush1.msra.mxu0 0.0
      %1582 = vmatprep.subr.mxu0 0.0
      %1583 = vmatpush1.msra.mxu0 0.0
      %1584 = vmatprep.subr.mxu0 0.0
      %1585 = vmatpush1.msra.mxu0 0.0
      %1586 = vmatprep.subr.mxu0 0.0
      %1587 = vmatpush1.msra.mxu0 0.0
      %1588 = vmatprep.subr.mxu0 0.0
      %1589 = vmatpush1.msra.mxu0 0.0
      %1590 = vmatprep.subr.mxu0 0.0
      %1591 = vmatpush1.msra.mxu0 0.0
      %1592 = vmatprep.subr.mxu0 0.0
      %1593 = vmatpush1.msra.mxu0 0.0
      %1594 = vmatprep.subr.mxu0 0.0
      %1595 = vmatpush1.msra.mxu0 0.0
      %1596 = vmatprep.subr.mxu0 0.0
      %1597 = vmatpush1.msra.mxu0 0.0
      %1598 = vmatprep.subr.mxu0 0.0
      %1599 = vmatpush1.msra.mxu0 0.0
      %1600 = vmatprep.subr.mxu0 0.0
      %1601 = vmatpush1.msra.mxu0 0.0
      %1602 = vmatprep.subr.mxu0 0.0
      %1603 = vmatpush1.msra.mxu0 0.0
      %1604 = vmatprep.mubr.f32.mxu0 0.0
      %1605 = vmatmul.mubr.f32.gmra.mrb[0].mxu0 %v537
      %v1606 = vpop.f32.mrb[0].mxu0
      %v1607 = vadd.f32 %v458, %v1606
      %v1608 = vpop.f32.mrb[0].mxu0
      %v1609 = vadd.f32 %v458, %v1608
      %1610 = vmatprep.mubr.f32.mxu0 0.0
      %1611 = vmatmul.mubr.f32.gmra.mrb[0].mxu0 %v540
      %v1612 = vpop.f32.mrb[0].mxu0
      %v1613 = vadd.f32 %v463, %v1612
      %v1614 = vpop.f32.mrb[0].mxu0
      %v1615 = vadd.f32 %v463, %v1614
      %1616 = vmatprep.mubr.f32.mxu0 0.0
      %1617 = vmatmul.mubr.f32.gmra.mrb[0].mxu0 %v543
      %v1618 = vpop.f32.mrb[0].mxu0
      %v1619 = vadd.f32 %v468, %v1618
      %v1620 = vpop.f32.mrb[0].mxu0
      %v1621 = vadd.f32 %v468, %v1620
      %1622 = vmatprep.mubr.f32.mxu0 0.0
      %1623 = vmatmul.mubr.f32.gmra.mrb[0].mxu0 %v546
      %v1624 = vpop.f32.mrb[0].mxu0
      %v1625 = vadd.f32 %v473, %v1624
      %v1626 = vpop.f32.mrb[0].mxu0
      %v1627 = vadd.f32 %v473, %v1626
      %1628 = vmatprep.mubr.f32.mxu0 0.0
      %1629 = vmatmul.mubr.f32.gmra.mrb[0].mxu0 %v549
      %v1630 = vpop.f32.mrb[0].mxu0
      %v1631 = vadd.f32 %v478, %v1630
      %v1632 = vpop.f32.mrb[0].mxu0
      %v1633 = vadd.f32 %v478, %v1632
      %1634 = vmatprep.mubr.f32.mxu0 0.0
      %1635 = vmatmul.mubr.f32.gmra.mrb[0].mxu0 %v552
      %v1636 = vpop.f32.mrb[0].mxu0
      %v1637 = vadd.f32 %v483, %v1636
      %v1638 = vpop.f32.mrb[0].mxu0
      %v1639 = vadd.f32 %v483, %v1638
      %1640 = vmatprep.mubr.f32.mxu0 0.0
      %1641 = vmatmul.mubr.f32.gmra.mrb[0].mxu0 %v555
      %v1642 = vpop.f32.mrb[0].mxu0
      %v1643 = vadd.f32 %v488, %v1642
      %v1644 = vpop.f32.mrb[0].mxu0
      %v1645 = vadd.f32 %v488, %v1644
      %1646 = vmatprep.mubr.f32.mxu0 0.0
      %1647 = vmatmul.mubr.f32.gmra.mrb[0].mxu0 %v558
      %v1648 = vpop.f32.mrb[0].mxu0
      %v1649 = vadd.f32 %v493, %v1648
      %v1650 = vpop.f32.mrb[0].mxu0
      %v1651 = vadd.f32 %v493, %v1650
      %1652 = vmatprep.mubr.f32.mxu0 0.0
      %1653 = vmatmul.mubr.f32.gmra.mrb[0].mxu0 %v561
      %v1654 = vpop.f32.mrb[0].mxu0
      %v1655 = vadd.f32 %v498, %v1654
      %v1656 = vpop.f32.mrb[0].mxu0
      %v1657 = vadd.f32 %v498, %v1656
      %1658 = vmatprep.mubr.f32.mxu0 0.0
      %1659 = vmatmul.mubr.f32.gmra.mrb[0].mxu0 %v564
      %v1660 = vpop.f32.mrb[0].mxu0
      %v1661 = vadd.f32 %v503, %v1660
      %v1662 = vpop.f32.mrb[0].mxu0
      %v1663 = vadd.f32 %v503, %v1662
      %1664 = vmatprep.mubr.f32.mxu0 0.0
      %1665 = vmatmul.mubr.f32.gmra.mrb[0].mxu0 %v567
      %v1666 = vpop.f32.mrb[0].mxu0
      %v1667 = vadd.f32 %v508, %v1666
      %v1668 = vpop.f32.mrb[0].mxu0
      %v1669 = vadd.f32 %v508, %v1668
      %1670 = vmatprep.mubr.f32.mxu0 0.0
      %1671 = vmatmul.mubr.f32.gmra.mrb[0].mxu0 %v570
      %v1672 = vpop.f32.mrb[0].mxu0
      %v1673 = vadd.f32 %v513, %v1672
      %v1674 = vpop.f32.mrb[0].mxu0
      %v1675 = vadd.f32 %v513, %v1674
      %1676 = vmatprep.mubr.f32.mxu0 0.0
      %1677 = vmatmul.mubr.f32.gmra.mrb[0].mxu0 %v573
      %v1678 = vpop.f32.mrb[0].mxu0
      %v1679 = vadd.f32 %v518, %v1678
      %v1680 = vpop.f32.mrb[0].mxu0
      %v1681 = vadd.f32 %v518, %v1680
      %1682 = vmatprep.mubr.f32.mxu0 0.0
      %1683 = vmatmul.mubr.f32.gmra.mrb[0].mxu0 %v576
      %v1684 = vpop.f32.mrb[0].mxu0
      %v1685 = vadd.f32 %v523, %v1684
      %v1686 = vpop.f32.mrb[0].mxu0
      %v1687 = vadd.f32 %v523, %v1686
      %1688 = vmatprep.mubr.f32.mxu0 0.0
      %1689 = vmatmul.mubr.f32.gmra.mrb[0].mxu0 %v579
      %v1690 = vpop.f32.mrb[0].mxu0
      %v1691 = vadd.f32 %v528, %v1690
      %v1692 = vpop.f32.mrb[0].mxu0
      %v1693 = vadd.f32 %v528, %v1692
      %1694 = vmatprep.mubr.f32.mxu0 0.0
      %1695 = vmatmul.mubr.f32.gmra.mrb[0].mxu0 %v582
      %v1696 = vpop.f32.mrb[0].mxu0
      %v1697 = vadd.f32 %v533, %v1696
      %v1698 = vpop.f32.mrb[0].mxu0
      %v1699 = vadd.f32 %v533, %v1698
      %1700 = vdwg.mxu0
      %1701 = vmatprep.subr.mxu0 %v236
      %1702 = vmatpush1.msra.mxu0 %v235
      %1703 = vmatprep.subr.mxu0 %v286
      %1704 = vmatpush1.msra.mxu0 %v285
      %1705 = vmatprep.subr.mxu0 %v336
      %1706 = vmatpush1.msra.mxu0 %v335
      %1707 = vmatprep.subr.mxu0 %v625
      %1708 = vmatpush1.msra.mxu0 %v622
      %1709 = vmatprep.subr.mxu0 0.0
      %1710 = vmatpush1.msra.mxu0 0.0
      %1711 = vmatprep.subr.mxu0 0.0
      %1712 = vmatpush1.msra.mxu0 0.0
      %1713 = vmatprep.subr.mxu0 0.0
      %1714 = vmatpush1.msra.mxu0 0.0
      %1715 = vmatprep.subr.mxu0 0.0
      %1716 = vmatpush1.msra.mxu0 0.0
      %1717 = vmatprep.subr.mxu0 0.0
      %1718 = vmatpush1.msra.mxu0 0.0
      %1719 = vmatprep.subr.mxu0 0.0
      %1720 = vmatpush1.msra.mxu0 0.0
      %1721 = vmatprep.subr.mxu0 0.0
      %1722 = vmatpush1.msra.mxu0 0.0
      %1723 = vmatprep.subr.mxu0 0.0
      %1724 = vmatpush1.msra.mxu0 0.0
      %1725 = vmatprep.subr.mxu0 0.0
      %1726 = vmatpush1.msra.mxu0 0.0
      %1727 = vmatprep.subr.mxu0 0.0
      %1728 = vmatpush1.msra.mxu0 0.0
      %1729 = vmatprep.subr.mxu0 0.0
      %1730 = vmatpush1.msra.mxu0 0.0
      %1731 = vmatprep.subr.mxu0 0.0
      %1732 = vmatpush1.msra.mxu0 0.0
      %1733 = vmatprep.subr.mxu0 0.0
      %1734 = vmatpush1.msra.mxu0 0.0
      %1735 = vmatprep.subr.mxu0 0.0
      %1736 = vmatpush1.msra.mxu0 0.0
      %1737 = vmatprep.subr.mxu0 0.0
      %1738 = vmatpush1.msra.mxu0 0.0
      %1739 = vmatprep.subr.mxu0 0.0
      %1740 = vmatpush1.msra.mxu0 0.0
      %1741 = vmatprep.subr.mxu0 0.0
      %1742 = vmatpush1.msra.mxu0 0.0
      %1743 = vmatprep.subr.mxu0 0.0
      %1744 = vmatpush1.msra.mxu0 0.0
      %1745 = vmatprep.subr.mxu0 0.0
      %1746 = vmatpush1.msra.mxu0 0.0
      %1747 = vmatprep.subr.mxu0 0.0
      %1748 = vmatpush1.msra.mxu0 0.0
      %1749 = vmatprep.subr.mxu0 0.0
      %1750 = vmatpush1.msra.mxu0 0.0
      %1751 = vmatprep.subr.mxu0 0.0
      %1752 = vmatpush1.msra.mxu0 0.0
      %1753 = vmatprep.subr.mxu0 0.0
      %1754 = vmatpush1.msra.mxu0 0.0
      %1755 = vmatprep.subr.mxu0 0.0
      %1756 = vmatpush1.msra.mxu0 0.0
      %1757 = vmatprep.subr.mxu0 0.0
      %1758 = vmatpush1.msra.mxu0 0.0
      %1759 = vmatprep.subr.mxu0 0.0
      %1760 = vmatpush1.msra.mxu0 0.0
      %1761 = vmatprep.subr.mxu0 0.0
      %1762 = vmatpush1.msra.mxu0 0.0
      %1763 = vmatprep.subr.mxu0 0.0
      %1764 = vmatpush1.msra.mxu0 0.0
      %1765 = vmatprep.mubr.f32.mxu0 0.0
      %1766 = vmatmul.mubr.f32.gmra.mrb[0].mxu0 %v537
      %v1767 = vpop.f32.mrb[0].mxu0
      %v1768 = vadd.f32 %v458, %v1767
      %v1769 = vpop.f32.mrb[0].mxu0
      %v1770 = vadd.f32 %v458, %v1769
      %1771 = vmatprep.mubr.f32.mxu0 0.0
      %1772 = vmatmul.mubr.f32.gmra.mrb[0].mxu0 %v540
      %v1773 = vpop.f32.mrb[0].mxu0
      %v1774 = vadd.f32 %v463, %v1773
      %v1775 = vpop.f32.mrb[0].mxu0
      %v1776 = vadd.f32 %v463, %v1775
      %1777 = vmatprep.mubr.f32.mxu0 0.0
      %1778 = vmatmul.mubr.f32.gmra.mrb[0].mxu0 %v543
      %v1779 = vpop.f32.mrb[0].mxu0
      %v1780 = vadd.f32 %v468, %v1779
      %v1781 = vpop.f32.mrb[0].mxu0
      %v1782 = vadd.f32 %v468, %v1781
      %1783 = vmatprep.mubr.f32.mxu0 0.0
      %1784 = vmatmul.mubr.f32.gmra.mrb[0].mxu0 %v546
      %v1785 = vpop.f32.mrb[0].mxu0
      %v1786 = vadd.f32 %v473, %v1785
      %v1787 = vpop.f32.mrb[0].mxu0
      %v1788 = vadd.f32 %v473, %v1787
      %1789 = vmatprep.mubr.f32.mxu0 0.0
      %1790 = vmatmul.mubr.f32.gmra.mrb[0].mxu0 %v549
      %v1791 = vpop.f32.mrb[0].mxu0
      %v1792 = vadd.f32 %v478, %v1791
      %v1793 = vpop.f32.mrb[0].mxu0
      %v1794 = vadd.f32 %v478, %v1793
      %1795 = vmatprep.mubr.f32.mxu0 0.0
      %1796 = vmatmul.mubr.f32.gmra.mrb[0].mxu0 %v552
      %v1797 = vpop.f32.mrb[0].mxu0
      %v1798 = vadd.f32 %v483, %v1797
      %v1799 = vpop.f32.mrb[0].mxu0
      %v1800 = vadd.f32 %v483, %v1799
      %1801 = vmatprep.mubr.f32.mxu0 0.0
      %1802 = vmatmul.mubr.f32.gmra.mrb[0].mxu0 %v555
      %v1803 = vpop.f32.mrb[0].mxu0
      %v1804 = vadd.f32 %v488, %v1803
      %v1805 = vpop.f32.mrb[0].mxu0
      %v1806 = vadd.f32 %v488, %v1805
      %1807 = vmatprep.mubr.f32.mxu0 0.0
      %1808 = vmatmul.mubr.f32.gmra.mrb[0].mxu0 %v558
      %v1809 = vpop.f32.mrb[0].mxu0
      %v1810 = vadd.f32 %v493, %v1809
      %v1811 = vpop.f32.mrb[0].mxu0
      %v1812 = vadd.f32 %v493, %v1811
      %1813 = vmatprep.mubr.f32.mxu0 0.0
      %1814 = vmatmul.mubr.f32.gmra.mrb[0].mxu0 %v561
      %v1815 = vpop.f32.mrb[0].mxu0
      %v1816 = vadd.f32 %v498, %v1815
      %v1817 = vpop.f32.mrb[0].mxu0
      %v1818 = vadd.f32 %v498, %v1817
      %1819 = vmatprep.mubr.f32.mxu0 0.0
      %1820 = vmatmul.mubr.f32.gmra.mrb[0].mxu0 %v564
      %v1821 = vpop.f32.mrb[0].mxu0
      %v1822 = vadd.f32 %v503, %v1821
      %v1823 = vpop.f32.mrb[0].mxu0
      %v1824 = vadd.f32 %v503, %v1823
      %1825 = vmatprep.mubr.f32.mxu0 0.0
      %1826 = vmatmul.mubr.f32.gmra.mrb[0].mxu0 %v567
      %v1827 = vpop.f32.mrb[0].mxu0
      %v1828 = vadd.f32 %v508, %v1827
      %v1829 = vpop.f32.mrb[0].mxu0
      %v1830 = vadd.f32 %v508, %v1829
      %1831 = vmatprep.mubr.f32.mxu0 0.0
      %1832 = vmatmul.mubr.f32.gmra.mrb[0].mxu0 %v570
      %v1833 = vpop.f32.mrb[0].mxu0
      %v1834 = vadd.f32 %v513, %v1833
      %v1835 = vpop.f32.mrb[0].mxu0
      %v1836 = vadd.f32 %v513, %v1835
      %1837 = vmatprep.mubr.f32.mxu0 0.0
      %1838 = vmatmul.mubr.f32.gmra.mrb[0].mxu0 %v573
      %v1839 = vpop.f32.mrb[0].mxu0
      %v1840 = vadd.f32 %v518, %v1839
      %v1841 = vpop.f32.mrb[0].mxu0
      %v1842 = vadd.f32 %v518, %v1841
      %1843 = vmatprep.mubr.f32.mxu0 0.0
      %1844 = vmatmul.mubr.f32.gmra.mrb[0].mxu0 %v576
      %v1845 = vpop.f32.mrb[0].mxu0
      %v1846 = vadd.f32 %v523, %v1845
      %v1847 = vpop.f32.mrb[0].mxu0
      %v1848 = vadd.f32 %v523, %v1847
      %1849 = vmatprep.mubr.f32.mxu0 0.0
      %1850 = vmatmul.mubr.f32.gmra.mrb[0].mxu0 %v579
      %v1851 = vpop.f32.mrb[0].mxu0
      %v1852 = vadd.f32 %v528, %v1851
      %v1853 = vpop.f32.mrb[0].mxu0
      %v1854 = vadd.f32 %v528, %v1853
      %1855 = vmatprep.mubr.f32.mxu0 0.0
      %1856 = vmatmul.mubr.f32.gmra.mrb[0].mxu0 %v582
      %v1857 = vpop.f32.mrb[0].mxu0
      %v1858 = vadd.f32 %v533, %v1857
      %v1859 = vpop.f32.mrb[0].mxu0
      %v1860 = vadd.f32 %v533, %v1859
      %1861 = vdwg.mxu0
      %1862 = vmatprep.subr.mxu0 %v238
      %1863 = vmatpush1.msra.mxu0 %v237
      %1864 = vmatprep.subr.mxu0 %v288
      %1865 = vmatpush1.msra.mxu0 %v287
      %1866 = vmatprep.subr.mxu0 %v338
      %1867 = vmatpush1.msra.mxu0 %v337
      %1868 = vmatprep.subr.mxu0 %v631
      %1869 = vmatpush1.msra.mxu0 %v628
      %1870 = vmatprep.subr.mxu0 0.0
      %1871 = vmatpush1.msra.mxu0 0.0
      %1872 = vmatprep.subr.mxu0 0.0
      %1873 = vmatpush1.msra.mxu0 0.0
      %1874 = vmatprep.subr.mxu0 0.0
      %1875 = vmatpush1.msra.mxu0 0.0
      %1876 = vmatprep.subr.mxu0 0.0
      %1877 = vmatpush1.msra.mxu0 0.0
      %1878 = vmatprep.subr.mxu0 0.0
      %1879 = vmatpush1.msra.mxu0 0.0
      %1880 = vmatprep.subr.mxu0 0.0
      %1881 = vmatpush1.msra.mxu0 0.0
      %1882 = vmatprep.subr.mxu0 0.0
      %1883 = vmatpush1.msra.mxu0 0.0
      %1884 = vmatprep.subr.mxu0 0.0
      %1885 = vmatpush1.msra.mxu0 0.0
      %1886 = vmatprep.subr.mxu0 0.0
      %1887 = vmatpush1.msra.mxu0 0.0
      %1888 = vmatprep.subr.mxu0 0.0
      %1889 = vmatpush1.msra.mxu0 0.0
      %1890 = vmatprep.subr.mxu0 0.0
      %1891 = vmatpush1.msra.mxu0 0.0
      %1892 = vmatprep.subr.mxu0 0.0
      %1893 = vmatpush1.msra.mxu0 0.0
      %1894 = vmatprep.subr.mxu0 0.0
      %1895 = vmatpush1.msra.mxu0 0.0
      %1896 = vmatprep.subr.mxu0 0.0
      %1897 = vmatpush1.msra.mxu0 0.0
      %1898 = vmatprep.subr.mxu0 0.0
      %1899 = vmatpush1.msra.mxu0 0.0
      %1900 = vmatprep.subr.mxu0 0.0
      %1901 = vmatpush1.msra.mxu0 0.0
      %1902 = vmatprep.subr.mxu0 0.0
      %1903 = vmatpush1.msra.mxu0 0.0
      %1904 = vmatprep.subr.mxu0 0.0
      %1905 = vmatpush1.msra.mxu0 0.0
      %1906 = vmatprep.subr.mxu0 0.0
      %1907 = vmatpush1.msra.mxu0 0.0
      %1908 = vmatprep.subr.mxu0 0.0
      %1909 = vmatpush1.msra.mxu0 0.0
      %1910 = vmatprep.subr.mxu0 0.0
      %1911 = vmatpush1.msra.mxu0 0.0
      %1912 = vmatprep.subr.mxu0 0.0
      %1913 = vmatpush1.msra.mxu0 0.0
      %1914 = vmatprep.subr.mxu0 0.0
      %1915 = vmatpush1.msra.mxu0 0.0
      %1916 = vmatprep.subr.mxu0 0.0
      %1917 = vmatpush1.msra.mxu0 0.0
      %1918 = vmatprep.subr.mxu0 0.0
      %1919 = vmatpush1.msra.mxu0 0.0
      %1920 = vmatprep.subr.mxu0 0.0
      %1921 = vmatpush1.msra.mxu0 0.0
      %1922 = vmatprep.subr.mxu0 0.0
      %1923 = vmatpush1.msra.mxu0 0.0
      %1924 = vmatprep.subr.mxu0 0.0
      %1925 = vmatpush1.msra.mxu0 0.0
      %1926 = vmatprep.mubr.f32.mxu0 0.0
      %1927 = vmatmul.mubr.f32.gmra.mrb[0].mxu0 %v537
      %v1928 = vpop.f32.mrb[0].mxu0
      %v1929 = vadd.f32 %v458, %v1928
      %v1930 = vpop.f32.mrb[0].mxu0
      %v1931 = vadd.f32 %v458, %v1930
      %1932 = vmatprep.mubr.f32.mxu0 0.0
      %1933 = vmatmul.mubr.f32.gmra.mrb[0].mxu0 %v540
      %v1934 = vpop.f32.mrb[0].mxu0
      %v1935 = vadd.f32 %v463, %v1934
      %v1936 = vpop.f32.mrb[0].mxu0
      %v1937 = vadd.f32 %v463, %v1936
      %1938 = vmatprep.mubr.f32.mxu0 0.0
      %1939 = vmatmul.mubr.f32.gmra.mrb[0].mxu0 %v543
      %v1940 = vpop.f32.mrb[0].mxu0
      %v1941 = vadd.f32 %v468, %v1940
      %v1942 = vpop.f32.mrb[0].mxu0
      %v1943 = vadd.f32 %v468, %v1942
      %1944 = vmatprep.mubr.f32.mxu0 0.0
      %1945 = vmatmul.mubr.f32.gmra.mrb[0].mxu0 %v546
      %v1946 = vpop.f32.mrb[0].mxu0
      %v1947 = vadd.f32 %v473, %v1946
      %v1948 = vpop.f32.mrb[0].mxu0
      %v1949 = vadd.f32 %v473, %v1948
      %1950 = vmatprep.mubr.f32.mxu0 0.0
      %1951 = vmatmul.mubr.f32.gmra.mrb[0].mxu0 %v549
      %v1952 = vpop.f32.mrb[0].mxu0
      %v1953 = vadd.f32 %v478, %v1952
      %v1954 = vpop.f32.mrb[0].mxu0
      %v1955 = vadd.f32 %v478, %v1954
      %1956 = vmatprep.mubr.f32.mxu0 0.0
      %1957 = vmatmul.mubr.f32.gmra.mrb[0].mxu0 %v552
      %v1958 = vpop.f32.mrb[0].mxu0
      %v1959 = vadd.f32 %v483, %v1958
      %v1960 = vpop.f32.mrb[0].mxu0
      %v1961 = vadd.f32 %v483, %v1960
      %1962 = vmatprep.mubr.f32.mxu0 0.0
      %1963 = vmatmul.mubr.f32.gmra.mrb[0].mxu0 %v555
      %v1964 = vpop.f32.mrb[0].mxu0
      %v1965 = vadd.f32 %v488, %v1964
      %v1966 = vpop.f32.mrb[0].mxu0
      %v1967 = vadd.f32 %v488, %v1966
      %1968 = vmatprep.mubr.f32.mxu0 0.0
      %1969 = vmatmul.mubr.f32.gmra.mrb[0].mxu0 %v558
      %v1970 = vpop.f32.mrb[0].mxu0
      %v1971 = vadd.f32 %v493, %v1970
      %v1972 = vpop.f32.mrb[0].mxu0
      %v1973 = vadd.f32 %v493, %v1972
      %1974 = vmatprep.mubr.f32.mxu0 0.0
      %1975 = vmatmul.mubr.f32.gmra.mrb[0].mxu0 %v561
      %v1976 = vpop.f32.mrb[0].mxu0
      %v1977 = vadd.f32 %v498, %v1976
      %v1978 = vpop.f32.mrb[0].mxu0
      %v1979 = vadd.f32 %v498, %v1978
      %1980 = vmatprep.mubr.f32.mxu0 0.0
      %1981 = vmatmul.mubr.f32.gmra.mrb[0].mxu0 %v564
      %v1982 = vpop.f32.mrb[0].mxu0
      %v1983 = vadd.f32 %v503, %v1982
      %v1984 = vpop.f32.mrb[0].mxu0
      %v1985 = vadd.f32 %v503, %v1984
      %1986 = vmatprep.mubr.f32.mxu0 0.0
      %1987 = vmatmul.mubr.f32.gmra.mrb[0].mxu0 %v567
      %v1988 = vpop.f32.mrb[0].mxu0
      %v1989 = vadd.f32 %v508, %v1988
      %v1990 = vpop.f32.mrb[0].mxu0
      %v1991 = vadd.f32 %v508, %v1990
      %1992 = vmatprep.mubr.f32.mxu0 0.0
      %1993 = vmatmul.mubr.f32.gmra.mrb[0].mxu0 %v570
      %v1994 = vpop.f32.mrb[0].mxu0
      %v1995 = vadd.f32 %v513, %v1994
      %v1996 = vpop.f32.mrb[0].mxu0
      %v1997 = vadd.f32 %v513, %v1996
      %1998 = vmatprep.mubr.f32.mxu0 0.0
      %1999 = vmatmul.mubr.f32.gmra.mrb[0].mxu0 %v573
      %v2000 = vpop.f32.mrb[0].mxu0
      %v2001 = vadd.f32 %v518, %v2000
      %v2002 = vpop.f32.mrb[0].mxu0
      %v2003 = vadd.f32 %v518, %v2002
      %2004 = vmatprep.mubr.f32.mxu0 0.0
      %2005 = vmatmul.mubr.f32.gmra.mrb[0].mxu0 %v576
      %v2006 = vpop.f32.mrb[0].mxu0
      %v2007 = vadd.f32 %v523, %v2006
      %v2008 = vpop.f32.mrb[0].mxu0
      %v2009 = vadd.f32 %v523, %v2008
      %2010 = vmatprep.mubr.f32.mxu0 0.0
      %2011 = vmatmul.mubr.f32.gmra.mrb[0].mxu0 %v579
      %v2012 = vpop.f32.mrb[0].mxu0
      %v2013 = vadd.f32 %v528, %v2012
      %v2014 = vpop.f32.mrb[0].mxu0
      %v2015 = vadd.f32 %v528, %v2014
      %2016 = vmatprep.mubr.f32.mxu0 0.0
      %2017 = vmatmul.mubr.f32.gmra.mrb[0].mxu0 %v582
      %v2018 = vpop.f32.mrb[0].mxu0
      %v2019 = vadd.f32 %v533, %v2018
      %v2020 = vpop.f32.mrb[0].mxu0
      %v2021 = vadd.f32 %v533, %v2020
      %2022 = vdwg.mxu0
      %2023 = vmatprep.subr.mxu0 %v240
      %2024 = vmatpush1.msra.mxu0 %v239
      %2025 = vmatprep.subr.mxu0 %v290
      %2026 = vmatpush1.msra.mxu0 %v289
      %2027 = vmatprep.subr.mxu0 %v340
      %2028 = vmatpush1.msra.mxu0 %v339
      %2029 = vmatprep.subr.mxu0 %v637
      %2030 = vmatpush1.msra.mxu0 %v634
      %2031 = vmatprep.subr.mxu0 0.0
      %2032 = vmatpush1.msra.mxu0 0.0
      %2033 = vmatprep.subr.mxu0 0.0
      %2034 = vmatpush1.msra.mxu0 0.0
      %2035 = vmatprep.subr.mxu0 0.0
      %2036 = vmatpush1.msra.mxu0 0.0
      %2037 = vmatprep.subr.mxu0 0.0
      %2038 = vmatpush1.msra.mxu0 0.0
      %2039 = vmatprep.subr.mxu0 0.0
      %2040 = vmatpush1.msra.mxu0 0.0
      %2041 = vmatprep.subr.mxu0 0.0
      %2042 = vmatpush1.msra.mxu0 0.0
      %2043 = vmatprep.subr.mxu0 0.0
      %2044 = vmatpush1.msra.mxu0 0.0
      %2045 = vmatprep.subr.mxu0 0.0
      %2046 = vmatpush1.msra.mxu0 0.0
      %2047 = vmatprep.subr.mxu0 0.0
      %2048 = vmatpush1.msra.mxu0 0.0
      %2049 = vmatprep.subr.mxu0 0.0
      %2050 = vmatpush1.msra.mxu0 0.0
      %2051 = vmatprep.subr.mxu0 0.0
      %2052 = vmatpush1.msra.mxu0 0.0
      %2053 = vmatprep.subr.mxu0 0.0
      %2054 = vmatpush1.msra.mxu0 0.0
      %2055 = vmatprep.subr.mxu0 0.0
      %2056 = vmatpush1.msra.mxu0 0.0
      %2057 = vmatprep.subr.mxu0 0.0
      %2058 = vmatpush1.msra.mxu0 0.0
      %2059 = vmatprep.subr.mxu0 0.0
      %2060 = vmatpush1.msra.mxu0 0.0
      %2061 = vmatprep.subr.mxu0 0.0
      %2062 = vmatpush1.msra.mxu0 0.0
      %2063 = vmatprep.subr.mxu0 0.0
      %2064 = vmatpush1.msra.mxu0 0.0
      %2065 = vmatprep.subr.mxu0 0.0
      %2066 = vmatpush1.msra.mxu0 0.0
      %2067 = vmatprep.subr.mxu0 0.0
      %2068 = vmatpush1.msra.mxu0 0.0
      %2069 = vmatprep.subr.mxu0 0.0
      %2070 = vmatpush1.msra.mxu0 0.0
      %2071 = vmatprep.subr.mxu0 0.0
      %2072 = vmatpush1.msra.mxu0 0.0
      %2073 = vmatprep.subr.mxu0 0.0
      %2074 = vmatpush1.msra.mxu0 0.0
      %2075 = vmatprep.subr.mxu0 0.0
      %2076 = vmatpush1.msra.mxu0 0.0
      %2077 = vmatprep.subr.mxu0 0.0
      %2078 = vmatpush1.msra.mxu0 0.0
      %2079 = vmatprep.subr.mxu0 0.0
      %2080 = vmatpush1.msra.mxu0 0.0
      %2081 = vmatprep.subr.mxu0 0.0
      %2082 = vmatpush1.msra.mxu0 0.0
      %2083 = vmatprep.subr.mxu0 0.0
      %2084 = vmatpush1.msra.mxu0 0.0
      %2085 = vmatprep.subr.mxu0 0.0
      %2086 = vmatpush1.msra.mxu0 0.0
      %2087 = vmatprep.mubr.f32.mxu0 0.0
      %2088 = vmatmul.mubr.f32.gmra.mrb[0].mxu0 %v537
      %v2089 = vpop.f32.mrb[0].mxu0
      %v2090 = vadd.f32 %v458, %v2089
      %v2091 = vpop.f32.mrb[0].mxu0
      %v2092 = vadd.f32 %v458, %v2091
      %2093 = vmatprep.mubr.f32.mxu0 0.0
      %2094 = vmatmul.mubr.f32.gmra.mrb[0].mxu0 %v540
      %v2095 = vpop.f32.mrb[0].mxu0
      %v2096 = vadd.f32 %v463, %v2095
      %v2097 = vpop.f32.mrb[0].mxu0
      %v2098 = vadd.f32 %v463, %v2097
      %2099 = vmatprep.mubr.f32.mxu0 0.0
      %2100 = vmatmul.mubr.f32.gmra.mrb[0].mxu0 %v543
      %v2101 = vpop.f32.mrb[0].mxu0
      %v2102 = vadd.f32 %v468, %v2101
      %v2103 = vpop.f32.mrb[0].mxu0
      %v2104 = vadd.f32 %v468, %v2103
      %2105 = vmatprep.mubr.f32.mxu0 0.0
      %2106 = vmatmul.mubr.f32.gmra.mrb[0].mxu0 %v546
      %v2107 = vpop.f32.mrb[0].mxu0
      %v2108 = vadd.f32 %v473, %v2107
      %v2109 = vpop.f32.mrb[0].mxu0
      %v2110 = vadd.f32 %v473, %v2109
      %2111 = vmatprep.mubr.f32.mxu0 0.0
      %2112 = vmatmul.mubr.f32.gmra.mrb[0].mxu0 %v549
      %v2113 = vpop.f32.mrb[0].mxu0
      %v2114 = vadd.f32 %v478, %v2113
      %v2115 = vpop.f32.mrb[0].mxu0
      %v2116 = vadd.f32 %v478, %v2115
      %2117 = vmatprep.mubr.f32.mxu0 0.0
      %2118 = vmatmul.mubr.f32.gmra.mrb[0].mxu0 %v552
      %v2119 = vpop.f32.mrb[0].mxu0
      %v2120 = vadd.f32 %v483, %v2119
      %v2121 = vpop.f32.mrb[0].mxu0
      %v2122 = vadd.f32 %v483, %v2121
      %2123 = vmatprep.mubr.f32.mxu0 0.0
      %2124 = vmatmul.mubr.f32.gmra.mrb[0].mxu0 %v555
      %v2125 = vpop.f32.mrb[0].mxu0
      %v2126 = vadd.f32 %v488, %v2125
      %v2127 = vpop.f32.mrb[0].mxu0
      %v2128 = vadd.f32 %v488, %v2127
      %2129 = vmatprep.mubr.f32.mxu0 0.0
      %2130 = vmatmul.mubr.f32.gmra.mrb[0].mxu0 %v558
      %v2131 = vpop.f32.mrb[0].mxu0
      %v2132 = vadd.f32 %v493, %v2131
      %v2133 = vpop.f32.mrb[0].mxu0
      %v2134 = vadd.f32 %v493, %v2133
      %2135 = vmatprep.mubr.f32.mxu0 0.0
      %2136 = vmatmul.mubr.f32.gmra.mrb[0].mxu0 %v561
      %v2137 = vpop.f32.mrb[0].mxu0
      %v2138 = vadd.f32 %v498, %v2137
      %v2139 = vpop.f32.mrb[0].mxu0
      %v2140 = vadd.f32 %v498, %v2139
      %2141 = vmatprep.mubr.f32.mxu0 0.0
      %2142 = vmatmul.mubr.f32.gmra.mrb[0].mxu0 %v564
      %v2143 = vpop.f32.mrb[0].mxu0
      %v2144 = vadd.f32 %v503, %v2143
      %v2145 = vpop.f32.mrb[0].mxu0
      %v2146 = vadd.f32 %v503, %v2145
      %2147 = vmatprep.mubr.f32.mxu0 0.0
      %2148 = vmatmul.mubr.f32.gmra.mrb[0].mxu0 %v567
      %v2149 = vpop.f32.mrb[0].mxu0
      %v2150 = vadd.f32 %v508, %v2149
      %v2151 = vpop.f32.mrb[0].mxu0
      %v2152 = vadd.f32 %v508, %v2151
      %2153 = vmatprep.mubr.f32.mxu0 0.0
      %2154 = vmatmul.mubr.f32.gmra.mrb[0].mxu0 %v570
      %v2155 = vpop.f32.mrb[0].mxu0
      %v2156 = vadd.f32 %v513, %v2155
      %v2157 = vpop.f32.mrb[0].mxu0
      %v2158 = vadd.f32 %v513, %v2157
      %2159 = vmatprep.mubr.f32.mxu0 0.0
      %2160 = vmatmul.mubr.f32.gmra.mrb[0].mxu0 %v573
      %v2161 = vpop.f32.mrb[0].mxu0
      %v2162 = vadd.f32 %v518, %v2161
      %v2163 = vpop.f32.mrb[0].mxu0
      %v2164 = vadd.f32 %v518, %v2163
      %2165 = vmatprep.mubr.f32.mxu0 0.0
      %2166 = vmatmul.mubr.f32.gmra.mrb[0].mxu0 %v576
      %v2167 = vpop.f32.mrb[0].mxu0
      %v2168 = vadd.f32 %v523, %v2167
      %v2169 = vpop.f32.mrb[0].mxu0
      %v2170 = vadd.f32 %v523, %v2169
      %2171 = vmatprep.mubr.f32.mxu0 0.0
      %2172 = vmatmul.mubr.f32.gmra.mrb[0].mxu0 %v579
      %v2173 = vpop.f32.mrb[0].mxu0
      %v2174 = vadd.f32 %v528, %v2173
      %v2175 = vpop.f32.mrb[0].mxu0
      %v2176 = vadd.f32 %v528, %v2175
      %2177 = vmatprep.mubr.f32.mxu0 0.0
      %2178 = vmatmul.mubr.f32.gmra.mrb[0].mxu0 %v582
      %v2179 = vpop.f32.mrb[0].mxu0
      %v2180 = vadd.f32 %v533, %v2179
      %v2181 = vpop.f32.mrb[0].mxu0
      %v2182 = vadd.f32 %v533, %v2181
      %2183 = vdwg.mxu0
      %2184 = vmatprep.subr.mxu0 %v242
      %2185 = vmatpush1.msra.mxu0 %v241
      %2186 = vmatprep.subr.mxu0 %v292
      %2187 = vmatpush1.msra.mxu0 %v291
      %2188 = vmatprep.subr.mxu0 %v342
      %2189 = vmatpush1.msra.mxu0 %v341
      %2190 = vmatprep.subr.mxu0 %v643
      %2191 = vmatpush1.msra.mxu0 %v640
      %2192 = vmatprep.subr.mxu0 0.0
      %2193 = vmatpush1.msra.mxu0 0.0
      %2194 = vmatprep.subr.mxu0 0.0
      %2195 = vmatpush1.msra.mxu0 0.0
      %2196 = vmatprep.subr.mxu0 0.0
      %2197 = vmatpush1.msra.mxu0 0.0
      %2198 = vmatprep.subr.mxu0 0.0
      %2199 = vmatpush1.msra.mxu0 0.0
      %2200 = vmatprep.subr.mxu0 0.0
      %2201 = vmatpush1.msra.mxu0 0.0
      %2202 = vmatprep.subr.mxu0 0.0
      %2203 = vmatpush1.msra.mxu0 0.0
      %2204 = vmatprep.subr.mxu0 0.0
      %2205 = vmatpush1.msra.mxu0 0.0
      %2206 = vmatprep.subr.mxu0 0.0
      %2207 = vmatpush1.msra.mxu0 0.0
      %2208 = vmatprep.subr.mxu0 0.0
      %2209 = vmatpush1.msra.mxu0 0.0
      %2210 = vmatprep.subr.mxu0 0.0
      %2211 = vmatpush1.msra.mxu0 0.0
      %2212 = vmatprep.subr.mxu0 0.0
      %2213 = vmatpush1.msra.mxu0 0.0
      %2214 = vmatprep.subr.mxu0 0.0
      %2215 = vmatpush1.msra.mxu0 0.0
      %2216 = vmatprep.subr.mxu0 0.0
      %2217 = vmatpush1.msra.mxu0 0.0
      %2218 = vmatprep.subr.mxu0 0.0
      %2219 = vmatpush1.msra.mxu0 0.0
      %2220 = vmatprep.subr.mxu0 0.0
      %2221 = vmatpush1.msra.mxu0 0.0
      %2222 = vmatprep.subr.mxu0 0.0
      %2223 = vmatpush1.msra.mxu0 0.0
      %2224 = vmatprep.subr.mxu0 0.0
      %2225 = vmatpush1.msra.mxu0 0.0
      %2226 = vmatprep.subr.mxu0 0.0
      %2227 = vmatpush1.msra.mxu0 0.0
      %2228 = vmatprep.subr.mxu0 0.0
      %2229 = vmatpush1.msra.mxu0 0.0
      %2230 = vmatprep.subr.mxu0 0.0
      %2231 = vmatpush1.msra.mxu0 0.0
      %2232 = vmatprep.subr.mxu0 0.0
      %2233 = vmatpush1.msra.mxu0 0.0
      %2234 = vmatprep.subr.mxu0 0.0
      %2235 = vmatpush1.msra.mxu0 0.0
      %2236 = vmatprep.subr.mxu0 0.0
      %2237 = vmatpush1.msra.mxu0 0.0
      %2238 = vmatprep.subr.mxu0 0.0
      %2239 = vmatpush1.msra.mxu0 0.0
      %2240 = vmatprep.subr.mxu0 0.0
      %2241 = vmatpush1.msra.mxu0 0.0
      %2242 = vmatprep.subr.mxu0 0.0
      %2243 = vmatpush1.msra.mxu0 0.0
      %2244 = vmatprep.subr.mxu0 0.0
      %2245 = vmatpush1.msra.mxu0 0.0
      %2246 = vmatprep.subr.mxu0 0.0
      %2247 = vmatpush1.msra.mxu0 0.0
      %2248 = vmatprep.mubr.f32.mxu0 0.0
      %2249 = vmatmul.mubr.f32.gmra.mrb[0].mxu0 %v537
      %v2250 = vpop.f32.mrb[0].mxu0
      %v2251 = vadd.f32 %v458, %v2250
      %v2252 = vpop.f32.mrb[0].mxu0
      %v2253 = vadd.f32 %v458, %v2252
      %2254 = vmatprep.mubr.f32.mxu0 0.0
      %2255 = vmatmul.mubr.f32.gmra.mrb[0].mxu0 %v540
      %v2256 = vpop.f32.mrb[0].mxu0
      %v2257 = vadd.f32 %v463, %v2256
      %v2258 = vpop.f32.mrb[0].mxu0
      %v2259 = vadd.f32 %v463, %v2258
      %2260 = vmatprep.mubr.f32.mxu0 0.0
      %2261 = vmatmul.mubr.f32.gmra.mrb[0].mxu0 %v543
      %v2262 = vpop.f32.mrb[0].mxu0
      %v2263 = vadd.f32 %v468, %v2262
      %v2264 = vpop.f32.mrb[0].mxu0
      %v2265 = vadd.f32 %v468, %v2264
      %2266 = vmatprep.mubr.f32.mxu0 0.0
      %2267 = vmatmul.mubr.f32.gmra.mrb[0].mxu0 %v546
      %v2268 = vpop.f32.mrb[0].mxu0
      %v2269 = vadd.f32 %v473, %v2268
      %v2270 = vpop.f32.mrb[0].mxu0
      %v2271 = vadd.f32 %v473, %v2270
      %2272 = vmatprep.mubr.f32.mxu0 0.0
      %2273 = vmatmul.mubr.f32.gmra.mrb[0].mxu0 %v549
      %v2274 = vpop.f32.mrb[0].mxu0
      %v2275 = vadd.f32 %v478, %v2274
      %v2276 = vpop.f32.mrb[0].mxu0
      %v2277 = vadd.f32 %v478, %v2276
      %2278 = vmatprep.mubr.f32.mxu0 0.0
      %2279 = vmatmul.mubr.f32.gmra.mrb[0].mxu0 %v552
      %v2280 = vpop.f32.mrb[0].mxu0
      %v2281 = vadd.f32 %v483, %v2280
      %v2282 = vpop.f32.mrb[0].mxu0
      %v2283 = vadd.f32 %v483, %v2282
      %2284 = vmatprep.mubr.f32.mxu0 0.0
      %2285 = vmatmul.mubr.f32.gmra.mrb[0].mxu0 %v555
      %v2286 = vpop.f32.mrb[0].mxu0
      %v2287 = vadd.f32 %v488, %v2286
      %v2288 = vpop.f32.mrb[0].mxu0
      %v2289 = vadd.f32 %v488, %v2288
      %2290 = vmatprep.mubr.f32.mxu0 0.0
      %2291 = vmatmul.mubr.f32.gmra.mrb[0].mxu0 %v558
      %v2292 = vpop.f32.mrb[0].mxu0
      %v2293 = vadd.f32 %v493, %v2292
      %v2294 = vpop.f32.mrb[0].mxu0
      %v2295 = vadd.f32 %v493, %v2294
      %2296 = vmatprep.mubr.f32.mxu0 0.0
      %2297 = vmatmul.mubr.f32.gmra.mrb[0].mxu0 %v561
      %v2298 = vpop.f32.mrb[0].mxu0
      %v2299 = vadd.f32 %v498, %v2298
      %v2300 = vpop.f32.mrb[0].mxu0
      %v2301 = vadd.f32 %v498, %v2300
      %2302 = vmatprep.mubr.f32.mxu0 0.0
      %2303 = vmatmul.mubr.f32.gmra.mrb[0].mxu0 %v564
      %v2304 = vpop.f32.mrb[0].mxu0
      %v2305 = vadd.f32 %v503, %v2304
      %v2306 = vpop.f32.mrb[0].mxu0
      %v2307 = vadd.f32 %v503, %v2306
      %2308 = vmatprep.mubr.f32.mxu0 0.0
      %2309 = vmatmul.mubr.f32.gmra.mrb[0].mxu0 %v567
      %v2310 = vpop.f32.mrb[0].mxu0
      %v2311 = vadd.f32 %v508, %v2310
      %v2312 = vpop.f32.mrb[0].mxu0
      %v2313 = vadd.f32 %v508, %v2312
      %2314 = vmatprep.mubr.f32.mxu0 0.0
      %2315 = vmatmul.mubr.f32.gmra.mrb[0].mxu0 %v570
      %v2316 = vpop.f32.mrb[0].mxu0
      %v2317 = vadd.f32 %v513, %v2316
      %v2318 = vpop.f32.mrb[0].mxu0
      %v2319 = vadd.f32 %v513, %v2318
      %2320 = vmatprep.mubr.f32.mxu0 0.0
      %2321 = vmatmul.mubr.f32.gmra.mrb[0].mxu0 %v573
      %v2322 = vpop.f32.mrb[0].mxu0
      %v2323 = vadd.f32 %v518, %v2322
      %v2324 = vpop.f32.mrb[0].mxu0
      %v2325 = vadd.f32 %v518, %v2324
      %2326 = vmatprep.mubr.f32.mxu0 0.0
      %2327 = vmatmul.mubr.f32.gmra.mrb[0].mxu0 %v576
      %v2328 = vpop.f32.mrb[0].mxu0
      %v2329 = vadd.f32 %v523, %v2328
      %v2330 = vpop.f32.mrb[0].mxu0
      %v2331 = vadd.f32 %v523, %v2330
      %2332 = vmatprep.mubr.f32.mxu0 0.0
      %2333 = vmatmul.mubr.f32.gmra.mrb[0].mxu0 %v579
      %v2334 = vpop.f32.mrb[0].mxu0
      %v2335 = vadd.f32 %v528, %v2334
      %v2336 = vpop.f32.mrb[0].mxu0
      %v2337 = vadd.f32 %v528, %v2336
      %2338 = vmatprep.mubr.f32.mxu0 0.0
      %2339 = vmatmul.mubr.f32.gmra.mrb[0].mxu0 %v582
      %v2340 = vpop.f32.mrb[0].mxu0
      %v2341 = vadd.f32 %v533, %v2340
      %v2342 = vpop.f32.mrb[0].mxu0
      %v2343 = vadd.f32 %v533, %v2342
      %2344 = vdwg.mxu0
      %2345 = vmatprep.subr.mxu0 %v244
      %2346 = vmatpush1.msra.mxu0 %v243
      %2347 = vmatprep.subr.mxu0 %v294
      %2348 = vmatpush1.msra.mxu0 %v293
      %2349 = vmatprep.subr.mxu0 %v344
      %2350 = vmatpush1.msra.mxu0 %v343
      %2351 = vmatprep.subr.mxu0 %v649
      %2352 = vmatpush1.msra.mxu0 %v646
      %2353 = vmatprep.subr.mxu0 0.0
      %2354 = vmatpush1.msra.mxu0 0.0
      %2355 = vmatprep.subr.mxu0 0.0
      %2356 = vmatpush1.msra.mxu0 0.0
      %2357 = vmatprep.subr.mxu0 0.0
      %2358 = vmatpush1.msra.mxu0 0.0
      %2359 = vmatprep.subr.mxu0 0.0
      %2360 = vmatpush1.msra.mxu0 0.0
      %2361 = vmatprep.subr.mxu0 0.0
      %2362 = vmatpush1.msra.mxu0 0.0
      %2363 = vmatprep.subr.mxu0 0.0
      %2364 = vmatpush1.msra.mxu0 0.0
      %2365 = vmatprep.subr.mxu0 0.0
      %2366 = vmatpush1.msra.mxu0 0.0
      %2367 = vmatprep.subr.mxu0 0.0
      %2368 = vmatpush1.msra.mxu0 0.0
      %2369 = vmatprep.subr.mxu0 0.0
      %2370 = vmatpush1.msra.mxu0 0.0
      %2371 = vmatprep.subr.mxu0 0.0
      %2372 = vmatpush1.msra.mxu0 0.0
      %2373 = vmatprep.subr.mxu0 0.0
      %2374 = vmatpush1.msra.mxu0 0.0
      %2375 = vmatprep.subr.mxu0 0.0
      %2376 = vmatpush1.msra.mxu0 0.0
      %2377 = vmatprep.subr.mxu0 0.0
      %2378 = vmatpush1.msra.mxu0 0.0
      %2379 = vmatprep.subr.mxu0 0.0
      %2380 = vmatpush1.msra.mxu0 0.0
      %2381 = vmatprep.subr.mxu0 0.0
      %2382 = vmatpush1.msra.mxu0 0.0
      %2383 = vmatprep.subr.mxu0 0.0
      %2384 = vmatpush1.msra.mxu0 0.0
      %2385 = vmatprep.subr.mxu0 0.0
      %2386 = vmatpush1.msra.mxu0 0.0
      %2387 = vmatprep.subr.mxu0 0.0
      %2388 = vmatpush1.msra.mxu0 0.0
      %2389 = vmatprep.subr.mxu0 0.0
      %2390 = vmatpush1.msra.mxu0 0.0
      %2391 = vmatprep.subr.mxu0 0.0
      %2392 = vmatpush1.msra.mxu0 0.0
      %2393 = vmatprep.subr.mxu0 0.0
      %2394 = vmatpush1.msra.mxu0 0.0
      %2395 = vmatprep.subr.mxu0 0.0
      %2396 = vmatpush1.msra.mxu0 0.0
      %2397 = vmatprep.subr.mxu0 0.0
      %2398 = vmatpush1.msra.mxu0 0.0
      %2399 = vmatprep.subr.mxu0 0.0
      %2400 = vmatpush1.msra.mxu0 0.0
      %2401 = vmatprep.subr.mxu0 0.0
      %2402 = vmatpush1.msra.mxu0 0.0
      %2403 = vmatprep.subr.mxu0 0.0
      %2404 = vmatpush1.msra.mxu0 0.0
      %2405 = vmatprep.subr.mxu0 0.0
      %2406 = vmatpush1.msra.mxu0 0.0
      %2407 = vmatprep.subr.mxu0 0.0
      %2408 = vmatpush1.msra.mxu0 0.0
      %2409 = vmatprep.mubr.f32.mxu0 0.0
      %2410 = vmatmul.mubr.f32.gmra.mrb[0].mxu0 %v537
      %v2411 = vpop.f32.mrb[0].mxu0
      %v2412 = vadd.f32 %v458, %v2411
      %v2413 = vpop.f32.mrb[0].mxu0
      %v2414 = vadd.f32 %v458, %v2413
      %2415 = vmatprep.mubr.f32.mxu0 0.0
      %2416 = vmatmul.mubr.f32.gmra.mrb[0].mxu0 %v540
      %v2417 = vpop.f32.mrb[0].mxu0
      %v2418 = vadd.f32 %v463, %v2417
      %v2419 = vpop.f32.mrb[0].mxu0
      %v2420 = vadd.f32 %v463, %v2419
      %2421 = vmatprep.mubr.f32.mxu0 0.0
      %2422 = vmatmul.mubr.f32.gmra.mrb[0].mxu0 %v543
      %v2423 = vpop.f32.mrb[0].mxu0
      %v2424 = vadd.f32 %v468, %v2423
      %v2425 = vpop.f32.mrb[0].mxu0
      %v2426 = vadd.f32 %v468, %v2425
      %2427 = vmatprep.mubr.f32.mxu0 0.0
      %2428 = vmatmul.mubr.f32.gmra.mrb[0].mxu0 %v546
      %v2429 = vpop.f32.mrb[0].mxu0
      %v2430 = vadd.f32 %v473, %v2429
      %v2431 = vpop.f32.mrb[0].mxu0
      %v2432 = vadd.f32 %v473, %v2431
      %2433 = vmatprep.mubr.f32.mxu0 0.0
      %2434 = vmatmul.mubr.f32.gmra.mrb[0].mxu0 %v549
      %v2435 = vpop.f32.mrb[0].mxu0
      %v2436 = vadd.f32 %v478, %v2435
      %v2437 = vpop.f32.mrb[0].mxu0
      %v2438 = vadd.f32 %v478, %v2437
      %2439 = vmatprep.mubr.f32.mxu0 0.0
      %2440 = vmatmul.mubr.f32.gmra.mrb[0].mxu0 %v552
      %v2441 = vpop.f32.mrb[0].mxu0
      %v2442 = vadd.f32 %v483, %v2441
      %v2443 = vpop.f32.mrb[0].mxu0
      %v2444 = vadd.f32 %v483, %v2443
      %2445 = vmatprep.mubr.f32.mxu0 0.0
      %2446 = vmatmul.mubr.f32.gmra.mrb[0].mxu0 %v555
      %v2447 = vpop.f32.mrb[0].mxu0
      %v2448 = vadd.f32 %v488, %v2447
      %v2449 = vpop.f32.mrb[0].mxu0
      %v2450 = vadd.f32 %v488, %v2449
      %2451 = vmatprep.mubr.f32.mxu0 0.0
      %2452 = vmatmul.mubr.f32.gmra.mrb[0].mxu0 %v558
      %v2453 = vpop.f32.mrb[0].mxu0
      %v2454 = vadd.f32 %v493, %v2453
      %v2455 = vpop.f32.mrb[0].mxu0
      %v2456 = vadd.f32 %v493, %v2455
      %2457 = vmatprep.mubr.f32.mxu0 0.0
      %2458 = vmatmul.mubr.f32.gmra.mrb[0].mxu0 %v561
      %v2459 = vpop.f32.mrb[0].mxu0
      %v2460 = vadd.f32 %v498, %v2459
      %v2461 = vpop.f32.mrb[0].mxu0
      %v2462 = vadd.f32 %v498, %v2461
      %2463 = vmatprep.mubr.f32.mxu0 0.0
      %2464 = vmatmul.mubr.f32.gmra.mrb[0].mxu0 %v564
      %v2465 = vpop.f32.mrb[0].mxu0
      %v2466 = vadd.f32 %v503, %v2465
      %v2467 = vpop.f32.mrb[0].mxu0
      %v2468 = vadd.f32 %v503, %v2467
      %2469 = vmatprep.mubr.f32.mxu0 0.0
      %2470 = vmatmul.mubr.f32.gmra.mrb[0].mxu0 %v567
      %v2471 = vpop.f32.mrb[0].mxu0
      %v2472 = vadd.f32 %v508, %v2471
      %v2473 = vpop.f32.mrb[0].mxu0
      %v2474 = vadd.f32 %v508, %v2473
      %2475 = vmatprep.mubr.f32.mxu0 0.0
      %2476 = vmatmul.mubr.f32.gmra.mrb[0].mxu0 %v570
      %v2477 = vpop.f32.mrb[0].mxu0
      %v2478 = vadd.f32 %v513, %v2477
      %v2479 = vpop.f32.mrb[0].mxu0
      %v2480 = vadd.f32 %v513, %v2479
      %2481 = vmatprep.mubr.f32.mxu0 0.0
      %2482 = vmatmul.mubr.f32.gmra.mrb[0].mxu0 %v573
      %v2483 = vpop.f32.mrb[0].mxu0
      %v2484 = vadd.f32 %v518, %v2483
      %v2485 = vpop.f32.mrb[0].mxu0
      %v2486 = vadd.f32 %v518, %v2485
      %2487 = vmatprep.mubr.f32.mxu0 0.0
      %2488 = vmatmul.mubr.f32.gmra.mrb[0].mxu0 %v576
      %v2489 = vpop.f32.mrb[0].mxu0
      %v2490 = vadd.f32 %v523, %v2489
      %v2491 = vpop.f32.mrb[0].mxu0
      %v2492 = vadd.f32 %v523, %v2491
      %2493 = vmatprep.mubr.f32.mxu0 0.0
      %2494 = vmatmul.mubr.f32.gmra.mrb[0].mxu0 %v579
      %v2495 = vpop.f32.mrb[0].mxu0
      %v2496 = vadd.f32 %v528, %v2495
      %v2497 = vpop.f32.mrb[0].mxu0
      %v2498 = vadd.f32 %v528, %v2497
      %2499 = vmatprep.mubr.f32.mxu0 0.0
      %2500 = vmatmul.mubr.f32.gmra.mrb[0].mxu0 %v582
      %v2501 = vpop.f32.mrb[0].mxu0
      %v2502 = vadd.f32 %v533, %v2501
      %v2503 = vpop.f32.mrb[0].mxu0
      %v2504 = vadd.f32 %v533, %v2503
      %2505 = vdwg.mxu0
      %2506 = vmatprep.subr.mxu0 %v246
      %2507 = vmatpush1.msra.mxu0 %v245
      %2508 = vmatprep.subr.mxu0 %v296
      %2509 = vmatpush1.msra.mxu0 %v295
      %2510 = vmatprep.subr.mxu0 %v346
      %2511 = vmatpush1.msra.mxu0 %v345
      %2512 = vmatprep.subr.mxu0 %v655
      %2513 = vmatpush1.msra.mxu0 %v652
      %2514 = vmatprep.subr.mxu0 0.0
      %2515 = vmatpush1.msra.mxu0 0.0
      %2516 = vmatprep.subr.mxu0 0.0
      %2517 = vmatpush1.msra.mxu0 0.0
      %2518 = vmatprep.subr.mxu0 0.0
      %2519 = vmatpush1.msra.mxu0 0.0
      %2520 = vmatprep.subr.mxu0 0.0
      %2521 = vmatpush1.msra.mxu0 0.0
      %2522 = vmatprep.subr.mxu0 0.0
      %2523 = vmatpush1.msra.mxu0 0.0
      %2524 = vmatprep.subr.mxu0 0.0
      %2525 = vmatpush1.msra.mxu0 0.0
      %2526 = vmatprep.subr.mxu0 0.0
      %2527 = vmatpush1.msra.mxu0 0.0
      %2528 = vmatprep.subr.mxu0 0.0
      %2529 = vmatpush1.msra.mxu0 0.0
      %2530 = vmatprep.subr.mxu0 0.0
      %2531 = vmatpush1.msra.mxu0 0.0
      %2532 = vmatprep.subr.mxu0 0.0
      %2533 = vmatpush1.msra.mxu0 0.0
      %2534 = vmatprep.subr.mxu0 0.0
      %2535 = vmatpush1.msra.mxu0 0.0
      %2536 = vmatprep.subr.mxu0 0.0
      %2537 = vmatpush1.msra.mxu0 0.0
      %2538 = vmatprep.subr.mxu0 0.0
      %2539 = vmatpush1.msra.mxu0 0.0
      %2540 = vmatprep.subr.mxu0 0.0
      %2541 = vmatpush1.msra.mxu0 0.0
      %2542 = vmatprep.subr.mxu0 0.0
      %2543 = vmatpush1.msra.mxu0 0.0
      %2544 = vmatprep.subr.mxu0 0.0
      %2545 = vmatpush1.msra.mxu0 0.0
      %2546 = vmatprep.subr.mxu0 0.0
      %2547 = vmatpush1.msra.mxu0 0.0
      %2548 = vmatprep.subr.mxu0 0.0
      %2549 = vmatpush1.msra.mxu0 0.0
      %2550 = vmatprep.subr.mxu0 0.0
      %2551 = vmatpush1.msra.mxu0 0.0
      %2552 = vmatprep.subr.mxu0 0.0
      %2553 = vmatpush1.msra.mxu0 0.0
      %2554 = vmatprep.subr.mxu0 0.0
      %2555 = vmatpush1.msra.mxu0 0.0
      %2556 = vmatprep.subr.mxu0 0.0
      %2557 = vmatpush1.msra.mxu0 0.0
      %2558 = vmatprep.subr.mxu0 0.0
      %2559 = vmatpush1.msra.mxu0 0.0
      %2560 = vmatprep.subr.mxu0 0.0
      %2561 = vmatpush1.msra.mxu0 0.0
      %2562 = vmatprep.subr.mxu0 0.0
      %2563 = vmatpush1.msra.mxu0 0.0
      %2564 = vmatprep.subr.mxu0 0.0
      %2565 = vmatpush1.msra.mxu0 0.0
      %2566 = vmatprep.subr.mxu0 0.0
      %2567 = vmatpush1.msra.mxu0 0.0
      %2568 = vmatprep.subr.mxu0 0.0
      %2569 = vmatpush1.msra.mxu0 0.0
      %2570 = vmatprep.mubr.f32.mxu0 0.0
      %2571 = vmatmul.mubr.f32.gmra.mrb[0].mxu0 %v537
      %v2572 = vpop.f32.mrb[0].mxu0
      %v2573 = vadd.f32 %v458, %v2572
      %v2574 = vpop.f32.mrb[0].mxu0
      %v2575 = vadd.f32 %v458, %v2574
      %2576 = vmatprep.mubr.f32.mxu0 0.0
      %2577 = vmatmul.mubr.f32.gmra.mrb[0].mxu0 %v540
      %v2578 = vpop.f32.mrb[0].mxu0
      %v2579 = vadd.f32 %v463, %v2578
      %v2580 = vpop.f32.mrb[0].mxu0
      %v2581 = vadd.f32 %v463, %v2580
      %2582 = vmatprep.mubr.f32.mxu0 0.0
      %2583 = vmatmul.mubr.f32.gmra.mrb[0].mxu0 %v543
      %v2584 = vpop.f32.mrb[0].mxu0
      %v2585 = vadd.f32 %v468, %v2584
      %v2586 = vpop.f32.mrb[0].mxu0
      %v2587 = vadd.f32 %v468, %v2586
      %2588 = vmatprep.mubr.f32.mxu0 0.0
      %2589 = vmatmul.mubr.f32.gmra.mrb[0].mxu0 %v546
      %v2590 = vpop.f32.mrb[0].mxu0
      %v2591 = vadd.f32 %v473, %v2590
      %v2592 = vpop.f32.mrb[0].mxu0
      %v2593 = vadd.f32 %v473, %v2592
      %2594 = vmatprep.mubr.f32.mxu0 0.0
      %2595 = vmatmul.mubr.f32.gmra.mrb[0].mxu0 %v549
      %v2596 = vpop.f32.mrb[0].mxu0
      %v2597 = vadd.f32 %v478, %v2596
      %v2598 = vpop.f32.mrb[0].mxu0
      %v2599 = vadd.f32 %v478, %v2598
      %2600 = vmatprep.mubr.f32.mxu0 0.0
      %2601 = vmatmul.mubr.f32.gmra.mrb[0].mxu0 %v552
      %v2602 = vpop.f32.mrb[0].mxu0
      %v2603 = vadd.f32 %v483, %v2602
      %v2604 = vpop.f32.mrb[0].mxu0
      %v2605 = vadd.f32 %v483, %v2604
      %2606 = vmatprep.mubr.f32.mxu0 0.0
      %2607 = vmatmul.mubr.f32.gmra.mrb[0].mxu0 %v555
      %v2608 = vpop.f32.mrb[0].mxu0
      %v2609 = vadd.f32 %v488, %v2608
      %v2610 = vpop.f32.mrb[0].mxu0
      %v2611 = vadd.f32 %v488, %v2610
      %2612 = vmatprep.mubr.f32.mxu0 0.0
      %2613 = vmatmul.mubr.f32.gmra.mrb[0].mxu0 %v558
      %v2614 = vpop.f32.mrb[0].mxu0
      %v2615 = vadd.f32 %v493, %v2614
      %v2616 = vpop.f32.mrb[0].mxu0
      %v2617 = vadd.f32 %v493, %v2616
      %2618 = vmatprep.mubr.f32.mxu0 0.0
      %2619 = vmatmul.mubr.f32.gmra.mrb[0].mxu0 %v561
      %v2620 = vpop.f32.mrb[0].mxu0
      %v2621 = vadd.f32 %v498, %v2620
      %v2622 = vpop.f32.mrb[0].mxu0
      %v2623 = vadd.f32 %v498, %v2622
      %2624 = vmatprep.mubr.f32.mxu0 0.0
      %2625 = vmatmul.mubr.f32.gmra.mrb[0].mxu0 %v564
      %v2626 = vpop.f32.mrb[0].mxu0
      %v2627 = vadd.f32 %v503, %v2626
      %v2628 = vpop.f32.mrb[0].mxu0
      %v2629 = vadd.f32 %v503, %v2628
      %2630 = vmatprep.mubr.f32.mxu0 0.0
      %2631 = vmatmul.mubr.f32.gmra.mrb[0].mxu0 %v567
      %v2632 = vpop.f32.mrb[0].mxu0
      %v2633 = vadd.f32 %v508, %v2632
      %v2634 = vpop.f32.mrb[0].mxu0
      %v2635 = vadd.f32 %v508, %v2634
      %2636 = vmatprep.mubr.f32.mxu0 0.0
      %2637 = vmatmul.mubr.f32.gmra.mrb[0].mxu0 %v570
      %v2638 = vpop.f32.mrb[0].mxu0
      %v2639 = vadd.f32 %v513, %v2638
      %v2640 = vpop.f32.mrb[0].mxu0
      %v2641 = vadd.f32 %v513, %v2640
      %2642 = vmatprep.mubr.f32.mxu0 0.0
      %2643 = vmatmul.mubr.f32.gmra.mrb[0].mxu0 %v573
      %v2644 = vpop.f32.mrb[0].mxu0
      %v2645 = vadd.f32 %v518, %v2644
      %v2646 = vpop.f32.mrb[0].mxu0
      %v2647 = vadd.f32 %v518, %v2646
      %2648 = vmatprep.mubr.f32.mxu0 0.0
      %2649 = vmatmul.mubr.f32.gmra.mrb[0].mxu0 %v576
      %v2650 = vpop.f32.mrb[0].mxu0
      %v2651 = vadd.f32 %v523, %v2650
      %v2652 = vpop.f32.mrb[0].mxu0
      %v2653 = vadd.f32 %v523, %v2652
      %2654 = vmatprep.mubr.f32.mxu0 0.0
      %2655 = vmatmul.mubr.f32.gmra.mrb[0].mxu0 %v579
      %v2656 = vpop.f32.mrb[0].mxu0
      %v2657 = vadd.f32 %v528, %v2656
      %v2658 = vpop.f32.mrb[0].mxu0
      %v2659 = vadd.f32 %v528, %v2658
      %2660 = vmatprep.mubr.f32.mxu0 0.0
      %2661 = vmatmul.mubr.f32.gmra.mrb[0].mxu0 %v582
      %v2662 = vpop.f32.mrb[0].mxu0
      %v2663 = vadd.f32 %v533, %v2662
      %v2664 = vpop.f32.mrb[0].mxu0
      %v2665 = vadd.f32 %v533, %v2664
      %2666 = vdwg.mxu0
      %2667 = vmatprep.subr.mxu0 %v248
      %2668 = vmatpush1.msra.mxu0 %v247
      %2669 = vmatprep.subr.mxu0 %v298
      %2670 = vmatpush1.msra.mxu0 %v297
      %2671 = vmatprep.subr.mxu0 %v348
      %2672 = vmatpush1.msra.mxu0 %v347
      %2673 = vmatprep.subr.mxu0 %v661
      %2674 = vmatpush1.msra.mxu0 %v658
      %2675 = vmatprep.subr.mxu0 0.0
      %2676 = vmatpush1.msra.mxu0 0.0
      %2677 = vmatprep.subr.mxu0 0.0
      %2678 = vmatpush1.msra.mxu0 0.0
      %2679 = vmatprep.subr.mxu0 0.0
      %2680 = vmatpush1.msra.mxu0 0.0
      %2681 = vmatprep.subr.mxu0 0.0
      %2682 = vmatpush1.msra.mxu0 0.0
      %2683 = vmatprep.subr.mxu0 0.0
      %2684 = vmatpush1.msra.mxu0 0.0
      %2685 = vmatprep.subr.mxu0 0.0
      %2686 = vmatpush1.msra.mxu0 0.0
      %2687 = vmatprep.subr.mxu0 0.0
      %2688 = vmatpush1.msra.mxu0 0.0
      %2689 = vmatprep.subr.mxu0 0.0
      %2690 = vmatpush1.msra.mxu0 0.0
      %2691 = vmatprep.subr.mxu0 0.0
      %2692 = vmatpush1.msra.mxu0 0.0
      %2693 = vmatprep.subr.mxu0 0.0
      %2694 = vmatpush1.msra.mxu0 0.0
      %2695 = vmatprep.subr.mxu0 0.0
      %2696 = vmatpush1.msra.mxu0 0.0
      %2697 = vmatprep.subr.mxu0 0.0
      %2698 = vmatpush1.msra.mxu0 0.0
      %2699 = vmatprep.subr.mxu0 0.0
      %2700 = vmatpush1.msra.mxu0 0.0
      %2701 = vmatprep.subr.mxu0 0.0
      %2702 = vmatpush1.msra.mxu0 0.0
      %2703 = vmatprep.subr.mxu0 0.0
      %2704 = vmatpush1.msra.mxu0 0.0
      %2705 = vmatprep.subr.mxu0 0.0
      %2706 = vmatpush1.msra.mxu0 0.0
      %2707 = vmatprep.subr.mxu0 0.0
      %2708 = vmatpush1.msra.mxu0 0.0
      %2709 = vmatprep.subr.mxu0 0.0
      %2710 = vmatpush1.msra.mxu0 0.0
      %2711 = vmatprep.subr.mxu0 0.0
      %2712 = vmatpush1.msra.mxu0 0.0
      %2713 = vmatprep.subr.mxu0 0.0
      %2714 = vmatpush1.msra.mxu0 0.0
      %2715 = vmatprep.subr.mxu0 0.0
      %2716 = vmatpush1.msra.mxu0 0.0
      %2717 = vmatprep.subr.mxu0 0.0
      %2718 = vmatpush1.msra.mxu0 0.0
      %2719 = vmatprep.subr.mxu0 0.0
      %2720 = vmatpush1.msra.mxu0 0.0
      %2721 = vmatprep.subr.mxu0 0.0
      %2722 = vmatpush1.msra.mxu0 0.0
      %2723 = vmatprep.subr.mxu0 0.0
      %2724 = vmatpush1.msra.mxu0 0.0
      %2725 = vmatprep.subr.mxu0 0.0
      %2726 = vmatpush1.msra.mxu0 0.0
      %2727 = vmatprep.subr.mxu0 0.0
      %2728 = vmatpush1.msra.mxu0 0.0
      %2729 = vmatprep.subr.mxu0 0.0
      %2730 = vmatpush1.msra.mxu0 0.0
      %2731 = vmatprep.mubr.f32.mxu0 0.0
      %2732 = vmatmul.mubr.f32.gmra.mrb[0].mxu0 %v537
      %v2733 = vpop.f32.mrb[0].mxu0
      %v2734 = vadd.f32 %v458, %v2733
      %v2735 = vpop.f32.mrb[0].mxu0
      %v2736 = vadd.f32 %v458, %v2735
      %2737 = vmatprep.mubr.f32.mxu0 0.0
      %2738 = vmatmul.mubr.f32.gmra.mrb[0].mxu0 %v540
      %v2739 = vpop.f32.mrb[0].mxu0
      %v2740 = vadd.f32 %v463, %v2739
      %v2741 = vpop.f32.mrb[0].mxu0
      %v2742 = vadd.f32 %v463, %v2741
      %2743 = vmatprep.mubr.f32.mxu0 0.0
      %2744 = vmatmul.mubr.f32.gmra.mrb[0].mxu0 %v543
      %v2745 = vpop.f32.mrb[0].mxu0
      %v2746 = vadd.f32 %v468, %v2745
      %v2747 = vpop.f32.mrb[0].mxu0
      %v2748 = vadd.f32 %v468, %v2747
      %2749 = vmatprep.mubr.f32.mxu0 0.0
      %2750 = vmatmul.mubr.f32.gmra.mrb[0].mxu0 %v546
      %v2751 = vpop.f32.mrb[0].mxu0
      %v2752 = vadd.f32 %v473, %v2751
      %v2753 = vpop.f32.mrb[0].mxu0
      %v2754 = vadd.f32 %v473, %v2753
      %2755 = vmatprep.mubr.f32.mxu0 0.0
      %2756 = vmatmul.mubr.f32.gmra.mrb[0].mxu0 %v549
      %v2757 = vpop.f32.mrb[0].mxu0
      %v2758 = vadd.f32 %v478, %v2757
      %v2759 = vpop.f32.mrb[0].mxu0
      %v2760 = vadd.f32 %v478, %v2759
      %2761 = vmatprep.mubr.f32.mxu0 0.0
      %2762 = vmatmul.mubr.f32.gmra.mrb[0].mxu0 %v552
      %v2763 = vpop.f32.mrb[0].mxu0
      %v2764 = vadd.f32 %v483, %v2763
      %v2765 = vpop.f32.mrb[0].mxu0
      %v2766 = vadd.f32 %v483, %v2765
      %2767 = vmatprep.mubr.f32.mxu0 0.0
      %2768 = vmatmul.mubr.f32.gmra.mrb[0].mxu0 %v555
      %v2769 = vpop.f32.mrb[0].mxu0
      %v2770 = vadd.f32 %v488, %v2769
      %v2771 = vpop.f32.mrb[0].mxu0
      %v2772 = vadd.f32 %v488, %v2771
      %2773 = vmatprep.mubr.f32.mxu0 0.0
      %2774 = vmatmul.mubr.f32.gmra.mrb[0].mxu0 %v558
      %v2775 = vpop.f32.mrb[0].mxu0
      %v2776 = vadd.f32 %v493, %v2775
      %v2777 = vpop.f32.mrb[0].mxu0
      %v2778 = vadd.f32 %v493, %v2777
      %2779 = vmatprep.mubr.f32.mxu0 0.0
      %2780 = vmatmul.mubr.f32.gmra.mrb[0].mxu0 %v561
      %v2781 = vpop.f32.mrb[0].mxu0
      %v2782 = vadd.f32 %v498, %v2781
      %v2783 = vpop.f32.mrb[0].mxu0
      %v2784 = vadd.f32 %v498, %v2783
      %2785 = vmatprep.mubr.f32.mxu0 0.0
      %2786 = vmatmul.mubr.f32.gmra.mrb[0].mxu0 %v564
      %v2787 = vpop.f32.mrb[0].mxu0
      %v2788 = vadd.f32 %v503, %v2787
      %v2789 = vpop.f32.mrb[0].mxu0
      %v2790 = vadd.f32 %v503, %v2789
      %2791 = vmatprep.mubr.f32.mxu0 0.0
      %2792 = vmatmul.mubr.f32.gmra.mrb[0].mxu0 %v567
      %v2793 = vpop.f32.mrb[0].mxu0
      %v2794 = vadd.f32 %v508, %v2793
      %v2795 = vpop.f32.mrb[0].mxu0
      %v2796 = vadd.f32 %v508, %v2795
      %2797 = vmatprep.mubr.f32.mxu0 0.0
      %2798 = vmatmul.mubr.f32.gmra.mrb[0].mxu0 %v570
      %v2799 = vpop.f32.mrb[0].mxu0
      %v2800 = vadd.f32 %v513, %v2799
      %v2801 = vpop.f32.mrb[0].mxu0
      %v2802 = vadd.f32 %v513, %v2801
      %2803 = vmatprep.mubr.f32.mxu0 0.0
      %2804 = vmatmul.mubr.f32.gmra.mrb[0].mxu0 %v573
      %v2805 = vpop.f32.mrb[0].mxu0
      %v2806 = vadd.f32 %v518, %v2805
      %v2807 = vpop.f32.mrb[0].mxu0
      %v2808 = vadd.f32 %v518, %v2807
      %2809 = vmatprep.mubr.f32.mxu0 0.0
      %2810 = vmatmul.mubr.f32.gmra.mrb[0].mxu0 %v576
      %v2811 = vpop.f32.mrb[0].mxu0
      %v2812 = vadd.f32 %v523, %v2811
      %v2813 = vpop.f32.mrb[0].mxu0
      %v2814 = vadd.f32 %v523, %v2813
      %2815 = vmatprep.mubr.f32.mxu0 0.0
      %2816 = vmatmul.mubr.f32.gmra.mrb[0].mxu0 %v579
      %v2817 = vpop.f32.mrb[0].mxu0
      %v2818 = vadd.f32 %v528, %v2817
      %v2819 = vpop.f32.mrb[0].mxu0
      %v2820 = vadd.f32 %v528, %v2819
      %2821 = vmatprep.mubr.f32.mxu0 0.0
      %2822 = vmatmul.mubr.f32.gmra.mrb[0].mxu0 %v582
      %v2823 = vpop.f32.mrb[0].mxu0
      %v2824 = vadd.f32 %v533, %v2823
      %v2825 = vpop.f32.mrb[0].mxu0
      %v2826 = vadd.f32 %v533, %v2825
      %2827 = vdwg.mxu0
      %2828 = vmatprep.subr.mxu0 %v250
      %2829 = vmatpush1.msra.mxu0 %v249
      %2830 = vmatprep.subr.mxu0 %v300
      %2831 = vmatpush1.msra.mxu0 %v299
      %2832 = vmatprep.subr.mxu0 %v350
      %2833 = vmatpush1.msra.mxu0 %v349
      %2834 = vmatprep.subr.mxu0 %v667
      %2835 = vmatpush1.msra.mxu0 %v664
      %2836 = vmatprep.subr.mxu0 0.0
      %2837 = vmatpush1.msra.mxu0 0.0
      %2838 = vmatprep.subr.mxu0 0.0
      %2839 = vmatpush1.msra.mxu0 0.0
      %2840 = vmatprep.subr.mxu0 0.0
      %2841 = vmatpush1.msra.mxu0 0.0
      %2842 = vmatprep.subr.mxu0 0.0
      %2843 = vmatpush1.msra.mxu0 0.0
      %2844 = vmatprep.subr.mxu0 0.0
      %2845 = vmatpush1.msra.mxu0 0.0
      %2846 = vmatprep.subr.mxu0 0.0
      %2847 = vmatpush1.msra.mxu0 0.0
      %2848 = vmatprep.subr.mxu0 0.0
      %2849 = vmatpush1.msra.mxu0 0.0
      %2850 = vmatprep.subr.mxu0 0.0
      %2851 = vmatpush1.msra.mxu0 0.0
      %2852 = vmatprep.subr.mxu0 0.0
      %2853 = vmatpush1.msra.mxu0 0.0
      %2854 = vmatprep.subr.mxu0 0.0
      %2855 = vmatpush1.msra.mxu0 0.0
      %2856 = vmatprep.subr.mxu0 0.0
      %2857 = vmatpush1.msra.mxu0 0.0
      %2858 = vmatprep.subr.mxu0 0.0
      %2859 = vmatpush1.msra.mxu0 0.0
      %2860 = vmatprep.subr.mxu0 0.0
      %2861 = vmatpush1.msra.mxu0 0.0
      %2862 = vmatprep.subr.mxu0 0.0
      %2863 = vmatpush1.msra.mxu0 0.0
      %2864 = vmatprep.subr.mxu0 0.0
      %2865 = vmatpush1.msra.mxu0 0.0
      %2866 = vmatprep.subr.mxu0 0.0
      %2867 = vmatpush1.msra.mxu0 0.0
      %2868 = vmatprep.subr.mxu0 0.0
      %2869 = vmatpush1.msra.mxu0 0.0
      %2870 = vmatprep.subr.mxu0 0.0
      %2871 = vmatpush1.msra.mxu0 0.0
      %2872 = vmatprep.subr.mxu0 0.0
      %2873 = vmatpush1.msra.mxu0 0.0
      %2874 = vmatprep.subr.mxu0 0.0
      %2875 = vmatpush1.msra.mxu0 0.0
      %2876 = vmatprep.subr.mxu0 0.0
      %2877 = vmatpush1.msra.mxu0 0.0
      %2878 = vmatprep.subr.mxu0 0.0
      %2879 = vmatpush1.msra.mxu0 0.0
      %2880 = vmatprep.subr.mxu0 0.0
      %2881 = vmatpush1.msra.mxu0 0.0
      %2882 = vmatprep.subr.mxu0 0.0
      %2883 = vmatpush1.msra.mxu0 0.0
      %2884 = vmatprep.subr.mxu0 0.0
      %2885 = vmatpush1.msra.mxu0 0.0
      %2886 = vmatprep.subr.mxu0 0.0
      %2887 = vmatpush1.msra.mxu0 0.0
      %2888 = vmatprep.subr.mxu0 0.0
      %2889 = vmatpush1.msra.mxu0 0.0
      %2890 = vmatprep.subr.mxu0 0.0
      %2891 = vmatpush1.msra.mxu0 0.0
      %2892 = vmatprep.mubr.f32.mxu0 0.0
      %2893 = vmatmul.mubr.f32.gmra.mrb[0].mxu0 %v537
      %v2894 = vpop.f32.mrb[0].mxu0
      %v2895 = vadd.f32 %v458, %v2894
      %v2896 = vpop.f32.mrb[0].mxu0
      %v2897 = vadd.f32 %v458, %v2896
      %2898 = vmatprep.mubr.f32.mxu0 0.0
      %2899 = vmatmul.mubr.f32.gmra.mrb[0].mxu0 %v540
      %v2900 = vpop.f32.mrb[0].mxu0
      %v2901 = vadd.f32 %v463, %v2900
      %v2902 = vpop.f32.mrb[0].mxu0
      %v2903 = vadd.f32 %v463, %v2902
      %2904 = vmatprep.mubr.f32.mxu0 0.0
      %2905 = vmatmul.mubr.f32.gmra.mrb[0].mxu0 %v543
      %v2906 = vpop.f32.mrb[0].mxu0
      %v2907 = vadd.f32 %v468, %v2906
      %v2908 = vpop.f32.mrb[0].mxu0
      %v2909 = vadd.f32 %v468, %v2908
      %2910 = vmatprep.mubr.f32.mxu0 0.0
      %2911 = vmatmul.mubr.f32.gmra.mrb[0].mxu0 %v546
      %v2912 = vpop.f32.mrb[0].mxu0
      %v2913 = vadd.f32 %v473, %v2912
      %v2914 = vpop.f32.mrb[0].mxu0
      %v2915 = vadd.f32 %v473, %v2914
      %2916 = vmatprep.mubr.f32.mxu0 0.0
      %2917 = vmatmul.mubr.f32.gmra.mrb[0].mxu0 %v549
      %v2918 = vpop.f32.mrb[0].mxu0
      %v2919 = vadd.f32 %v478, %v2918
      %v2920 = vpop.f32.mrb[0].mxu0
      %v2921 = vadd.f32 %v478, %v2920
      %2922 = vmatprep.mubr.f32.mxu0 0.0
      %2923 = vmatmul.mubr.f32.gmra.mrb[0].mxu0 %v552
      %v2924 = vpop.f32.mrb[0].mxu0
      %v2925 = vadd.f32 %v483, %v2924
      %v2926 = vpop.f32.mrb[0].mxu0
      %v2927 = vadd.f32 %v483, %v2926
      %2928 = vmatprep.mubr.f32.mxu0 0.0
      %2929 = vmatmul.mubr.f32.gmra.mrb[0].mxu0 %v555
      %v2930 = vpop.f32.mrb[0].mxu0
      %v2931 = vadd.f32 %v488, %v2930
      %v2932 = vpop.f32.mrb[0].mxu0
      %v2933 = vadd.f32 %v488, %v2932
      %2934 = vmatprep.mubr.f32.mxu0 0.0
      %2935 = vmatmul.mubr.f32.gmra.mrb[0].mxu0 %v558
      %v2936 = vpop.f32.mrb[0].mxu0
      %v2937 = vadd.f32 %v493, %v2936
      %v2938 = vpop.f32.mrb[0].mxu0
      %v2939 = vadd.f32 %v493, %v2938
      %2940 = vmatprep.mubr.f32.mxu0 0.0
      %2941 = vmatmul.mubr.f32.gmra.mrb[0].mxu0 %v561
      %v2942 = vpop.f32.mrb[0].mxu0
      %v2943 = vadd.f32 %v498, %v2942
      %v2944 = vpop.f32.mrb[0].mxu0
      %v2945 = vadd.f32 %v498, %v2944
      %2946 = vmatprep.mubr.f32.mxu0 0.0
      %2947 = vmatmul.mubr.f32.gmra.mrb[0].mxu0 %v564
      %v2948 = vpop.f32.mrb[0].mxu0
      %v2949 = vadd.f32 %v503, %v2948
      %v2950 = vpop.f32.mrb[0].mxu0
      %v2951 = vadd.f32 %v503, %v2950
      %2952 = vmatprep.mubr.f32.mxu0 0.0
      %2953 = vmatmul.mubr.f32.gmra.mrb[0].mxu0 %v567
      %v2954 = vpop.f32.mrb[0].mxu0
      %v2955 = vadd.f32 %v508, %v2954
      %v2956 = vpop.f32.mrb[0].mxu0
      %v2957 = vadd.f32 %v508, %v2956
      %2958 = vmatprep.mubr.f32.mxu0 0.0
      %2959 = vmatmul.mubr.f32.gmra.mrb[0].mxu0 %v570
      %v2960 = vpop.f32.mrb[0].mxu0
      %v2961 = vadd.f32 %v513, %v2960
      %v2962 = vpop.f32.mrb[0].mxu0
      %v2963 = vadd.f32 %v513, %v2962
      %2964 = vmatprep.mubr.f32.mxu0 0.0
      %2965 = vmatmul.mubr.f32.gmra.mrb[0].mxu0 %v573
      %v2966 = vpop.f32.mrb[0].mxu0
      %v2967 = vadd.f32 %v518, %v2966
      %v2968 = vpop.f32.mrb[0].mxu0
      %v2969 = vadd.f32 %v518, %v2968
      %2970 = vmatprep.mubr.f32.mxu0 0.0
      %2971 = vmatmul.mubr.f32.gmra.mrb[0].mxu0 %v576
      %v2972 = vpop.f32.mrb[0].mxu0
      %v2973 = vadd.f32 %v523, %v2972
      %v2974 = vpop.f32.mrb[0].mxu0
      %v2975 = vadd.f32 %v523, %v2974
      %2976 = vmatprep.mubr.f32.mxu0 0.0
      %2977 = vmatmul.mubr.f32.gmra.mrb[0].mxu0 %v579
      %v2978 = vpop.f32.mrb[0].mxu0
      %v2979 = vadd.f32 %v528, %v2978
      %v2980 = vpop.f32.mrb[0].mxu0
      %v2981 = vadd.f32 %v528, %v2980
      %2982 = vmatprep.mubr.f32.mxu0 0.0
      %2983 = vmatmul.mubr.f32.gmra.mrb[0].mxu0 %v582
      %v2984 = vpop.f32.mrb[0].mxu0
      %v2985 = vadd.f32 %v533, %v2984
      %v2986 = vpop.f32.mrb[0].mxu0
      %v2987 = vadd.f32 %v533, %v2986
      %2988 = vdwg.mxu0
      %2989 = vmatprep.subr.mxu0 %v252
      %2990 = vmatpush1.msra.mxu0 %v251
      %2991 = vmatprep.subr.mxu0 %v302
      %2992 = vmatpush1.msra.mxu0 %v301
      %2993 = vmatprep.subr.mxu0 %v352
      %2994 = vmatpush1.msra.mxu0 %v351
      %2995 = vmatprep.subr.mxu0 %v673
      %2996 = vmatpush1.msra.mxu0 %v670
      %2997 = vmatprep.subr.mxu0 0.0
      %2998 = vmatpush1.msra.mxu0 0.0
      %2999 = vmatprep.subr.mxu0 0.0
      %3000 = vmatpush1.msra.mxu0 0.0
      %3001 = vmatprep.subr.mxu0 0.0
      %3002 = vmatpush1.msra.mxu0 0.0
      %3003 = vmatprep.subr.mxu0 0.0
      %3004 = vmatpush1.msra.mxu0 0.0
      %3005 = vmatprep.subr.mxu0 0.0
      %3006 = vmatpush1.msra.mxu0 0.0
      %3007 = vmatprep.subr.mxu0 0.0
      %3008 = vmatpush1.msra.mxu0 0.0
      %3009 = vmatprep.subr.mxu0 0.0
      %3010 = vmatpush1.msra.mxu0 0.0
      %3011 = vmatprep.subr.mxu0 0.0
      %3012 = vmatpush1.msra.mxu0 0.0
      %3013 = vmatprep.subr.mxu0 0.0
      %3014 = vmatpush1.msra.mxu0 0.0
      %3015 = vmatprep.subr.mxu0 0.0
      %3016 = vmatpush1.msra.mxu0 0.0
      %3017 = vmatprep.subr.mxu0 0.0
      %3018 = vmatpush1.msra.mxu0 0.0
      %3019 = vmatprep.subr.mxu0 0.0
      %3020 = vmatpush1.msra.mxu0 0.0
      %3021 = vmatprep.subr.mxu0 0.0
      %3022 = vmatpush1.msra.mxu0 0.0
      %3023 = vmatprep.subr.mxu0 0.0
      %3024 = vmatpush1.msra.mxu0 0.0
      %3025 = vmatprep.subr.mxu0 0.0
      %3026 = vmatpush1.msra.mxu0 0.0
      %3027 = vmatprep.subr.mxu0 0.0
      %3028 = vmatpush1.msra.mxu0 0.0
      %3029 = vmatprep.subr.mxu0 0.0
      %3030 = vmatpush1.msra.mxu0 0.0
      %3031 = vmatprep.subr.mxu0 0.0
      %3032 = vmatpush1.msra.mxu0 0.0
      %3033 = vmatprep.subr.mxu0 0.0
      %3034 = vmatpush1.msra.mxu0 0.0
      %3035 = vmatprep.subr.mxu0 0.0
      %3036 = vmatpush1.msra.mxu0 0.0
      %3037 = vmatprep.subr.mxu0 0.0
      %3038 = vmatpush1.msra.mxu0 0.0
      %3039 = vmatprep.subr.mxu0 0.0
      %3040 = vmatpush1.msra.mxu0 0.0
      %3041 = vmatprep.subr.mxu0 0.0
      %3042 = vmatpush1.msra.mxu0 0.0
      %3043 = vmatprep.subr.mxu0 0.0
      %3044 = vmatpush1.msra.mxu0 0.0
      %3045 = vmatprep.subr.mxu0 0.0
      %3046 = vmatpush1.msra.mxu0 0.0
      %3047 = vmatprep.subr.mxu0 0.0
      %3048 = vmatpush1.msra.mxu0 0.0
      %3049 = vmatprep.subr.mxu0 0.0
      %3050 = vmatpush1.msra.mxu0 0.0
      %3051 = vmatprep.subr.mxu0 0.0
      %3052 = vmatpush1.msra.mxu0 0.0
      %3053 = vmatprep.mubr.f32.mxu0 0.0
      %3054 = vmatmul.mubr.f32.gmra.mrb[0].mxu0 %v537
      %v3055 = vpop.f32.mrb[0].mxu0
      %v3056 = vadd.f32 %v458, %v3055
      %v3057 = vpop.f32.mrb[0].mxu0
      %v3058 = vadd.f32 %v458, %v3057
      %3059 = vmatprep.mubr.f32.mxu0 0.0
      %3060 = vmatmul.mubr.f32.gmra.mrb[0].mxu0 %v540
      %v3061 = vpop.f32.mrb[0].mxu0
      %v3062 = vadd.f32 %v463, %v3061
      %v3063 = vpop.f32.mrb[0].mxu0
      %v3064 = vadd.f32 %v463, %v3063
      %3065 = vmatprep.mubr.f32.mxu0 0.0
      %3066 = vmatmul.mubr.f32.gmra.mrb[0].mxu0 %v543
      %v3067 = vpop.f32.mrb[0].mxu0
      %v3068 = vadd.f32 %v468, %v3067
      %v3069 = vpop.f32.mrb[0].mxu0
      %v3070 = vadd.f32 %v468, %v3069
      %3071 = vmatprep.mubr.f32.mxu0 0.0
      %3072 = vmatmul.mubr.f32.gmra.mrb[0].mxu0 %v546
      %v3073 = vpop.f32.mrb[0].mxu0
      %v3074 = vadd.f32 %v473, %v3073
      %v3075 = vpop.f32.mrb[0].mxu0
      %v3076 = vadd.f32 %v473, %v3075
      %3077 = vmatprep.mubr.f32.mxu0 0.0
      %3078 = vmatmul.mubr.f32.gmra.mrb[0].mxu0 %v549
      %v3079 = vpop.f32.mrb[0].mxu0
      %v3080 = vadd.f32 %v478, %v3079
      %v3081 = vpop.f32.mrb[0].mxu0
      %v3082 = vadd.f32 %v478, %v3081
      %3083 = vmatprep.mubr.f32.mxu0 0.0
      %3084 = vmatmul.mubr.f32.gmra.mrb[0].mxu0 %v552
      %v3085 = vpop.f32.mrb[0].mxu0
      %v3086 = vadd.f32 %v483, %v3085
      %v3087 = vpop.f32.mrb[0].mxu0
      %v3088 = vadd.f32 %v483, %v3087
      %3089 = vmatprep.mubr.f32.mxu0 0.0
      %3090 = vmatmul.mubr.f32.gmra.mrb[0].mxu0 %v555
      %v3091 = vpop.f32.mrb[0].mxu0
      %v3092 = vadd.f32 %v488, %v3091
      %v3093 = vpop.f32.mrb[0].mxu0
      %v3094 = vadd.f32 %v488, %v3093
      %3095 = vmatprep.mubr.f32.mxu0 0.0
      %3096 = vmatmul.mubr.f32.gmra.mrb[0].mxu0 %v558
      %v3097 = vpop.f32.mrb[0].mxu0
      %v3098 = vadd.f32 %v493, %v3097
      %v3099 = vpop.f32.mrb[0].mxu0
      %v3100 = vadd.f32 %v493, %v3099
      %3101 = vmatprep.mubr.f32.mxu0 0.0
      %3102 = vmatmul.mubr.f32.gmra.mrb[0].mxu0 %v561
      %v3103 = vpop.f32.mrb[0].mxu0
      %v3104 = vadd.f32 %v498, %v3103
      %v3105 = vpop.f32.mrb[0].mxu0
      %v3106 = vadd.f32 %v498, %v3105
      %3107 = vmatprep.mubr.f32.mxu0 0.0
      %3108 = vmatmul.mubr.f32.gmra.mrb[0].mxu0 %v564
      %v3109 = vpop.f32.mrb[0].mxu0
      %v3110 = vadd.f32 %v503, %v3109
      %v3111 = vpop.f32.mrb[0].mxu0
      %v3112 = vadd.f32 %v503, %v3111
      %3113 = vmatprep.mubr.f32.mxu0 0.0
      %3114 = vmatmul.mubr.f32.gmra.mrb[0].mxu0 %v567
      %v3115 = vpop.f32.mrb[0].mxu0
      %v3116 = vadd.f32 %v508, %v3115
      %v3117 = vpop.f32.mrb[0].mxu0
      %v3118 = vadd.f32 %v508, %v3117
      %3119 = vmatprep.mubr.f32.mxu0 0.0
      %3120 = vmatmul.mubr.f32.gmra.mrb[0].mxu0 %v570
      %v3121 = vpop.f32.mrb[0].mxu0
      %v3122 = vadd.f32 %v513, %v3121
      %v3123 = vpop.f32.mrb[0].mxu0
      %v3124 = vadd.f32 %v513, %v3123
      %3125 = vmatprep.mubr.f32.mxu0 0.0
      %3126 = vmatmul.mubr.f32.gmra.mrb[0].mxu0 %v573
      %v3127 = vpop.f32.mrb[0].mxu0
      %v3128 = vadd.f32 %v518, %v3127
      %v3129 = vpop.f32.mrb[0].mxu0
      %v3130 = vadd.f32 %v518, %v3129
      %3131 = vmatprep.mubr.f32.mxu0 0.0
      %3132 = vmatmul.mubr.f32.gmra.mrb[0].mxu0 %v576
      %v3133 = vpop.f32.mrb[0].mxu0
      %v3134 = vadd.f32 %v523, %v3133
      %v3135 = vpop.f32.mrb[0].mxu0
      %v3136 = vadd.f32 %v523, %v3135
      %3137 = vmatprep.mubr.f32.mxu0 0.0
      %3138 = vmatmul.mubr.f32.gmra.mrb[0].mxu0 %v579
      %v3139 = vpop.f32.mrb[0].mxu0
      %v3140 = vadd.f32 %v528, %v3139
      %v3141 = vpop.f32.mrb[0].mxu0
      %v3142 = vadd.f32 %v528, %v3141
      %3143 = vmatprep.mubr.f32.mxu0 0.0
      %3144 = vmatmul.mubr.f32.gmra.mrb[0].mxu0 %v582
      %v3145 = vpop.f32.mrb[0].mxu0
      %v3146 = vadd.f32 %v533, %v3145
      %v3147 = vpop.f32.mrb[0].mxu0
      %v3148 = vadd.f32 %v533, %v3147
      %3149 = vdwg.mxu0
      %3150 = vmatprep.subr.mxu0 %v254
      %3151 = vmatpush1.msra.mxu0 %v253
      %3152 = vmatprep.subr.mxu0 %v304
      %3153 = vmatpush1.msra.mxu0 %v303
      %3154 = vmatprep.subr.mxu0 %v354
      %3155 = vmatpush1.msra.mxu0 %v353
      %3156 = vmatprep.subr.mxu0 %v679
      %3157 = vmatpush1.msra.mxu0 %v676
      %3158 = vmatprep.subr.mxu0 0.0
      %3159 = vmatpush1.msra.mxu0 0.0
      %3160 = vmatprep.subr.mxu0 0.0
      %3161 = vmatpush1.msra.mxu0 0.0
      %3162 = vmatprep.subr.mxu0 0.0
      %3163 = vmatpush1.msra.mxu0 0.0
      %3164 = vmatprep.subr.mxu0 0.0
      %3165 = vmatpush1.msra.mxu0 0.0
      %3166 = vmatprep.subr.mxu0 0.0
      %3167 = vmatpush1.msra.mxu0 0.0
      %3168 = vmatprep.subr.mxu0 0.0
      %3169 = vmatpush1.msra.mxu0 0.0
      %3170 = vmatprep.subr.mxu0 0.0
      %3171 = vmatpush1.msra.mxu0 0.0
      %3172 = vmatprep.subr.mxu0 0.0
      %3173 = vmatpush1.msra.mxu0 0.0
      %3174 = vmatprep.subr.mxu0 0.0
      %3175 = vmatpush1.msra.mxu0 0.0
      %3176 = vmatprep.subr.mxu0 0.0
      %3177 = vmatpush1.msra.mxu0 0.0
      %3178 = vmatprep.subr.mxu0 0.0
      %3179 = vmatpush1.msra.mxu0 0.0
      %3180 = vmatprep.subr.mxu0 0.0
      %3181 = vmatpush1.msra.mxu0 0.0
      %3182 = vmatprep.subr.mxu0 0.0
      %3183 = vmatpush1.msra.mxu0 0.0
      %3184 = vmatprep.subr.mxu0 0.0
      %3185 = vmatpush1.msra.mxu0 0.0
      %3186 = vmatprep.subr.mxu0 0.0
      %3187 = vmatpush1.msra.mxu0 0.0
      %3188 = vmatprep.subr.mxu0 0.0
      %3189 = vmatpush1.msra.mxu0 0.0
      %3190 = vmatprep.subr.mxu0 0.0
      %3191 = vmatpush1.msra.mxu0 0.0
      %3192 = vmatprep.subr.mxu0 0.0
      %3193 = vmatpush1.msra.mxu0 0.0
      %3194 = vmatprep.subr.mxu0 0.0
      %3195 = vmatpush1.msra.mxu0 0.0
      %3196 = vmatprep.subr.mxu0 0.0
      %3197 = vmatpush1.msra.mxu0 0.0
      %3198 = vmatprep.subr.mxu0 0.0
      %3199 = vmatpush1.msra.mxu0 0.0
      %3200 = vmatprep.subr.mxu0 0.0
      %3201 = vmatpush1.msra.mxu0 0.0
      %3202 = vmatprep.subr.mxu0 0.0
      %3203 = vmatpush1.msra.mxu0 0.0
      %3204 = vmatprep.subr.mxu0 0.0
      %3205 = vmatpush1.msra.mxu0 0.0
      %3206 = vmatprep.subr.mxu0 0.0
      %3207 = vmatpush1.msra.mxu0 0.0
      %3208 = vmatprep.subr.mxu0 0.0
      %3209 = vmatpush1.msra.mxu0 0.0
      %3210 = vmatprep.subr.mxu0 0.0
      %3211 = vmatpush1.msra.mxu0 0.0
      %3212 = vmatprep.subr.mxu0 0.0
      %3213 = vmatpush1.msra.mxu0 0.0
      %3214 = vmatprep.mubr.f32.mxu0 0.0
      %3215 = vmatmul.mubr.f32.gmra.mrb[0].mxu0 %v537
      %v3216 = vpop.f32.mrb[0].mxu0
      %v3217 = vadd.f32 %v458, %v3216
      %v3218 = vpop.f32.mrb[0].mxu0
      %v3219 = vadd.f32 %v458, %v3218
      %3220 = vmatprep.mubr.f32.mxu0 0.0
      %3221 = vmatmul.mubr.f32.gmra.mrb[0].mxu0 %v540
      %v3222 = vpop.f32.mrb[0].mxu0
      %v3223 = vadd.f32 %v463, %v3222
      %v3224 = vpop.f32.mrb[0].mxu0
      %v3225 = vadd.f32 %v463, %v3224
      %3226 = vmatprep.mubr.f32.mxu0 0.0
      %3227 = vmatmul.mubr.f32.gmra.mrb[0].mxu0 %v543
      %v3228 = vpop.f32.mrb[0].mxu0
      %v3229 = vadd.f32 %v468, %v3228
      %v3230 = vpop.f32.mrb[0].mxu0
      %v3231 = vadd.f32 %v468, %v3230
      %3232 = vmatprep.mubr.f32.mxu0 0.0
      %3233 = vmatmul.mubr.f32.gmra.mrb[0].mxu0 %v546
      %v3234 = vpop.f32.mrb[0].mxu0
      %v3235 = vadd.f32 %v473, %v3234
      %v3236 = vpop.f32.mrb[0].mxu0
      %v3237 = vadd.f32 %v473, %v3236
      %3238 = vmatprep.mubr.f32.mxu0 0.0
      %3239 = vmatmul.mubr.f32.gmra.mrb[0].mxu0 %v549
      %v3240 = vpop.f32.mrb[0].mxu0
      %v3241 = vadd.f32 %v478, %v3240
      %v3242 = vpop.f32.mrb[0].mxu0
      %v3243 = vadd.f32 %v478, %v3242
      %3244 = vmatprep.mubr.f32.mxu0 0.0
      %3245 = vmatmul.mubr.f32.gmra.mrb[0].mxu0 %v552
      %v3246 = vpop.f32.mrb[0].mxu0
      %v3247 = vadd.f32 %v483, %v3246
      %v3248 = vpop.f32.mrb[0].mxu0
      %v3249 = vadd.f32 %v483, %v3248
      %3250 = vmatprep.mubr.f32.mxu0 0.0
      %3251 = vmatmul.mubr.f32.gmra.mrb[0].mxu0 %v555
      %v3252 = vpop.f32.mrb[0].mxu0
      %v3253 = vadd.f32 %v488, %v3252
      %v3254 = vpop.f32.mrb[0].mxu0
      %v3255 = vadd.f32 %v488, %v3254
      %3256 = vmatprep.mubr.f32.mxu0 0.0
      %3257 = vmatmul.mubr.f32.gmra.mrb[0].mxu0 %v558
      %v3258 = vpop.f32.mrb[0].mxu0
      %v3259 = vadd.f32 %v493, %v3258
      %v3260 = vpop.f32.mrb[0].mxu0
      %v3261 = vadd.f32 %v493, %v3260
      %3262 = vmatprep.mubr.f32.mxu0 0.0
      %3263 = vmatmul.mubr.f32.gmra.mrb[0].mxu0 %v561
      %v3264 = vpop.f32.mrb[0].mxu0
      %v3265 = vadd.f32 %v498, %v3264
      %v3266 = vpop.f32.mrb[0].mxu0
      %v3267 = vadd.f32 %v498, %v3266
      %3268 = vmatprep.mubr.f32.mxu0 0.0
      %3269 = vmatmul.mubr.f32.gmra.mrb[0].mxu0 %v564
      %v3270 = vpop.f32.mrb[0].mxu0
      %v3271 = vadd.f32 %v503, %v3270
      %v3272 = vpop.f32.mrb[0].mxu0
      %v3273 = vadd.f32 %v503, %v3272
      %3274 = vmatprep.mubr.f32.mxu0 0.0
      %3275 = vmatmul.mubr.f32.gmra.mrb[0].mxu0 %v567
      %v3276 = vpop.f32.mrb[0].mxu0
      %v3277 = vadd.f32 %v508, %v3276
      %v3278 = vpop.f32.mrb[0].mxu0
      %v3279 = vadd.f32 %v508, %v3278
      %3280 = vmatprep.mubr.f32.mxu0 0.0
      %3281 = vmatmul.mubr.f32.gmra.mrb[0].mxu0 %v570
      %v3282 = vpop.f32.mrb[0].mxu0
      %v3283 = vadd.f32 %v513, %v3282
      %v3284 = vpop.f32.mrb[0].mxu0
      %v3285 = vadd.f32 %v513, %v3284
      %3286 = vmatprep.mubr.f32.mxu0 0.0
      %3287 = vmatmul.mubr.f32.gmra.mrb[0].mxu0 %v573
      %v3288 = vpop.f32.mrb[0].mxu0
      %v3289 = vadd.f32 %v518, %v3288
      %v3290 = vpop.f32.mrb[0].mxu0
      %v3291 = vadd.f32 %v518, %v3290
      %3292 = vmatprep.mubr.f32.mxu0 0.0
      %3293 = vmatmul.mubr.f32.gmra.mrb[0].mxu0 %v576
      %v3294 = vpop.f32.mrb[0].mxu0
      %v3295 = vadd.f32 %v523, %v3294
      %v3296 = vpop.f32.mrb[0].mxu0
      %v3297 = vadd.f32 %v523, %v3296
      %3298 = vmatprep.mubr.f32.mxu0 0.0
      %3299 = vmatmul.mubr.f32.gmra.mrb[0].mxu0 %v579
      %v3300 = vpop.f32.mrb[0].mxu0
      %v3301 = vadd.f32 %v528, %v3300
      %v3302 = vpop.f32.mrb[0].mxu0
      %v3303 = vadd.f32 %v528, %v3302
      %3304 = vmatprep.mubr.f32.mxu0 0.0
      %3305 = vmatmul.mubr.f32.gmra.mrb[0].mxu0 %v582
      %v3306 = vpop.f32.mrb[0].mxu0
      %v3307 = vadd.f32 %v533, %v3306
      %v3308 = vpop.f32.mrb[0].mxu0
      %v3309 = vadd.f32 %v533, %v3308
      %3310 = vdwg.mxu0
      %3311 = vmatprep.subr.mxu0 %v256
      %3312 = vmatpush1.msra.mxu0 %v255
      %3313 = vmatprep.subr.mxu0 %v306
      %3314 = vmatpush1.msra.mxu0 %v305
      %3315 = vmatprep.subr.mxu0 %v356
      %3316 = vmatpush1.msra.mxu0 %v355
      %3317 = vmatprep.subr.mxu0 %v685
      %3318 = vmatpush1.msra.mxu0 %v682
      %3319 = vmatprep.subr.mxu0 0.0
      %3320 = vmatpush1.msra.mxu0 0.0
      %3321 = vmatprep.subr.mxu0 0.0
      %3322 = vmatpush1.msra.mxu0 0.0
      %3323 = vmatprep.subr.mxu0 0.0
      %3324 = vmatpush1.msra.mxu0 0.0
      %3325 = vmatprep.subr.mxu0 0.0
      %3326 = vmatpush1.msra.mxu0 0.0
      %3327 = vmatprep.subr.mxu0 0.0
      %3328 = vmatpush1.msra.mxu0 0.0
      %3329 = vmatprep.subr.mxu0 0.0
      %3330 = vmatpush1.msra.mxu0 0.0
      %3331 = vmatprep.subr.mxu0 0.0
      %3332 = vmatpush1.msra.mxu0 0.0
      %3333 = vmatprep.subr.mxu0 0.0
      %3334 = vmatpush1.msra.mxu0 0.0
      %3335 = vmatprep.subr.mxu0 0.0
      %3336 = vmatpush1.msra.mxu0 0.0
      %3337 = vmatprep.subr.mxu0 0.0
      %3338 = vmatpush1.msra.mxu0 0.0
      %3339 = vmatprep.subr.mxu0 0.0
      %3340 = vmatpush1.msra.mxu0 0.0
      %3341 = vmatprep.subr.mxu0 0.0
      %3342 = vmatpush1.msra.mxu0 0.0
      %3343 = vmatprep.subr.mxu0 0.0
      %3344 = vmatpush1.msra.mxu0 0.0
      %3345 = vmatprep.subr.mxu0 0.0
      %3346 = vmatpush1.msra.mxu0 0.0
      %3347 = vmatprep.subr.mxu0 0.0
      %3348 = vmatpush1.msra.mxu0 0.0
      %3349 = vmatprep.subr.mxu0 0.0
      %3350 = vmatpush1.msra.mxu0 0.0
      %3351 = vmatprep.subr.mxu0 0.0
      %3352 = vmatpush1.msra.mxu0 0.0
      %3353 = vmatprep.subr.mxu0 0.0
      %3354 = vmatpush1.msra.mxu0 0.0
      %3355 = vmatprep.subr.mxu0 0.0
      %3356 = vmatpush1.msra.mxu0 0.0
      %3357 = vmatprep.subr.mxu0 0.0
      %3358 = vmatpush1.msra.mxu0 0.0
      %3359 = vmatprep.subr.mxu0 0.0
      %3360 = vmatpush1.msra.mxu0 0.0
      %3361 = vmatprep.subr.mxu0 0.0
      %3362 = vmatpush1.msra.mxu0 0.0
      %3363 = vmatprep.subr.mxu0 0.0
      %3364 = vmatpush1.msra.mxu0 0.0
      %3365 = vmatprep.subr.mxu0 0.0
      %3366 = vmatpush1.msra.mxu0 0.0
      %3367 = vmatprep.subr.mxu0 0.0
      %3368 = vmatpush1.msra.mxu0 0.0
      %3369 = vmatprep.subr.mxu0 0.0
      %3370 = vmatpush1.msra.mxu0 0.0
      %3371 = vmatprep.subr.mxu0 0.0
      %3372 = vmatpush1.msra.mxu0 0.0
      %3373 = vmatprep.subr.mxu0 0.0
      %3374 = vmatpush1.msra.mxu0 0.0
      %3375 = vmatprep.mubr.f32.mxu0 0.0
      %3376 = vmatmul.mubr.f32.gmra.mrb[0].mxu0 %v537
      %v3377 = vpop.f32.mrb[0].mxu0
      %v3378 = vadd.f32 %v458, %v3377
      %v3379 = vpop.f32.mrb[0].mxu0
      %v3380 = vadd.f32 %v458, %v3379
      %3381 = vmatprep.mubr.f32.mxu0 0.0
      %3382 = vmatmul.mubr.f32.gmra.mrb[0].mxu0 %v540
      %v3383 = vpop.f32.mrb[0].mxu0
      %v3384 = vadd.f32 %v463, %v3383
      %v3385 = vpop.f32.mrb[0].mxu0
      %v3386 = vadd.f32 %v463, %v3385
      %3387 = vmatprep.mubr.f32.mxu0 0.0
      %3388 = vmatmul.mubr.f32.gmra.mrb[0].mxu0 %v543
      %v3389 = vpop.f32.mrb[0].mxu0
      %v3390 = vadd.f32 %v468, %v3389
      %v3391 = vpop.f32.mrb[0].mxu0
      %v3392 = vadd.f32 %v468, %v3391
      %3393 = vmatprep.mubr.f32.mxu0 0.0
      %3394 = vmatmul.mubr.f32.gmra.mrb[0].mxu0 %v546
      %v3395 = vpop.f32.mrb[0].mxu0
      %v3396 = vadd.f32 %v473, %v3395
      %v3397 = vpop.f32.mrb[0].mxu0
      %v3398 = vadd.f32 %v473, %v3397
      %3399 = vmatprep.mubr.f32.mxu0 0.0
      %3400 = vmatmul.mubr.f32.gmra.mrb[0].mxu0 %v549
      %v3401 = vpop.f32.mrb[0].mxu0
      %v3402 = vadd.f32 %v478, %v3401
      %v3403 = vpop.f32.mrb[0].mxu0
      %v3404 = vadd.f32 %v478, %v3403
      %3405 = vmatprep.mubr.f32.mxu0 0.0
      %3406 = vmatmul.mubr.f32.gmra.mrb[0].mxu0 %v552
      %v3407 = vpop.f32.mrb[0].mxu0
      %v3408 = vadd.f32 %v483, %v3407
      %v3409 = vpop.f32.mrb[0].mxu0
      %v3410 = vadd.f32 %v483, %v3409
      %3411 = vmatprep.mubr.f32.mxu0 0.0
      %3412 = vmatmul.mubr.f32.gmra.mrb[0].mxu0 %v555
      %v3413 = vpop.f32.mrb[0].mxu0
      %v3414 = vadd.f32 %v488, %v3413
      %v3415 = vpop.f32.mrb[0].mxu0
      %v3416 = vadd.f32 %v488, %v3415
      %3417 = vmatprep.mubr.f32.mxu0 0.0
      %3418 = vmatmul.mubr.f32.gmra.mrb[0].mxu0 %v558
      %v3419 = vpop.f32.mrb[0].mxu0
      %v3420 = vadd.f32 %v493, %v3419
      %v3421 = vpop.f32.mrb[0].mxu0
      %v3422 = vadd.f32 %v493, %v3421
      %3423 = vmatprep.mubr.f32.mxu0 0.0
      %3424 = vmatmul.mubr.f32.gmra.mrb[0].mxu0 %v561
      %v3425 = vpop.f32.mrb[0].mxu0
      %v3426 = vadd.f32 %v498, %v3425
      %v3427 = vpop.f32.mrb[0].mxu0
      %v3428 = vadd.f32 %v498, %v3427
      %3429 = vmatprep.mubr.f32.mxu0 0.0
      %3430 = vmatmul.mubr.f32.gmra.mrb[0].mxu0 %v564
      %v3431 = vpop.f32.mrb[0].mxu0
      %v3432 = vadd.f32 %v503, %v3431
      %v3433 = vpop.f32.mrb[0].mxu0
      %v3434 = vadd.f32 %v503, %v3433
      %3435 = vmatprep.mubr.f32.mxu0 0.0
      %3436 = vmatmul.mubr.f32.gmra.mrb[0].mxu0 %v567
      %v3437 = vpop.f32.mrb[0].mxu0
      %v3438 = vadd.f32 %v508, %v3437
      %v3439 = vpop.f32.mrb[0].mxu0
      %v3440 = vadd.f32 %v508, %v3439
      %3441 = vmatprep.mubr.f32.mxu0 0.0
      %3442 = vmatmul.mubr.f32.gmra.mrb[0].mxu0 %v570
      %v3443 = vpop.f32.mrb[0].mxu0
      %v3444 = vadd.f32 %v513, %v3443
      %v3445 = vpop.f32.mrb[0].mxu0
      %v3446 = vadd.f32 %v513, %v3445
      %3447 = vmatprep.mubr.f32.mxu0 0.0
      %3448 = vmatmul.mubr.f32.gmra.mrb[0].mxu0 %v573
      %v3449 = vpop.f32.mrb[0].mxu0
      %v3450 = vadd.f32 %v518, %v3449
      %v3451 = vpop.f32.mrb[0].mxu0
      %v3452 = vadd.f32 %v518, %v3451
      %3453 = vmatprep.mubr.f32.mxu0 0.0
      %3454 = vmatmul.mubr.f32.gmra.mrb[0].mxu0 %v576
      %v3455 = vpop.f32.mrb[0].mxu0
      %v3456 = vadd.f32 %v523, %v3455
      %v3457 = vpop.f32.mrb[0].mxu0
      %v3458 = vadd.f32 %v523, %v3457
      %3459 = vmatprep.mubr.f32.mxu0 0.0
      %3460 = vmatmul.mubr.f32.gmra.mrb[0].mxu0 %v579
      %v3461 = vpop.f32.mrb[0].mxu0
      %v3462 = vadd.f32 %v528, %v3461
      %v3463 = vpop.f32.mrb[0].mxu0
      %v3464 = vadd.f32 %v528, %v3463
      %3465 = vmatprep.mubr.f32.mxu0 0.0
      %3466 = vmatmul.mubr.f32.gmra.mrb[0].mxu0 %v582
      %v3467 = vpop.f32.mrb[0].mxu0
      %v3468 = vadd.f32 %v533, %v3467
      %v3469 = vpop.f32.mrb[0].mxu0
      %v3470 = vadd.f32 %v533, %v3469
      %3471 = vdwg.mxu0
      %3472 = vmatprep.subr.mxu0 %v258
      %3473 = vmatpush1.msra.mxu0 %v257
      %3474 = vmatprep.subr.mxu0 %v308
      %3475 = vmatpush1.msra.mxu0 %v307
      %3476 = vmatprep.subr.mxu0 %v358
      %3477 = vmatpush1.msra.mxu0 %v357
      %3478 = vmatprep.subr.mxu0 %v691
      %3479 = vmatpush1.msra.mxu0 %v688
      %3480 = vmatprep.subr.mxu0 0.0
      %3481 = vmatpush1.msra.mxu0 0.0
      %3482 = vmatprep.subr.mxu0 0.0
      %3483 = vmatpush1.msra.mxu0 0.0
      %3484 = vmatprep.subr.mxu0 0.0
      %3485 = vmatpush1.msra.mxu0 0.0
      %3486 = vmatprep.subr.mxu0 0.0
      %3487 = vmatpush1.msra.mxu0 0.0
      %3488 = vmatprep.subr.mxu0 0.0
      %3489 = vmatpush1.msra.mxu0 0.0
      %3490 = vmatprep.subr.mxu0 0.0
      %3491 = vmatpush1.msra.mxu0 0.0
      %3492 = vmatprep.subr.mxu0 0.0
      %3493 = vmatpush1.msra.mxu0 0.0
      %3494 = vmatprep.subr.mxu0 0.0
      %3495 = vmatpush1.msra.mxu0 0.0
      %3496 = vmatprep.subr.mxu0 0.0
      %3497 = vmatpush1.msra.mxu0 0.0
      %3498 = vmatprep.subr.mxu0 0.0
      %3499 = vmatpush1.msra.mxu0 0.0
      %3500 = vmatprep.subr.mxu0 0.0
      %3501 = vmatpush1.msra.mxu0 0.0
      %3502 = vmatprep.subr.mxu0 0.0
      %3503 = vmatpush1.msra.mxu0 0.0
      %3504 = vmatprep.subr.mxu0 0.0
      %3505 = vmatpush1.msra.mxu0 0.0
      %3506 = vmatprep.subr.mxu0 0.0
      %3507 = vmatpush1.msra.mxu0 0.0
      %3508 = vmatprep.subr.mxu0 0.0
      %3509 = vmatpush1.msra.mxu0 0.0
      %3510 = vmatprep.subr.mxu0 0.0
      %3511 = vmatpush1.msra.mxu0 0.0
      %3512 = vmatprep.subr.mxu0 0.0
      %3513 = vmatpush1.msra.mxu0 0.0
      %3514 = vmatprep.subr.mxu0 0.0
      %3515 = vmatpush1.msra.mxu0 0.0
      %3516 = vmatprep.subr.mxu0 0.0
      %3517 = vmatpush1.msra.mxu0 0.0
      %3518 = vmatprep.subr.mxu0 0.0
      %3519 = vmatpush1.msra.mxu0 0.0
      %3520 = vmatprep.subr.mxu0 0.0
      %3521 = vmatpush1.msra.mxu0 0.0
      %3522 = vmatprep.subr.mxu0 0.0
      %3523 = vmatpush1.msra.mxu0 0.0
      %3524 = vmatprep.subr.mxu0 0.0
      %3525 = vmatpush1.msra.mxu0 0.0
      %3526 = vmatprep.subr.mxu0 0.0
      %3527 = vmatpush1.msra.mxu0 0.0
      %3528 = vmatprep.subr.mxu0 0.0
      %3529 = vmatpush1.msra.mxu0 0.0
      %3530 = vmatprep.subr.mxu0 0.0
      %3531 = vmatpush1.msra.mxu0 0.0
      %3532 = vmatprep.subr.mxu0 0.0
      %3533 = vmatpush1.msra.mxu0 0.0
      %3534 = vmatprep.subr.mxu0 0.0
      %3535 = vmatpush1.msra.mxu0 0.0
      %3536 = vmatprep.mubr.f32.mxu0 0.0
      %3537 = vmatmul.mubr.f32.gmra.mrb[0].mxu0 %v537
      %v3538 = vpop.f32.mrb[0].mxu0
      %v3539 = vadd.f32 %v458, %v3538
      %v3540 = vpop.f32.mrb[0].mxu0
      %v3541 = vadd.f32 %v458, %v3540
      %3542 = vmatprep.mubr.f32.mxu0 0.0
      %3543 = vmatmul.mubr.f32.gmra.mrb[0].mxu0 %v540
      %v3544 = vpop.f32.mrb[0].mxu0
      %v3545 = vadd.f32 %v463, %v3544
      %v3546 = vpop.f32.mrb[0].mxu0
      %v3547 = vadd.f32 %v463, %v3546
      %3548 = vmatprep.mubr.f32.mxu0 0.0
      %3549 = vmatmul.mubr.f32.gmra.mrb[0].mxu0 %v543
      %v3550 = vpop.f32.mrb[0].mxu0
      %v3551 = vadd.f32 %v468, %v3550
      %v3552 = vpop.f32.mrb[0].mxu0
      %v3553 = vadd.f32 %v468, %v3552
      %3554 = vmatprep.mubr.f32.mxu0 0.0
      %3555 = vmatmul.mubr.f32.gmra.mrb[0].mxu0 %v546
      %v3556 = vpop.f32.mrb[0].mxu0
      %v3557 = vadd.f32 %v473, %v3556
      %v3558 = vpop.f32.mrb[0].mxu0
      %v3559 = vadd.f32 %v473, %v3558
      %3560 = vmatprep.mubr.f32.mxu0 0.0
      %3561 = vmatmul.mubr.f32.gmra.mrb[0].mxu0 %v549
      %v3562 = vpop.f32.mrb[0].mxu0
      %v3563 = vadd.f32 %v478, %v3562
      %v3564 = vpop.f32.mrb[0].mxu0
      %v3565 = vadd.f32 %v478, %v3564
      %3566 = vmatprep.mubr.f32.mxu0 0.0
      %3567 = vmatmul.mubr.f32.gmra.mrb[0].mxu0 %v552
      %v3568 = vpop.f32.mrb[0].mxu0
      %v3569 = vadd.f32 %v483, %v3568
      %v3570 = vpop.f32.mrb[0].mxu0
      %v3571 = vadd.f32 %v483, %v3570
      %3572 = vmatprep.mubr.f32.mxu0 0.0
      %3573 = vmatmul.mubr.f32.gmra.mrb[0].mxu0 %v555
      %v3574 = vpop.f32.mrb[0].mxu0
      %v3575 = vadd.f32 %v488, %v3574
      %v3576 = vpop.f32.mrb[0].mxu0
      %v3577 = vadd.f32 %v488, %v3576
      %3578 = vmatprep.mubr.f32.mxu0 0.0
      %3579 = vmatmul.mubr.f32.gmra.mrb[0].mxu0 %v558
      %v3580 = vpop.f32.mrb[0].mxu0
      %v3581 = vadd.f32 %v493, %v3580
      %v3582 = vpop.f32.mrb[0].mxu0
      %v3583 = vadd.f32 %v493, %v3582
      %3584 = vmatprep.mubr.f32.mxu0 0.0
      %3585 = vmatmul.mubr.f32.gmra.mrb[0].mxu0 %v561
      %v3586 = vpop.f32.mrb[0].mxu0
      %v3587 = vadd.f32 %v498, %v3586
      %v3588 = vpop.f32.mrb[0].mxu0
      %v3589 = vadd.f32 %v498, %v3588
      %3590 = vmatprep.mubr.f32.mxu0 0.0
      %3591 = vmatmul.mubr.f32.gmra.mrb[0].mxu0 %v564
      %v3592 = vpop.f32.mrb[0].mxu0
      %v3593 = vadd.f32 %v503, %v3592
      %v3594 = vpop.f32.mrb[0].mxu0
      %v3595 = vadd.f32 %v503, %v3594
      %3596 = vmatprep.mubr.f32.mxu0 0.0
      %3597 = vmatmul.mubr.f32.gmra.mrb[0].mxu0 %v567
      %v3598 = vpop.f32.mrb[0].mxu0
      %v3599 = vadd.f32 %v508, %v3598
      %v3600 = vpop.f32.mrb[0].mxu0
      %v3601 = vadd.f32 %v508, %v3600
      %3602 = vmatprep.mubr.f32.mxu0 0.0
      %3603 = vmatmul.mubr.f32.gmra.mrb[0].mxu0 %v570
      %v3604 = vpop.f32.mrb[0].mxu0
      %v3605 = vadd.f32 %v513, %v3604
      %v3606 = vpop.f32.mrb[0].mxu0
      %v3607 = vadd.f32 %v513, %v3606
      %3608 = vmatprep.mubr.f32.mxu0 0.0
      %3609 = vmatmul.mubr.f32.gmra.mrb[0].mxu0 %v573
      %v3610 = vpop.f32.mrb[0].mxu0
      %v3611 = vadd.f32 %v518, %v3610
      %v3612 = vpop.f32.mrb[0].mxu0
      %v3613 = vadd.f32 %v518, %v3612
      %3614 = vmatprep.mubr.f32.mxu0 0.0
      %3615 = vmatmul.mubr.f32.gmra.mrb[0].mxu0 %v576
      %v3616 = vpop.f32.mrb[0].mxu0
      %v3617 = vadd.f32 %v523, %v3616
      %v3618 = vpop.f32.mrb[0].mxu0
      %v3619 = vadd.f32 %v523, %v3618
      %3620 = vmatprep.mubr.f32.mxu0 0.0
      %3621 = vmatmul.mubr.f32.gmra.mrb[0].mxu0 %v579
      %v3622 = vpop.f32.mrb[0].mxu0
      %v3623 = vadd.f32 %v528, %v3622
      %v3624 = vpop.f32.mrb[0].mxu0
      %v3625 = vadd.f32 %v528, %v3624
      %3626 = vmatprep.mubr.f32.mxu0 0.0
      %3627 = vmatmul.mubr.f32.gmra.mrb[0].mxu0 %v582
      %v3628 = vpop.f32.mrb[0].mxu0
      %v3629 = vadd.f32 %v533, %v3628
      %v3630 = vpop.f32.mrb[0].mxu0
      %v3631 = vadd.f32 %v533, %v3630
      %3632 = vdwg.mxu0
      %3633 = vmatprep.subr.mxu0 %v260
      %3634 = vmatpush1.msra.mxu0 %v259
      %3635 = vmatprep.subr.mxu0 %v310
      %3636 = vmatpush1.msra.mxu0 %v309
      %3637 = vmatprep.subr.mxu0 %v360
      %3638 = vmatpush1.msra.mxu0 %v359
      %3639 = vmatprep.subr.mxu0 %v697
      %3640 = vmatpush1.msra.mxu0 %v694
      %3641 = vmatprep.subr.mxu0 0.0
      %3642 = vmatpush1.msra.mxu0 0.0
      %3643 = vmatprep.subr.mxu0 0.0
      %3644 = vmatpush1.msra.mxu0 0.0
      %3645 = vmatprep.subr.mxu0 0.0
      %3646 = vmatpush1.msra.mxu0 0.0
      %3647 = vmatprep.subr.mxu0 0.0
      %3648 = vmatpush1.msra.mxu0 0.0
      %3649 = vmatprep.subr.mxu0 0.0
      %3650 = vmatpush1.msra.mxu0 0.0
      %3651 = vmatprep.subr.mxu0 0.0
      %3652 = vmatpush1.msra.mxu0 0.0
      %3653 = vmatprep.subr.mxu0 0.0
      %3654 = vmatpush1.msra.mxu0 0.0
      %3655 = vmatprep.subr.mxu0 0.0
      %3656 = vmatpush1.msra.mxu0 0.0
      %3657 = vmatprep.subr.mxu0 0.0
      %3658 = vmatpush1.msra.mxu0 0.0
      %3659 = vmatprep.subr.mxu0 0.0
      %3660 = vmatpush1.msra.mxu0 0.0
      %3661 = vmatprep.subr.mxu0 0.0
      %3662 = vmatpush1.msra.mxu0 0.0
      %3663 = vmatprep.subr.mxu0 0.0
      %3664 = vmatpush1.msra.mxu0 0.0
      %3665 = vmatprep.subr.mxu0 0.0
      %3666 = vmatpush1.msra.mxu0 0.0
      %3667 = vmatprep.subr.mxu0 0.0
      %3668 = vmatpush1.msra.mxu0 0.0
      %3669 = vmatprep.subr.mxu0 0.0
      %3670 = vmatpush1.msra.mxu0 0.0
      %3671 = vmatprep.subr.mxu0 0.0
      %3672 = vmatpush1.msra.mxu0 0.0
      %3673 = vmatprep.subr.mxu0 0.0
      %3674 = vmatpush1.msra.mxu0 0.0
      %3675 = vmatprep.subr.mxu0 0.0
      %3676 = vmatpush1.msra.mxu0 0.0
      %3677 = vmatprep.subr.mxu0 0.0
      %3678 = vmatpush1.msra.mxu0 0.0
      %3679 = vmatprep.subr.mxu0 0.0
      %3680 = vmatpush1.msra.mxu0 0.0
      %3681 = vmatprep.subr.mxu0 0.0
      %3682 = vmatpush1.msra.mxu0 0.0
      %3683 = vmatprep.subr.mxu0 0.0
      %3684 = vmatpush1.msra.mxu0 0.0
      %3685 = vmatprep.subr.mxu0 0.0
      %3686 = vmatpush1.msra.mxu0 0.0
      %3687 = vmatprep.subr.mxu0 0.0
      %3688 = vmatpush1.msra.mxu0 0.0
      %3689 = vmatprep.subr.mxu0 0.0
      %3690 = vmatpush1.msra.mxu0 0.0
      %3691 = vmatprep.subr.mxu0 0.0
      %3692 = vmatpush1.msra.mxu0 0.0
      %3693 = vmatprep.subr.mxu0 0.0
      %3694 = vmatpush1.msra.mxu0 0.0
      %3695 = vmatprep.subr.mxu0 0.0
      %3696 = vmatpush1.msra.mxu0 0.0
      %3697 = vmatprep.mubr.f32.mxu0 0.0
      %3698 = vmatmul.mubr.f32.gmra.mrb[0].mxu0 %v537
      %v3699 = vpop.f32.mrb[0].mxu0
      %v3700 = vadd.f32 %v458, %v3699
      %v3701 = vpop.f32.mrb[0].mxu0
      %v3702 = vadd.f32 %v458, %v3701
      %3703 = vmatprep.mubr.f32.mxu0 0.0
      %3704 = vmatmul.mubr.f32.gmra.mrb[0].mxu0 %v540
      %v3705 = vpop.f32.mrb[0].mxu0
      %v3706 = vadd.f32 %v463, %v3705
      %v3707 = vpop.f32.mrb[0].mxu0
      %v3708 = vadd.f32 %v463, %v3707
      %3709 = vmatprep.mubr.f32.mxu0 0.0
      %3710 = vmatmul.mubr.f32.gmra.mrb[0].mxu0 %v543
      %v3711 = vpop.f32.mrb[0].mxu0
      %v3712 = vadd.f32 %v468, %v3711
      %v3713 = vpop.f32.mrb[0].mxu0
      %v3714 = vadd.f32 %v468, %v3713
      %3715 = vmatprep.mubr.f32.mxu0 0.0
      %3716 = vmatmul.mubr.f32.gmra.mrb[0].mxu0 %v546
      %v3717 = vpop.f32.mrb[0].mxu0
      %v3718 = vadd.f32 %v473, %v3717
      %v3719 = vpop.f32.mrb[0].mxu0
      %v3720 = vadd.f32 %v473, %v3719
      %3721 = vmatprep.mubr.f32.mxu0 0.0
      %3722 = vmatmul.mubr.f32.gmra.mrb[0].mxu0 %v549
      %v3723 = vpop.f32.mrb[0].mxu0
      %v3724 = vadd.f32 %v478, %v3723
      %v3725 = vpop.f32.mrb[0].mxu0
      %v3726 = vadd.f32 %v478, %v3725
      %3727 = vmatprep.mubr.f32.mxu0 0.0
      %3728 = vmatmul.mubr.f32.gmra.mrb[0].mxu0 %v552
      %v3729 = vpop.f32.mrb[0].mxu0
      %v3730 = vadd.f32 %v483, %v3729
      %v3731 = vpop.f32.mrb[0].mxu0
      %v3732 = vadd.f32 %v483, %v3731
      %3733 = vmatprep.mubr.f32.mxu0 0.0
      %3734 = vmatmul.mubr.f32.gmra.mrb[0].mxu0 %v555
      %v3735 = vpop.f32.mrb[0].mxu0
      %v3736 = vadd.f32 %v488, %v3735
      %v3737 = vpop.f32.mrb[0].mxu0
      %v3738 = vadd.f32 %v488, %v3737
      %3739 = vmatprep.mubr.f32.mxu0 0.0
      %3740 = vmatmul.mubr.f32.gmra.mrb[0].mxu0 %v558
      %v3741 = vpop.f32.mrb[0].mxu0
      %v3742 = vadd.f32 %v493, %v3741
      %v3743 = vpop.f32.mrb[0].mxu0
      %v3744 = vadd.f32 %v493, %v3743
      %3745 = vmatprep.mubr.f32.mxu0 0.0
      %3746 = vmatmul.mubr.f32.gmra.mrb[0].mxu0 %v561
      %v3747 = vpop.f32.mrb[0].mxu0
      %v3748 = vadd.f32 %v498, %v3747
      %v3749 = vpop.f32.mrb[0].mxu0
      %v3750 = vadd.f32 %v498, %v3749
      %3751 = vmatprep.mubr.f32.mxu0 0.0
      %3752 = vmatmul.mubr.f32.gmra.mrb[0].mxu0 %v564
      %v3753 = vpop.f32.mrb[0].mxu0
      %v3754 = vadd.f32 %v503, %v3753
      %v3755 = vpop.f32.mrb[0].mxu0
      %v3756 = vadd.f32 %v503, %v3755
      %3757 = vmatprep.mubr.f32.mxu0 0.0
      %3758 = vmatmul.mubr.f32.gmra.mrb[0].mxu0 %v567
      %v3759 = vpop.f32.mrb[0].mxu0
      %v3760 = vadd.f32 %v508, %v3759
      %v3761 = vpop.f32.mrb[0].mxu0
      %v3762 = vadd.f32 %v508, %v3761
      %3763 = vmatprep.mubr.f32.mxu0 0.0
      %3764 = vmatmul.mubr.f32.gmra.mrb[0].mxu0 %v570
      %v3765 = vpop.f32.mrb[0].mxu0
      %v3766 = vadd.f32 %v513, %v3765
      %v3767 = vpop.f32.mrb[0].mxu0
      %v3768 = vadd.f32 %v513, %v3767
      %3769 = vmatprep.mubr.f32.mxu0 0.0
      %3770 = vmatmul.mubr.f32.gmra.mrb[0].mxu0 %v573
      %v3771 = vpop.f32.mrb[0].mxu0
      %v3772 = vadd.f32 %v518, %v3771
      %v3773 = vpop.f32.mrb[0].mxu0
      %v3774 = vadd.f32 %v518, %v3773
      %3775 = vmatprep.mubr.f32.mxu0 0.0
      %3776 = vmatmul.mubr.f32.gmra.mrb[0].mxu0 %v576
      %v3777 = vpop.f32.mrb[0].mxu0
      %v3778 = vadd.f32 %v523, %v3777
      %v3779 = vpop.f32.mrb[0].mxu0
      %v3780 = vadd.f32 %v523, %v3779
      %3781 = vmatprep.mubr.f32.mxu0 0.0
      %3782 = vmatmul.mubr.f32.gmra.mrb[0].mxu0 %v579
      %v3783 = vpop.f32.mrb[0].mxu0
      %v3784 = vadd.f32 %v528, %v3783
      %v3785 = vpop.f32.mrb[0].mxu0
      %v3786 = vadd.f32 %v528, %v3785
      %3787 = vmatprep.mubr.f32.mxu0 0.0
      %3788 = vmatmul.mubr.f32.gmra.mrb[0].mxu0 %v582
      %v3789 = vpop.f32.mrb[0].mxu0
      %v3790 = vadd.f32 %v533, %v3789
      %v3791 = vpop.f32.mrb[0].mxu0
      %v3792 = vadd.f32 %v533, %v3791
      %3793 = vdwg.mxu0
      %3794 = vmatprep.subr.mxu0 %v262
      %3795 = vmatpush1.msra.mxu0 %v261
      %3796 = vmatprep.subr.mxu0 %v312
      %3797 = vmatpush1.msra.mxu0 %v311
      %3798 = vmatprep.subr.mxu0 %v362
      %3799 = vmatpush1.msra.mxu0 %v361
      %3800 = vmatprep.subr.mxu0 %v703
      %3801 = vmatpush1.msra.mxu0 %v700
      %3802 = vmatprep.subr.mxu0 0.0
      %3803 = vmatpush1.msra.mxu0 0.0
      %3804 = vmatprep.subr.mxu0 0.0
      %3805 = vmatpush1.msra.mxu0 0.0
      %3806 = vmatprep.subr.mxu0 0.0
      %3807 = vmatpush1.msra.mxu0 0.0
      %3808 = vmatprep.subr.mxu0 0.0
      %3809 = vmatpush1.msra.mxu0 0.0
      %3810 = vmatprep.subr.mxu0 0.0
      %3811 = vmatpush1.msra.mxu0 0.0
      %3812 = vmatprep.subr.mxu0 0.0
      %3813 = vmatpush1.msra.mxu0 0.0
      %3814 = vmatprep.subr.mxu0 0.0
      %3815 = vmatpush1.msra.mxu0 0.0
      %3816 = vmatprep.subr.mxu0 0.0
      %3817 = vmatpush1.msra.mxu0 0.0
      %3818 = vmatprep.subr.mxu0 0.0
      %3819 = vmatpush1.msra.mxu0 0.0
      %3820 = vmatprep.subr.mxu0 0.0
      %3821 = vmatpush1.msra.mxu0 0.0
      %3822 = vmatprep.subr.mxu0 0.0
      %3823 = vmatpush1.msra.mxu0 0.0
      %3824 = vmatprep.subr.mxu0 0.0
      %3825 = vmatpush1.msra.mxu0 0.0
      %3826 = vmatprep.subr.mxu0 0.0
      %3827 = vmatpush1.msra.mxu0 0.0
      %3828 = vmatprep.subr.mxu0 0.0
      %3829 = vmatpush1.msra.mxu0 0.0
      %3830 = vmatprep.subr.mxu0 0.0
      %3831 = vmatpush1.msra.mxu0 0.0
      %3832 = vmatprep.subr.mxu0 0.0
      %3833 = vmatpush1.msra.mxu0 0.0
      %3834 = vmatprep.subr.mxu0 0.0
      %3835 = vmatpush1.msra.mxu0 0.0
      %3836 = vmatprep.subr.mxu0 0.0
      %3837 = vmatpush1.msra.mxu0 0.0
      %3838 = vmatprep.subr.mxu0 0.0
      %3839 = vmatpush1.msra.mxu0 0.0
      %3840 = vmatprep.subr.mxu0 0.0
      %3841 = vmatpush1.msra.mxu0 0.0
      %3842 = vmatprep.subr.mxu0 0.0
      %3843 = vmatpush1.msra.mxu0 0.0
      %3844 = vmatprep.subr.mxu0 0.0
      %3845 = vmatpush1.msra.mxu0 0.0
      %3846 = vmatprep.subr.mxu0 0.0
      %3847 = vmatpush1.msra.mxu0 0.0
      %3848 = vmatprep.subr.mxu0 0.0
      %3849 = vmatpush1.msra.mxu0 0.0
      %3850 = vmatprep.subr.mxu0 0.0
      %3851 = vmatpush1.msra.mxu0 0.0
      %3852 = vmatprep.subr.mxu0 0.0
      %3853 = vmatpush1.msra.mxu0 0.0
      %3854 = vmatprep.subr.mxu0 0.0
      %3855 = vmatpush1.msra.mxu0 0.0
      %3856 = vmatprep.subr.mxu0 0.0
      %3857 = vmatpush1.msra.mxu0 0.0
      %3858 = vmatprep.mubr.f32.mxu0 0.0
      %3859 = vmatmul.mubr.f32.gmra.mrb[0].mxu0 %v537
      %v3860 = vpop.f32.mrb[0].mxu0
      %v3861 = vadd.f32 %v458, %v3860
      %v3862 = vpop.f32.mrb[0].mxu0
      %v3863 = vadd.f32 %v458, %v3862
      %3864 = vmatprep.mubr.f32.mxu0 0.0
      %3865 = vmatmul.mubr.f32.gmra.mrb[0].mxu0 %v540
      %v3866 = vpop.f32.mrb[0].mxu0
      %v3867 = vadd.f32 %v463, %v3866
      %v3868 = vpop.f32.mrb[0].mxu0
      %v3869 = vadd.f32 %v463, %v3868
      %3870 = vmatprep.mubr.f32.mxu0 0.0
      %3871 = vmatmul.mubr.f32.gmra.mrb[0].mxu0 %v543
      %v3872 = vpop.f32.mrb[0].mxu0
      %v3873 = vadd.f32 %v468, %v3872
      %v3874 = vpop.f32.mrb[0].mxu0
      %v3875 = vadd.f32 %v468, %v3874
      %3876 = vmatprep.mubr.f32.mxu0 0.0
      %3877 = vmatmul.mubr.f32.gmra.mrb[0].mxu0 %v546
      %v3878 = vpop.f32.mrb[0].mxu0
      %v3879 = vadd.f32 %v473, %v3878
      %v3880 = vpop.f32.mrb[0].mxu0
      %v3881 = vadd.f32 %v473, %v3880
      %3882 = vmatprep.mubr.f32.mxu0 0.0
      %3883 = vmatmul.mubr.f32.gmra.mrb[0].mxu0 %v549
      %v3884 = vpop.f32.mrb[0].mxu0
      %v3885 = vadd.f32 %v478, %v3884
      %v3886 = vpop.f32.mrb[0].mxu0
      %v3887 = vadd.f32 %v478, %v3886
      %3888 = vmatprep.mubr.f32.mxu0 0.0
      %3889 = vmatmul.mubr.f32.gmra.mrb[0].mxu0 %v552
      %v3890 = vpop.f32.mrb[0].mxu0
      %v3891 = vadd.f32 %v483, %v3890
      %v3892 = vpop.f32.mrb[0].mxu0
      %v3893 = vadd.f32 %v483, %v3892
      %3894 = vmatprep.mubr.f32.mxu0 0.0
      %3895 = vmatmul.mubr.f32.gmra.mrb[0].mxu0 %v555
      %v3896 = vpop.f32.mrb[0].mxu0
      %v3897 = vadd.f32 %v488, %v3896
      %v3898 = vpop.f32.mrb[0].mxu0
      %v3899 = vadd.f32 %v488, %v3898
      %3900 = vmatprep.mubr.f32.mxu0 0.0
      %3901 = vmatmul.mubr.f32.gmra.mrb[0].mxu0 %v558
      %v3902 = vpop.f32.mrb[0].mxu0
      %v3903 = vadd.f32 %v493, %v3902
      %v3904 = vpop.f32.mrb[0].mxu0
      %v3905 = vadd.f32 %v493, %v3904
      %3906 = vmatprep.mubr.f32.mxu0 0.0
      %3907 = vmatmul.mubr.f32.gmra.mrb[0].mxu0 %v561
      %v3908 = vpop.f32.mrb[0].mxu0
      %v3909 = vadd.f32 %v498, %v3908
      %v3910 = vpop.f32.mrb[0].mxu0
      %v3911 = vadd.f32 %v498, %v3910
      %3912 = vmatprep.mubr.f32.mxu0 0.0
      %3913 = vmatmul.mubr.f32.gmra.mrb[0].mxu0 %v564
      %v3914 = vpop.f32.mrb[0].mxu0
      %v3915 = vadd.f32 %v503, %v3914
      %v3916 = vpop.f32.mrb[0].mxu0
      %v3917 = vadd.f32 %v503, %v3916
      %3918 = vmatprep.mubr.f32.mxu0 0.0
      %3919 = vmatmul.mubr.f32.gmra.mrb[0].mxu0 %v567
      %v3920 = vpop.f32.mrb[0].mxu0
      %v3921 = vadd.f32 %v508, %v3920
      %v3922 = vpop.f32.mrb[0].mxu0
      %v3923 = vadd.f32 %v508, %v3922
      %3924 = vmatprep.mubr.f32.mxu0 0.0
      %3925 = vmatmul.mubr.f32.gmra.mrb[0].mxu0 %v570
      %v3926 = vpop.f32.mrb[0].mxu0
      %v3927 = vadd.f32 %v513, %v3926
      %v3928 = vpop.f32.mrb[0].mxu0
      %v3929 = vadd.f32 %v513, %v3928
      %3930 = vmatprep.mubr.f32.mxu0 0.0
      %3931 = vmatmul.mubr.f32.gmra.mrb[0].mxu0 %v573
      %v3932 = vpop.f32.mrb[0].mxu0
      %v3933 = vadd.f32 %v518, %v3932
      %v3934 = vpop.f32.mrb[0].mxu0
      %v3935 = vadd.f32 %v518, %v3934
      %3936 = vmatprep.mubr.f32.mxu0 0.0
      %3937 = vmatmul.mubr.f32.gmra.mrb[0].mxu0 %v576
      %v3938 = vpop.f32.mrb[0].mxu0
      %v3939 = vadd.f32 %v523, %v3938
      %v3940 = vpop.f32.mrb[0].mxu0
      %v3941 = vadd.f32 %v523, %v3940
      %3942 = vmatprep.mubr.f32.mxu0 0.0
      %3943 = vmatmul.mubr.f32.gmra.mrb[0].mxu0 %v579
      %v3944 = vpop.f32.mrb[0].mxu0
      %v3945 = vadd.f32 %v528, %v3944
      %v3946 = vpop.f32.mrb[0].mxu0
      %v3947 = vadd.f32 %v528, %v3946
      %3948 = vmatprep.mubr.f32.mxu0 0.0
      %3949 = vmatmul.mubr.f32.gmra.mrb[0].mxu0 %v582
      %v3950 = vpop.f32.mrb[0].mxu0
      %v3951 = vadd.f32 %v533, %v3950
      %v3952 = vpop.f32.mrb[0].mxu0
      %v3953 = vadd.f32 %v533, %v3952
      %3954 = vdwg.mxu0
      %3955 = vmatprep.subr.mxu0 %v264
      %3956 = vmatpush1.msra.mxu0 %v263
      %3957 = vmatprep.subr.mxu0 %v314
      %3958 = vmatpush1.msra.mxu0 %v313
      %3959 = vmatprep.subr.mxu0 %v364
      %3960 = vmatpush1.msra.mxu0 %v363
      %3961 = vmatprep.subr.mxu0 %v709
      %3962 = vmatpush1.msra.mxu0 %v706
      %3963 = vmatprep.subr.mxu0 0.0
      %3964 = vmatpush1.msra.mxu0 0.0
      %3965 = vmatprep.subr.mxu0 0.0
      %3966 = vmatpush1.msra.mxu0 0.0
      %3967 = vmatprep.subr.mxu0 0.0
      %3968 = vmatpush1.msra.mxu0 0.0
      %3969 = vmatprep.subr.mxu0 0.0
      %3970 = vmatpush1.msra.mxu0 0.0
      %3971 = vmatprep.subr.mxu0 0.0
      %3972 = vmatpush1.msra.mxu0 0.0
      %3973 = vmatprep.subr.mxu0 0.0
      %3974 = vmatpush1.msra.mxu0 0.0
      %3975 = vmatprep.subr.mxu0 0.0
      %3976 = vmatpush1.msra.mxu0 0.0
      %3977 = vmatprep.subr.mxu0 0.0
      %3978 = vmatpush1.msra.mxu0 0.0
      %3979 = vmatprep.subr.mxu0 0.0
      %3980 = vmatpush1.msra.mxu0 0.0
      %3981 = vmatprep.subr.mxu0 0.0
      %3982 = vmatpush1.msra.mxu0 0.0
      %3983 = vmatprep.subr.mxu0 0.0
      %3984 = vmatpush1.msra.mxu0 0.0
      %3985 = vmatprep.subr.mxu0 0.0
      %3986 = vmatpush1.msra.mxu0 0.0
      %3987 = vmatprep.subr.mxu0 0.0
      %3988 = vmatpush1.msra.mxu0 0.0
      %3989 = vmatprep.subr.mxu0 0.0
      %3990 = vmatpush1.msra.mxu0 0.0
      %3991 = vmatprep.subr.mxu0 0.0
      %3992 = vmatpush1.msra.mxu0 0.0
      %3993 = vmatprep.subr.mxu0 0.0
      %3994 = vmatpush1.msra.mxu0 0.0
      %3995 = vmatprep.subr.mxu0 0.0
      %3996 = vmatpush1.msra.mxu0 0.0
      %3997 = vmatprep.subr.mxu0 0.0
      %3998 = vmatpush1.msra.mxu0 0.0
      %3999 = vmatprep.subr.mxu0 0.0
      %4000 = vmatpush1.msra.mxu0 0.0
      %4001 = vmatprep.subr.mxu0 0.0
      %4002 = vmatpush1.msra.mxu0 0.0
      %4003 = vmatprep.subr.mxu0 0.0
      %4004 = vmatpush1.msra.mxu0 0.0
      %4005 = vmatprep.subr.mxu0 0.0
      %4006 = vmatpush1.msra.mxu0 0.0
      %4007 = vmatprep.subr.mxu0 0.0
      %4008 = vmatpush1.msra.mxu0 0.0
      %4009 = vmatprep.subr.mxu0 0.0
      %4010 = vmatpush1.msra.mxu0 0.0
      %4011 = vmatprep.subr.mxu0 0.0
      %4012 = vmatpush1.msra.mxu0 0.0
      %4013 = vmatprep.subr.mxu0 0.0
      %4014 = vmatpush1.msra.mxu0 0.0
      %4015 = vmatprep.subr.mxu0 0.0
      %4016 = vmatpush1.msra.mxu0 0.0
      %4017 = vmatprep.subr.mxu0 0.0
      %4018 = vmatpush1.msra.mxu0 0.0
      %4019 = vmatprep.mubr.f32.mxu0 0.0
      %4020 = vmatmul.mubr.f32.gmra.mrb[0].mxu0 %v537
      %v4021 = vpop.f32.mrb[0].mxu0
      %v4022 = vadd.f32 %v458, %v4021
      %v4023 = vpop.f32.mrb[0].mxu0
      %v4024 = vadd.f32 %v458, %v4023
      %4025 = vmatprep.mubr.f32.mxu0 0.0
      %4026 = vmatmul.mubr.f32.gmra.mrb[0].mxu0 %v540
      %v4027 = vpop.f32.mrb[0].mxu0
      %v4028 = vadd.f32 %v463, %v4027
      %v4029 = vpop.f32.mrb[0].mxu0
      %v4030 = vadd.f32 %v463, %v4029
      %4031 = vmatprep.mubr.f32.mxu0 0.0
      %4032 = vmatmul.mubr.f32.gmra.mrb[0].mxu0 %v543
      %v4033 = vpop.f32.mrb[0].mxu0
      %v4034 = vadd.f32 %v468, %v4033
      %v4035 = vpop.f32.mrb[0].mxu0
      %v4036 = vadd.f32 %v468, %v4035
      %4037 = vmatprep.mubr.f32.mxu0 0.0
      %4038 = vmatmul.mubr.f32.gmra.mrb[0].mxu0 %v546
      %v4039 = vpop.f32.mrb[0].mxu0
      %v4040 = vadd.f32 %v473, %v4039
      %v4041 = vpop.f32.mrb[0].mxu0
      %v4042 = vadd.f32 %v473, %v4041
      %4043 = vmatprep.mubr.f32.mxu0 0.0
      %4044 = vmatmul.mubr.f32.gmra.mrb[0].mxu0 %v549
      %v4045 = vpop.f32.mrb[0].mxu0
      %v4046 = vadd.f32 %v478, %v4045
      %v4047 = vpop.f32.mrb[0].mxu0
      %v4048 = vadd.f32 %v478, %v4047
      %4049 = vmatprep.mubr.f32.mxu0 0.0
      %4050 = vmatmul.mubr.f32.gmra.mrb[0].mxu0 %v552
      %v4051 = vpop.f32.mrb[0].mxu0
      %v4052 = vadd.f32 %v483, %v4051
      %v4053 = vpop.f32.mrb[0].mxu0
      %v4054 = vadd.f32 %v483, %v4053
      %4055 = vmatprep.mubr.f32.mxu0 0.0
      %4056 = vmatmul.mubr.f32.gmra.mrb[0].mxu0 %v555
      %v4057 = vpop.f32.mrb[0].mxu0
      %v4058 = vadd.f32 %v488, %v4057
      %v4059 = vpop.f32.mrb[0].mxu0
      %v4060 = vadd.f32 %v488, %v4059
      %4061 = vmatprep.mubr.f32.mxu0 0.0
      %4062 = vmatmul.mubr.f32.gmra.mrb[0].mxu0 %v558
      %v4063 = vpop.f32.mrb[0].mxu0
      %v4064 = vadd.f32 %v493, %v4063
      %v4065 = vpop.f32.mrb[0].mxu0
      %v4066 = vadd.f32 %v493, %v4065
      %4067 = vmatprep.mubr.f32.mxu0 0.0
      %4068 = vmatmul.mubr.f32.gmra.mrb[0].mxu0 %v561
      %v4069 = vpop.f32.mrb[0].mxu0
      %v4070 = vadd.f32 %v498, %v4069
      %v4071 = vpop.f32.mrb[0].mxu0
      %v4072 = vadd.f32 %v498, %v4071
      %4073 = vmatprep.mubr.f32.mxu0 0.0
      %4074 = vmatmul.mubr.f32.gmra.mrb[0].mxu0 %v564
      %v4075 = vpop.f32.mrb[0].mxu0
      %v4076 = vadd.f32 %v503, %v4075
      %v4077 = vpop.f32.mrb[0].mxu0
      %v4078 = vadd.f32 %v503, %v4077
      %4079 = vmatprep.mubr.f32.mxu0 0.0
      %4080 = vmatmul.mubr.f32.gmra.mrb[0].mxu0 %v567
      %v4081 = vpop.f32.mrb[0].mxu0
      %v4082 = vadd.f32 %v508, %v4081
      %v4083 = vpop.f32.mrb[0].mxu0
      %v4084 = vadd.f32 %v508, %v4083
      %4085 = vmatprep.mubr.f32.mxu0 0.0
      %4086 = vmatmul.mubr.f32.gmra.mrb[0].mxu0 %v570
      %v4087 = vpop.f32.mrb[0].mxu0
      %v4088 = vadd.f32 %v513, %v4087
      %v4089 = vpop.f32.mrb[0].mxu0
      %v4090 = vadd.f32 %v513, %v4089
      %4091 = vmatprep.mubr.f32.mxu0 0.0
      %4092 = vmatmul.mubr.f32.gmra.mrb[0].mxu0 %v573
      %v4093 = vpop.f32.mrb[0].mxu0
      %v4094 = vadd.f32 %v518, %v4093
      %v4095 = vpop.f32.mrb[0].mxu0
      %v4096 = vadd.f32 %v518, %v4095
      %4097 = vmatprep.mubr.f32.mxu0 0.0
      %4098 = vmatmul.mubr.f32.gmra.mrb[0].mxu0 %v576
      %v4099 = vpop.f32.mrb[0].mxu0
      %v4100 = vadd.f32 %v523, %v4099
      %v4101 = vpop.f32.mrb[0].mxu0
      %v4102 = vadd.f32 %v523, %v4101
      %4103 = vmatprep.mubr.f32.mxu0 0.0
      %4104 = vmatmul.mubr.f32.gmra.mrb[0].mxu0 %v579
      %v4105 = vpop.f32.mrb[0].mxu0
      %v4106 = vadd.f32 %v528, %v4105
      %v4107 = vpop.f32.mrb[0].mxu0
      %v4108 = vadd.f32 %v528, %v4107
      %4109 = vmatprep.mubr.f32.mxu0 0.0
      %4110 = vmatmul.mubr.f32.gmra.mrb[0].mxu0 %v582
      %v4111 = vpop.f32.mrb[0].mxu0
      %v4112 = vadd.f32 %v533, %v4111
      %v4113 = vpop.f32.mrb[0].mxu0
      %v4114 = vadd.f32 %v533, %v4113
      %4115 = vdwg.mxu0
      %4116 = vmatprep.subr.mxu0 %v266
      %4117 = vmatpush1.msra.mxu0 %v265
      %4118 = vmatprep.subr.mxu0 %v316
      %4119 = vmatpush1.msra.mxu0 %v315
      %4120 = vmatprep.subr.mxu0 %v366
      %4121 = vmatpush1.msra.mxu0 %v365
      %4122 = vmatprep.subr.mxu0 %v715
      %4123 = vmatpush1.msra.mxu0 %v712
      %4124 = vmatprep.subr.mxu0 0.0
      %4125 = vmatpush1.msra.mxu0 0.0
      %4126 = vmatprep.subr.mxu0 0.0
      %4127 = vmatpush1.msra.mxu0 0.0
      %4128 = vmatprep.subr.mxu0 0.0
      %4129 = vmatpush1.msra.mxu0 0.0
      %4130 = vmatprep.subr.mxu0 0.0
      %4131 = vmatpush1.msra.mxu0 0.0
      %4132 = vmatprep.subr.mxu0 0.0
      %4133 = vmatpush1.msra.mxu0 0.0
      %4134 = vmatprep.subr.mxu0 0.0
      %4135 = vmatpush1.msra.mxu0 0.0
      %4136 = vmatprep.subr.mxu0 0.0
      %4137 = vmatpush1.msra.mxu0 0.0
      %4138 = vmatprep.subr.mxu0 0.0
      %4139 = vmatpush1.msra.mxu0 0.0
      %4140 = vmatprep.subr.mxu0 0.0
      %4141 = vmatpush1.msra.mxu0 0.0
      %4142 = vmatprep.subr.mxu0 0.0
      %4143 = vmatpush1.msra.mxu0 0.0
      %4144 = vmatprep.subr.mxu0 0.0
      %4145 = vmatpush1.msra.mxu0 0.0
      %4146 = vmatprep.subr.mxu0 0.0
      %4147 = vmatpush1.msra.mxu0 0.0
      %4148 = vmatprep.subr.mxu0 0.0
      %4149 = vmatpush1.msra.mxu0 0.0
      %4150 = vmatprep.subr.mxu0 0.0
      %4151 = vmatpush1.msra.mxu0 0.0
      %4152 = vmatprep.subr.mxu0 0.0
      %4153 = vmatpush1.msra.mxu0 0.0
      %4154 = vmatprep.subr.mxu0 0.0
      %4155 = vmatpush1.msra.mxu0 0.0
      %4156 = vmatprep.subr.mxu0 0.0
      %4157 = vmatpush1.msra.mxu0 0.0
      %4158 = vmatprep.subr.mxu0 0.0
      %4159 = vmatpush1.msra.mxu0 0.0
      %4160 = vmatprep.subr.mxu0 0.0
      %4161 = vmatpush1.msra.mxu0 0.0
      %4162 = vmatprep.subr.mxu0 0.0
      %4163 = vmatpush1.msra.mxu0 0.0
      %4164 = vmatprep.subr.mxu0 0.0
      %4165 = vmatpush1.msra.mxu0 0.0
      %4166 = vmatprep.subr.mxu0 0.0
      %4167 = vmatpush1.msra.mxu0 0.0
      %4168 = vmatprep.subr.mxu0 0.0
      %4169 = vmatpush1.msra.mxu0 0.0
      %4170 = vmatprep.subr.mxu0 0.0
      %4171 = vmatpush1.msra.mxu0 0.0
      %4172 = vmatprep.subr.mxu0 0.0
      %4173 = vmatpush1.msra.mxu0 0.0
      %4174 = vmatprep.subr.mxu0 0.0
      %4175 = vmatpush1.msra.mxu0 0.0
      %4176 = vmatprep.subr.mxu0 0.0
      %4177 = vmatpush1.msra.mxu0 0.0
      %4178 = vmatprep.subr.mxu0 0.0
      %4179 = vmatpush1.msra.mxu0 0.0
      %4180 = vmatprep.mubr.f32.mxu0 0.0
      %4181 = vmatmul.mubr.f32.gmra.mrb[0].mxu0 %v537
      %v4182 = vpop.f32.mrb[0].mxu0
      %v4183 = vadd.f32 %v458, %v4182
      %v4184 = vpop.f32.mrb[0].mxu0
      %v4185 = vadd.f32 %v458, %v4184
      %4186 = vmatprep.mubr.f32.mxu0 0.0
      %4187 = vmatmul.mubr.f32.gmra.mrb[0].mxu0 %v540
      %v4188 = vpop.f32.mrb[0].mxu0
      %v4189 = vadd.f32 %v463, %v4188
      %v4190 = vpop.f32.mrb[0].mxu0
      %v4191 = vadd.f32 %v463, %v4190
      %4192 = vmatprep.mubr.f32.mxu0 0.0
      %4193 = vmatmul.mubr.f32.gmra.mrb[0].mxu0 %v543
      %v4194 = vpop.f32.mrb[0].mxu0
      %v4195 = vadd.f32 %v468, %v4194
      %v4196 = vpop.f32.mrb[0].mxu0
      %v4197 = vadd.f32 %v468, %v4196
      %4198 = vmatprep.mubr.f32.mxu0 0.0
      %4199 = vmatmul.mubr.f32.gmra.mrb[0].mxu0 %v546
      %v4200 = vpop.f32.mrb[0].mxu0
      %v4201 = vadd.f32 %v473, %v4200
      %v4202 = vpop.f32.mrb[0].mxu0
      %v4203 = vadd.f32 %v473, %v4202
      %4204 = vmatprep.mubr.f32.mxu0 0.0
      %4205 = vmatmul.mubr.f32.gmra.mrb[0].mxu0 %v549
      %v4206 = vpop.f32.mrb[0].mxu0
      %v4207 = vadd.f32 %v478, %v4206
      %v4208 = vpop.f32.mrb[0].mxu0
      %v4209 = vadd.f32 %v478, %v4208
      %4210 = vmatprep.mubr.f32.mxu0 0.0
      %4211 = vmatmul.mubr.f32.gmra.mrb[0].mxu0 %v552
      %v4212 = vpop.f32.mrb[0].mxu0
      %v4213 = vadd.f32 %v483, %v4212
      %v4214 = vpop.f32.mrb[0].mxu0
      %v4215 = vadd.f32 %v483, %v4214
      %4216 = vmatprep.mubr.f32.mxu0 0.0
      %4217 = vmatmul.mubr.f32.gmra.mrb[0].mxu0 %v555
      %v4218 = vpop.f32.mrb[0].mxu0
      %v4219 = vadd.f32 %v488, %v4218
      %v4220 = vpop.f32.mrb[0].mxu0
      %v4221 = vadd.f32 %v488, %v4220
      %4222 = vmatprep.mubr.f32.mxu0 0.0
      %4223 = vmatmul.mubr.f32.gmra.mrb[0].mxu0 %v558
      %v4224 = vpop.f32.mrb[0].mxu0
      %v4225 = vadd.f32 %v493, %v4224
      %v4226 = vpop.f32.mrb[0].mxu0
      %v4227 = vadd.f32 %v493, %v4226
      %4228 = vmatprep.mubr.f32.mxu0 0.0
      %4229 = vmatmul.mubr.f32.gmra.mrb[0].mxu0 %v561
      %v4230 = vpop.f32.mrb[0].mxu0
      %v4231 = vadd.f32 %v498, %v4230
      %v4232 = vpop.f32.mrb[0].mxu0
      %v4233 = vadd.f32 %v498, %v4232
      %4234 = vmatprep.mubr.f32.mxu0 0.0
      %4235 = vmatmul.mubr.f32.gmra.mrb[0].mxu0 %v564
      %v4236 = vpop.f32.mrb[0].mxu0
      %v4237 = vadd.f32 %v503, %v4236
      %v4238 = vpop.f32.mrb[0].mxu0
      %v4239 = vadd.f32 %v503, %v4238
      %4240 = vmatprep.mubr.f32.mxu0 0.0
      %4241 = vmatmul.mubr.f32.gmra.mrb[0].mxu0 %v567
      %v4242 = vpop.f32.mrb[0].mxu0
      %v4243 = vadd.f32 %v508, %v4242
      %v4244 = vpop.f32.mrb[0].mxu0
      %v4245 = vadd.f32 %v508, %v4244
      %4246 = vmatprep.mubr.f32.mxu0 0.0
      %4247 = vmatmul.mubr.f32.gmra.mrb[0].mxu0 %v570
      %v4248 = vpop.f32.mrb[0].mxu0
      %v4249 = vadd.f32 %v513, %v4248
      %v4250 = vpop.f32.mrb[0].mxu0
      %v4251 = vadd.f32 %v513, %v4250
      %4252 = vmatprep.mubr.f32.mxu0 0.0
      %4253 = vmatmul.mubr.f32.gmra.mrb[0].mxu0 %v573
      %v4254 = vpop.f32.mrb[0].mxu0
      %v4255 = vadd.f32 %v518, %v4254
      %v4256 = vpop.f32.mrb[0].mxu0
      %v4257 = vadd.f32 %v518, %v4256
      %4258 = vmatprep.mubr.f32.mxu0 0.0
      %4259 = vmatmul.mubr.f32.gmra.mrb[0].mxu0 %v576
      %v4260 = vpop.f32.mrb[0].mxu0
      %v4261 = vadd.f32 %v523, %v4260
      %v4262 = vpop.f32.mrb[0].mxu0
      %v4263 = vadd.f32 %v523, %v4262
      %4264 = vmatprep.mubr.f32.mxu0 0.0
      %4265 = vmatmul.mubr.f32.gmra.mrb[0].mxu0 %v579
      %v4266 = vpop.f32.mrb[0].mxu0
      %v4267 = vadd.f32 %v528, %v4266
      %v4268 = vpop.f32.mrb[0].mxu0
      %v4269 = vadd.f32 %v528, %v4268
      %4270 = vmatprep.mubr.f32.mxu0 0.0
      %4271 = vmatmul.mubr.f32.gmra.mrb[0].mxu0 %v582
      %v4272 = vpop.f32.mrb[0].mxu0
      %v4273 = vadd.f32 %v533, %v4272
      %v4274 = vpop.f32.mrb[0].mxu0
      %v4275 = vadd.f32 %v533, %v4274
      %4276 = vdwg.mxu0
      %4277 = vmatprep.subr.mxu0 %v268
      %4278 = vmatpush1.msra.mxu0 %v267
      %4279 = vmatprep.subr.mxu0 %v318
      %4280 = vmatpush1.msra.mxu0 %v317
      %4281 = vmatprep.subr.mxu0 %v368
      %4282 = vmatpush1.msra.mxu0 %v367
      %4283 = vmatprep.subr.mxu0 %v721
      %4284 = vmatpush1.msra.mxu0 %v718
      %4285 = vmatprep.subr.mxu0 0.0
      %4286 = vmatpush1.msra.mxu0 0.0
      %4287 = vmatprep.subr.mxu0 0.0
      %4288 = vmatpush1.msra.mxu0 0.0
      %4289 = vmatprep.subr.mxu0 0.0
      %4290 = vmatpush1.msra.mxu0 0.0
      %4291 = vmatprep.subr.mxu0 0.0
      %4292 = vmatpush1.msra.mxu0 0.0
      %4293 = vmatprep.subr.mxu0 0.0
      %4294 = vmatpush1.msra.mxu0 0.0
      %4295 = vmatprep.subr.mxu0 0.0
      %4296 = vmatpush1.msra.mxu0 0.0
      %4297 = vmatprep.subr.mxu0 0.0
      %4298 = vmatpush1.msra.mxu0 0.0
      %4299 = vmatprep.subr.mxu0 0.0
      %4300 = vmatpush1.msra.mxu0 0.0
      %4301 = vmatprep.subr.mxu0 0.0
      %4302 = vmatpush1.msra.mxu0 0.0
      %4303 = vmatprep.subr.mxu0 0.0
      %4304 = vmatpush1.msra.mxu0 0.0
      %4305 = vmatprep.subr.mxu0 0.0
      %4306 = vmatpush1.msra.mxu0 0.0
      %4307 = vmatprep.subr.mxu0 0.0
      %4308 = vmatpush1.msra.mxu0 0.0
      %4309 = vmatprep.subr.mxu0 0.0
      %4310 = vmatpush1.msra.mxu0 0.0
      %4311 = vmatprep.subr.mxu0 0.0
      %4312 = vmatpush1.msra.mxu0 0.0
      %4313 = vmatprep.subr.mxu0 0.0
      %4314 = vmatpush1.msra.mxu0 0.0
      %4315 = vmatprep.subr.mxu0 0.0
      %4316 = vmatpush1.msra.mxu0 0.0
      %4317 = vmatprep.subr.mxu0 0.0
      %4318 = vmatpush1.msra.mxu0 0.0
      %4319 = vmatprep.subr.mxu0 0.0
      %4320 = vmatpush1.msra.mxu0 0.0
      %4321 = vmatprep.subr.mxu0 0.0
      %4322 = vmatpush1.msra.mxu0 0.0
      %4323 = vmatprep.subr.mxu0 0.0
      %4324 = vmatpush1.msra.mxu0 0.0
      %4325 = vmatprep.subr.mxu0 0.0
      %4326 = vmatpush1.msra.mxu0 0.0
      %4327 = vmatprep.subr.mxu0 0.0
      %4328 = vmatpush1.msra.mxu0 0.0
      %4329 = vmatprep.subr.mxu0 0.0
      %4330 = vmatpush1.msra.mxu0 0.0
      %4331 = vmatprep.subr.mxu0 0.0
      %4332 = vmatpush1.msra.mxu0 0.0
      %4333 = vmatprep.subr.mxu0 0.0
      %4334 = vmatpush1.msra.mxu0 0.0
      %4335 = vmatprep.subr.mxu0 0.0
      %4336 = vmatpush1.msra.mxu0 0.0
      %4337 = vmatprep.subr.mxu0 0.0
      %4338 = vmatpush1.msra.mxu0 0.0
      %4339 = vmatprep.subr.mxu0 0.0
      %4340 = vmatpush1.msra.mxu0 0.0
      %4341 = vmatprep.mubr.f32.mxu0 0.0
      %4342 = vmatmul.mubr.f32.gmra.mrb[0].mxu0 %v537
      %v4343 = vpop.f32.mrb[0].mxu0
      %v4344 = vadd.f32 %v458, %v4343
      %v4345 = vpop.f32.mrb[0].mxu0
      %v4346 = vadd.f32 %v458, %v4345
      %4347 = vmatprep.mubr.f32.mxu0 0.0
      %4348 = vmatmul.mubr.f32.gmra.mrb[0].mxu0 %v540
      %v4349 = vpop.f32.mrb[0].mxu0
      %v4350 = vadd.f32 %v463, %v4349
      %v4351 = vpop.f32.mrb[0].mxu0
      %v4352 = vadd.f32 %v463, %v4351
      %4353 = vmatprep.mubr.f32.mxu0 0.0
      %4354 = vmatmul.mubr.f32.gmra.mrb[0].mxu0 %v543
      %v4355 = vpop.f32.mrb[0].mxu0
      %v4356 = vadd.f32 %v468, %v4355
      %v4357 = vpop.f32.mrb[0].mxu0
      %v4358 = vadd.f32 %v468, %v4357
      %4359 = vmatprep.mubr.f32.mxu0 0.0
      %4360 = vmatmul.mubr.f32.gmra.mrb[0].mxu0 %v546
      %v4361 = vpop.f32.mrb[0].mxu0
      %v4362 = vadd.f32 %v473, %v4361
      %v4363 = vpop.f32.mrb[0].mxu0
      %v4364 = vadd.f32 %v473, %v4363
      %4365 = vmatprep.mubr.f32.mxu0 0.0
      %4366 = vmatmul.mubr.f32.gmra.mrb[0].mxu0 %v549
      %v4367 = vpop.f32.mrb[0].mxu0
      %v4368 = vadd.f32 %v478, %v4367
      %v4369 = vpop.f32.mrb[0].mxu0
      %v4370 = vadd.f32 %v478, %v4369
      %4371 = vmatprep.mubr.f32.mxu0 0.0
      %4372 = vmatmul.mubr.f32.gmra.mrb[0].mxu0 %v552
      %v4373 = vpop.f32.mrb[0].mxu0
      %v4374 = vadd.f32 %v483, %v4373
      %v4375 = vpop.f32.mrb[0].mxu0
      %v4376 = vadd.f32 %v483, %v4375
      %4377 = vmatprep.mubr.f32.mxu0 0.0
      %4378 = vmatmul.mubr.f32.gmra.mrb[0].mxu0 %v555
      %v4379 = vpop.f32.mrb[0].mxu0
      %v4380 = vadd.f32 %v488, %v4379
      %v4381 = vpop.f32.mrb[0].mxu0
      %v4382 = vadd.f32 %v488, %v4381
      %4383 = vmatprep.mubr.f32.mxu0 0.0
      %4384 = vmatmul.mubr.f32.gmra.mrb[0].mxu0 %v558
      %v4385 = vpop.f32.mrb[0].mxu0
      %v4386 = vadd.f32 %v493, %v4385
      %v4387 = vpop.f32.mrb[0].mxu0
      %v4388 = vadd.f32 %v493, %v4387
      %4389 = vmatprep.mubr.f32.mxu0 0.0
      %4390 = vmatmul.mubr.f32.gmra.mrb[0].mxu0 %v561
      %v4391 = vpop.f32.mrb[0].mxu0
      %v4392 = vadd.f32 %v498, %v4391
      %v4393 = vpop.f32.mrb[0].mxu0
      %v4394 = vadd.f32 %v498, %v4393
      %4395 = vmatprep.mubr.f32.mxu0 0.0
      %4396 = vmatmul.mubr.f32.gmra.mrb[0].mxu0 %v564
      %v4397 = vpop.f32.mrb[0].mxu0
      %v4398 = vadd.f32 %v503, %v4397
      %v4399 = vpop.f32.mrb[0].mxu0
      %v4400 = vadd.f32 %v503, %v4399
      %4401 = vmatprep.mubr.f32.mxu0 0.0
      %4402 = vmatmul.mubr.f32.gmra.mrb[0].mxu0 %v567
      %v4403 = vpop.f32.mrb[0].mxu0
      %v4404 = vadd.f32 %v508, %v4403
      %v4405 = vpop.f32.mrb[0].mxu0
      %v4406 = vadd.f32 %v508, %v4405
      %4407 = vmatprep.mubr.f32.mxu0 0.0
      %4408 = vmatmul.mubr.f32.gmra.mrb[0].mxu0 %v570
      %v4409 = vpop.f32.mrb[0].mxu0
      %v4410 = vadd.f32 %v513, %v4409
      %v4411 = vpop.f32.mrb[0].mxu0
      %v4412 = vadd.f32 %v513, %v4411
      %4413 = vmatprep.mubr.f32.mxu0 0.0
      %4414 = vmatmul.mubr.f32.gmra.mrb[0].mxu0 %v573
      %v4415 = vpop.f32.mrb[0].mxu0
      %v4416 = vadd.f32 %v518, %v4415
      %v4417 = vpop.f32.mrb[0].mxu0
      %v4418 = vadd.f32 %v518, %v4417
      %4419 = vmatprep.mubr.f32.mxu0 0.0
      %4420 = vmatmul.mubr.f32.gmra.mrb[0].mxu0 %v576
      %v4421 = vpop.f32.mrb[0].mxu0
      %v4422 = vadd.f32 %v523, %v4421
      %v4423 = vpop.f32.mrb[0].mxu0
      %v4424 = vadd.f32 %v523, %v4423
      %4425 = vmatprep.mubr.f32.mxu0 0.0
      %4426 = vmatmul.mubr.f32.gmra.mrb[0].mxu0 %v579
      %v4427 = vpop.f32.mrb[0].mxu0
      %v4428 = vadd.f32 %v528, %v4427
      %v4429 = vpop.f32.mrb[0].mxu0
      %v4430 = vadd.f32 %v528, %v4429
      %4431 = vmatprep.mubr.f32.mxu0 0.0
      %4432 = vmatmul.mubr.f32.gmra.mrb[0].mxu0 %v582
      %v4433 = vpop.f32.mrb[0].mxu0
      %v4434 = vadd.f32 %v533, %v4433
      %v4435 = vpop.f32.mrb[0].mxu0
      %v4436 = vadd.f32 %v533, %v4435
      %4437 = vdwg.mxu0
      %4438 = vmatprep.subr.mxu0 %v270
      %4439 = vmatpush1.msra.mxu0 %v269
      %4440 = vmatprep.subr.mxu0 %v320
      %4441 = vmatpush1.msra.mxu0 %v319
      %4442 = vmatprep.subr.mxu0 %v370
      %4443 = vmatpush1.msra.mxu0 %v369
      %4444 = vmatprep.subr.mxu0 %v727
      %4445 = vmatpush1.msra.mxu0 %v724
      %4446 = vmatprep.subr.mxu0 0.0
      %4447 = vmatpush1.msra.mxu0 0.0
      %4448 = vmatprep.subr.mxu0 0.0
      %4449 = vmatpush1.msra.mxu0 0.0
      %4450 = vmatprep.subr.mxu0 0.0
      %4451 = vmatpush1.msra.mxu0 0.0
      %4452 = vmatprep.subr.mxu0 0.0
      %4453 = vmatpush1.msra.mxu0 0.0
      %4454 = vmatprep.subr.mxu0 0.0
      %4455 = vmatpush1.msra.mxu0 0.0
      %4456 = vmatprep.subr.mxu0 0.0
      %4457 = vmatpush1.msra.mxu0 0.0
      %4458 = vmatprep.subr.mxu0 0.0
      %4459 = vmatpush1.msra.mxu0 0.0
      %4460 = vmatprep.subr.mxu0 0.0
      %4461 = vmatpush1.msra.mxu0 0.0
      %4462 = vmatprep.subr.mxu0 0.0
      %4463 = vmatpush1.msra.mxu0 0.0
      %4464 = vmatprep.subr.mxu0 0.0
      %4465 = vmatpush1.msra.mxu0 0.0
      %4466 = vmatprep.subr.mxu0 0.0
      %4467 = vmatpush1.msra.mxu0 0.0
      %4468 = vmatprep.subr.mxu0 0.0
      %4469 = vmatpush1.msra.mxu0 0.0
      %4470 = vmatprep.subr.mxu0 0.0
      %4471 = vmatpush1.msra.mxu0 0.0
      %4472 = vmatprep.subr.mxu0 0.0
      %4473 = vmatpush1.msra.mxu0 0.0
      %4474 = vmatprep.subr.mxu0 0.0
      %4475 = vmatpush1.msra.mxu0 0.0
      %4476 = vmatprep.subr.mxu0 0.0
      %4477 = vmatpush1.msra.mxu0 0.0
      %4478 = vmatprep.subr.mxu0 0.0
      %4479 = vmatpush1.msra.mxu0 0.0
      %4480 = vmatprep.subr.mxu0 0.0
      %4481 = vmatpush1.msra.mxu0 0.0
      %4482 = vmatprep.subr.mxu0 0.0
      %4483 = vmatpush1.msra.mxu0 0.0
      %4484 = vmatprep.subr.mxu0 0.0
      %4485 = vmatpush1.msra.mxu0 0.0
      %4486 = vmatprep.subr.mxu0 0.0
      %4487 = vmatpush1.msra.mxu0 0.0
      %4488 = vmatprep.subr.mxu0 0.0
      %4489 = vmatpush1.msra.mxu0 0.0
      %4490 = vmatprep.subr.mxu0 0.0
      %4491 = vmatpush1.msra.mxu0 0.0
      %4492 = vmatprep.subr.mxu0 0.0
      %4493 = vmatpush1.msra.mxu0 0.0
      %4494 = vmatprep.subr.mxu0 0.0
      %4495 = vmatpush1.msra.mxu0 0.0
      %4496 = vmatprep.subr.mxu0 0.0
      %4497 = vmatpush1.msra.mxu0 0.0
      %4498 = vmatprep.subr.mxu0 0.0
      %4499 = vmatpush1.msra.mxu0 0.0
      %4500 = vmatprep.subr.mxu0 0.0
      %4501 = vmatpush1.msra.mxu0 0.0
      %4502 = vmatprep.mubr.f32.mxu0 0.0
      %4503 = vmatmul.mubr.f32.gmra.mrb[0].mxu0 %v537
      %v4504 = vpop.f32.mrb[0].mxu0
      %v4505 = vadd.f32 %v458, %v4504
      %v4506 = vpop.f32.mrb[0].mxu0
      %v4507 = vadd.f32 %v458, %v4506
      %4508 = vmatprep.mubr.f32.mxu0 0.0
      %4509 = vmatmul.mubr.f32.gmra.mrb[0].mxu0 %v540
      %v4510 = vpop.f32.mrb[0].mxu0
      %v4511 = vadd.f32 %v463, %v4510
      %v4512 = vpop.f32.mrb[0].mxu0
      %v4513 = vadd.f32 %v463, %v4512
      %4514 = vmatprep.mubr.f32.mxu0 0.0
      %4515 = vmatmul.mubr.f32.gmra.mrb[0].mxu0 %v543
      %v4516 = vpop.f32.mrb[0].mxu0
      %v4517 = vadd.f32 %v468, %v4516
      %v4518 = vpop.f32.mrb[0].mxu0
      %v4519 = vadd.f32 %v468, %v4518
      %4520 = vmatprep.mubr.f32.mxu0 0.0
      %4521 = vmatmul.mubr.f32.gmra.mrb[0].mxu0 %v546
      %v4522 = vpop.f32.mrb[0].mxu0
      %v4523 = vadd.f32 %v473, %v4522
      %v4524 = vpop.f32.mrb[0].mxu0
      %v4525 = vadd.f32 %v473, %v4524
      %4526 = vmatprep.mubr.f32.mxu0 0.0
      %4527 = vmatmul.mubr.f32.gmra.mrb[0].mxu0 %v549
      %v4528 = vpop.f32.mrb[0].mxu0
      %v4529 = vadd.f32 %v478, %v4528
      %v4530 = vpop.f32.mrb[0].mxu0
      %v4531 = vadd.f32 %v478, %v4530
      %4532 = vmatprep.mubr.f32.mxu0 0.0
      %4533 = vmatmul.mubr.f32.gmra.mrb[0].mxu0 %v552
      %v4534 = vpop.f32.mrb[0].mxu0
      %v4535 = vadd.f32 %v483, %v4534
      %v4536 = vpop.f32.mrb[0].mxu0
      %v4537 = vadd.f32 %v483, %v4536
      %4538 = vmatprep.mubr.f32.mxu0 0.0
      %4539 = vmatmul.mubr.f32.gmra.mrb[0].mxu0 %v555
      %v4540 = vpop.f32.mrb[0].mxu0
      %v4541 = vadd.f32 %v488, %v4540
      %v4542 = vpop.f32.mrb[0].mxu0
      %v4543 = vadd.f32 %v488, %v4542
      %4544 = vmatprep.mubr.f32.mxu0 0.0
      %4545 = vmatmul.mubr.f32.gmra.mrb[0].mxu0 %v558
      %v4546 = vpop.f32.mrb[0].mxu0
      %v4547 = vadd.f32 %v493, %v4546
      %v4548 = vpop.f32.mrb[0].mxu0
      %v4549 = vadd.f32 %v493, %v4548
      %4550 = vmatprep.mubr.f32.mxu0 0.0
      %4551 = vmatmul.mubr.f32.gmra.mrb[0].mxu0 %v561
      %v4552 = vpop.f32.mrb[0].mxu0
      %v4553 = vadd.f32 %v498, %v4552
      %v4554 = vpop.f32.mrb[0].mxu0
      %v4555 = vadd.f32 %v498, %v4554
      %4556 = vmatprep.mubr.f32.mxu0 0.0
      %4557 = vmatmul.mubr.f32.gmra.mrb[0].mxu0 %v564
      %v4558 = vpop.f32.mrb[0].mxu0
      %v4559 = vadd.f32 %v503, %v4558
      %v4560 = vpop.f32.mrb[0].mxu0
      %v4561 = vadd.f32 %v503, %v4560
      %4562 = vmatprep.mubr.f32.mxu0 0.0
      %4563 = vmatmul.mubr.f32.gmra.mrb[0].mxu0 %v567
      %v4564 = vpop.f32.mrb[0].mxu0
      %v4565 = vadd.f32 %v508, %v4564
      %v4566 = vpop.f32.mrb[0].mxu0
      %v4567 = vadd.f32 %v508, %v4566
      %4568 = vmatprep.mubr.f32.mxu0 0.0
      %4569 = vmatmul.mubr.f32.gmra.mrb[0].mxu0 %v570
      %v4570 = vpop.f32.mrb[0].mxu0
      %v4571 = vadd.f32 %v513, %v4570
      %v4572 = vpop.f32.mrb[0].mxu0
      %v4573 = vadd.f32 %v513, %v4572
      %4574 = vmatprep.mubr.f32.mxu0 0.0
      %4575 = vmatmul.mubr.f32.gmra.mrb[0].mxu0 %v573
      %v4576 = vpop.f32.mrb[0].mxu0
      %v4577 = vadd.f32 %v518, %v4576
      %v4578 = vpop.f32.mrb[0].mxu0
      %v4579 = vadd.f32 %v518, %v4578
      %4580 = vmatprep.mubr.f32.mxu0 0.0
      %4581 = vmatmul.mubr.f32.gmra.mrb[0].mxu0 %v576
      %v4582 = vpop.f32.mrb[0].mxu0
      %v4583 = vadd.f32 %v523, %v4582
      %v4584 = vpop.f32.mrb[0].mxu0
      %v4585 = vadd.f32 %v523, %v4584
      %4586 = vmatprep.mubr.f32.mxu0 0.0
      %4587 = vmatmul.mubr.f32.gmra.mrb[0].mxu0 %v579
      %v4588 = vpop.f32.mrb[0].mxu0
      %v4589 = vadd.f32 %v528, %v4588
      %v4590 = vpop.f32.mrb[0].mxu0
      %v4591 = vadd.f32 %v528, %v4590
      %4592 = vmatprep.mubr.f32.mxu0 0.0
      %4593 = vmatmul.mubr.f32.gmra.mrb[0].mxu0 %v582
      %v4594 = vpop.f32.mrb[0].mxu0
      %v4595 = vadd.f32 %v533, %v4594
      %v4596 = vpop.f32.mrb[0].mxu0
      %v4597 = vadd.f32 %v533, %v4596
      %4598 = vdwg.mxu0
      %4599 = vmatprep.subr.mxu0 %v272
      %4600 = vmatpush1.msra.mxu0 %v271
      %4601 = vmatprep.subr.mxu0 %v322
      %4602 = vmatpush1.msra.mxu0 %v321
      %4603 = vmatprep.subr.mxu0 %v372
      %4604 = vmatpush1.msra.mxu0 %v371
      %4605 = vmatprep.subr.mxu0 %v733
      %4606 = vmatpush1.msra.mxu0 %v730
      %4607 = vmatprep.subr.mxu0 0.0
      %4608 = vmatpush1.msra.mxu0 0.0
      %4609 = vmatprep.subr.mxu0 0.0
      %4610 = vmatpush1.msra.mxu0 0.0
      %4611 = vmatprep.subr.mxu0 0.0
      %4612 = vmatpush1.msra.mxu0 0.0
      %4613 = vmatprep.subr.mxu0 0.0
      %4614 = vmatpush1.msra.mxu0 0.0
      %4615 = vmatprep.subr.mxu0 0.0
      %4616 = vmatpush1.msra.mxu0 0.0
      %4617 = vmatprep.subr.mxu0 0.0
      %4618 = vmatpush1.msra.mxu0 0.0
      %4619 = vmatprep.subr.mxu0 0.0
      %4620 = vmatpush1.msra.mxu0 0.0
      %4621 = vmatprep.subr.mxu0 0.0
      %4622 = vmatpush1.msra.mxu0 0.0
      %4623 = vmatprep.subr.mxu0 0.0
      %4624 = vmatpush1.msra.mxu0 0.0
      %4625 = vmatprep.subr.mxu0 0.0
      %4626 = vmatpush1.msra.mxu0 0.0
      %4627 = vmatprep.subr.mxu0 0.0
      %4628 = vmatpush1.msra.mxu0 0.0
      %4629 = vmatprep.subr.mxu0 0.0
      %4630 = vmatpush1.msra.mxu0 0.0
      %4631 = vmatprep.subr.mxu0 0.0
      %4632 = vmatpush1.msra.mxu0 0.0
      %4633 = vmatprep.subr.mxu0 0.0
      %4634 = vmatpush1.msra.mxu0 0.0
      %4635 = vmatprep.subr.mxu0 0.0
      %4636 = vmatpush1.msra.mxu0 0.0
      %4637 = vmatprep.subr.mxu0 0.0
      %4638 = vmatpush1.msra.mxu0 0.0
      %4639 = vmatprep.subr.mxu0 0.0
      %4640 = vmatpush1.msra.mxu0 0.0
      %4641 = vmatprep.subr.mxu0 0.0
      %4642 = vmatpush1.msra.mxu0 0.0
      %4643 = vmatprep.subr.mxu0 0.0
      %4644 = vmatpush1.msra.mxu0 0.0
      %4645 = vmatprep.subr.mxu0 0.0
      %4646 = vmatpush1.msra.mxu0 0.0
      %4647 = vmatprep.subr.mxu0 0.0
      %4648 = vmatpush1.msra.mxu0 0.0
      %4649 = vmatprep.subr.mxu0 0.0
      %4650 = vmatpush1.msra.mxu0 0.0
      %4651 = vmatprep.subr.mxu0 0.0
      %4652 = vmatpush1.msra.mxu0 0.0
      %4653 = vmatprep.subr.mxu0 0.0
      %4654 = vmatpush1.msra.mxu0 0.0
      %4655 = vmatprep.subr.mxu0 0.0
      %4656 = vmatpush1.msra.mxu0 0.0
      %4657 = vmatprep.subr.mxu0 0.0
      %4658 = vmatpush1.msra.mxu0 0.0
      %4659 = vmatprep.subr.mxu0 0.0
      %4660 = vmatpush1.msra.mxu0 0.0
      %4661 = vmatprep.subr.mxu0 0.0
      %4662 = vmatpush1.msra.mxu0 0.0
      %4663 = vmatprep.mubr.f32.mxu0 0.0
      %4664 = vmatmul.mubr.f32.gmra.mrb[0].mxu0 %v537
      %v4665 = vpop.f32.mrb[0].mxu0
      %v4666 = vadd.f32 %v458, %v4665
      %v4667 = vpop.f32.mrb[0].mxu0
      %v4668 = vadd.f32 %v458, %v4667
      %4669 = vmatprep.mubr.f32.mxu0 0.0
      %4670 = vmatmul.mubr.f32.gmra.mrb[0].mxu0 %v540
      %v4671 = vpop.f32.mrb[0].mxu0
      %v4672 = vadd.f32 %v463, %v4671
      %v4673 = vpop.f32.mrb[0].mxu0
      %v4674 = vadd.f32 %v463, %v4673
      %4675 = vmatprep.mubr.f32.mxu0 0.0
      %4676 = vmatmul.mubr.f32.gmra.mrb[0].mxu0 %v543
      %v4677 = vpop.f32.mrb[0].mxu0
      %v4678 = vadd.f32 %v468, %v4677
      %v4679 = vpop.f32.mrb[0].mxu0
      %v4680 = vadd.f32 %v468, %v4679
      %4681 = vmatprep.mubr.f32.mxu0 0.0
      %4682 = vmatmul.mubr.f32.gmra.mrb[0].mxu0 %v546
      %v4683 = vpop.f32.mrb[0].mxu0
      %v4684 = vadd.f32 %v473, %v4683
      %v4685 = vpop.f32.mrb[0].mxu0
      %v4686 = vadd.f32 %v473, %v4685
      %4687 = vmatprep.mubr.f32.mxu0 0.0
      %4688 = vmatmul.mubr.f32.gmra.mrb[0].mxu0 %v549
      %v4689 = vpop.f32.mrb[0].mxu0
      %v4690 = vadd.f32 %v478, %v4689
      %v4691 = vpop.f32.mrb[0].mxu0
      %v4692 = vadd.f32 %v478, %v4691
      %4693 = vmatprep.mubr.f32.mxu0 0.0
      %4694 = vmatmul.mubr.f32.gmra.mrb[0].mxu0 %v552
      %v4695 = vpop.f32.mrb[0].mxu0
      %v4696 = vadd.f32 %v483, %v4695
      %v4697 = vpop.f32.mrb[0].mxu0
      %v4698 = vadd.f32 %v483, %v4697
      %4699 = vmatprep.mubr.f32.mxu0 0.0
      %4700 = vmatmul.mubr.f32.gmra.mrb[0].mxu0 %v555
      %v4701 = vpop.f32.mrb[0].mxu0
      %v4702 = vadd.f32 %v488, %v4701
      %v4703 = vpop.f32.mrb[0].mxu0
      %v4704 = vadd.f32 %v488, %v4703
      %4705 = vmatprep.mubr.f32.mxu0 0.0
      %4706 = vmatmul.mubr.f32.gmra.mrb[0].mxu0 %v558
      %v4707 = vpop.f32.mrb[0].mxu0
      %v4708 = vadd.f32 %v493, %v4707
      %v4709 = vpop.f32.mrb[0].mxu0
      %v4710 = vadd.f32 %v493, %v4709
      %4711 = vmatprep.mubr.f32.mxu0 0.0
      %4712 = vmatmul.mubr.f32.gmra.mrb[0].mxu0 %v561
      %v4713 = vpop.f32.mrb[0].mxu0
      %v4714 = vadd.f32 %v498, %v4713
      %v4715 = vpop.f32.mrb[0].mxu0
      %v4716 = vadd.f32 %v498, %v4715
      %4717 = vmatprep.mubr.f32.mxu0 0.0
      %4718 = vmatmul.mubr.f32.gmra.mrb[0].mxu0 %v564
      %v4719 = vpop.f32.mrb[0].mxu0
      %v4720 = vadd.f32 %v503, %v4719
      %v4721 = vpop.f32.mrb[0].mxu0
      %v4722 = vadd.f32 %v503, %v4721
      %4723 = vmatprep.mubr.f32.mxu0 0.0
      %4724 = vmatmul.mubr.f32.gmra.mrb[0].mxu0 %v567
      %v4725 = vpop.f32.mrb[0].mxu0
      %v4726 = vadd.f32 %v508, %v4725
      %v4727 = vpop.f32.mrb[0].mxu0
      %v4728 = vadd.f32 %v508, %v4727
      %4729 = vmatprep.mubr.f32.mxu0 0.0
      %4730 = vmatmul.mubr.f32.gmra.mrb[0].mxu0 %v570
      %v4731 = vpop.f32.mrb[0].mxu0
      %v4732 = vadd.f32 %v513, %v4731
      %v4733 = vpop.f32.mrb[0].mxu0
      %v4734 = vadd.f32 %v513, %v4733
      %4735 = vmatprep.mubr.f32.mxu0 0.0
      %4736 = vmatmul.mubr.f32.gmra.mrb[0].mxu0 %v573
      %v4737 = vpop.f32.mrb[0].mxu0
      %v4738 = vadd.f32 %v518, %v4737
      %v4739 = vpop.f32.mrb[0].mxu0
      %v4740 = vadd.f32 %v518, %v4739
      %4741 = vmatprep.mubr.f32.mxu0 0.0
      %4742 = vmatmul.mubr.f32.gmra.mrb[0].mxu0 %v576
      %v4743 = vpop.f32.mrb[0].mxu0
      %v4744 = vadd.f32 %v523, %v4743
      %v4745 = vpop.f32.mrb[0].mxu0
      %v4746 = vadd.f32 %v523, %v4745
      %4747 = vmatprep.mubr.f32.mxu0 0.0
      %4748 = vmatmul.mubr.f32.gmra.mrb[0].mxu0 %v579
      %v4749 = vpop.f32.mrb[0].mxu0
      %v4750 = vadd.f32 %v528, %v4749
      %v4751 = vpop.f32.mrb[0].mxu0
      %v4752 = vadd.f32 %v528, %v4751
      %4753 = vmatprep.mubr.f32.mxu0 0.0
      %4754 = vmatmul.mubr.f32.gmra.mrb[0].mxu0 %v582
      %v4755 = vpop.f32.mrb[0].mxu0
      %v4756 = vadd.f32 %v533, %v4755
      %v4757 = vpop.f32.mrb[0].mxu0
      %v4758 = vadd.f32 %v533, %v4757
      %4759 = vdwg.mxu0
      %v4760 = vmax.f32 %v802, 0.0
      %v4761 = vmax.f32 %v804, 0.0
      %v4762 = vmax.f32 %v963, 0.0
      %v4763 = vmax.f32 %v965, 0.0
      %v4764 = vmax.f32 %v1124, 0.0
      %v4765 = vmax.f32 %v1126, 0.0
      %v4766 = vmax.f32 %v1285, 0.0
      %v4767 = vmax.f32 %v1287, 0.0
      %v4768 = vmax.f32 %v1446, 0.0
      %v4769 = vmax.f32 %v1448, 0.0
      %v4770 = vmax.f32 %v1607, 0.0
      %v4771 = vmax.f32 %v1609, 0.0
      %v4772 = vmax.f32 %v1768, 0.0
      %v4773 = vmax.f32 %v1770, 0.0
      %v4774 = vmax.f32 %v1929, 0.0
      %v4775 = vmax.f32 %v1931, 0.0
      %v4776 = vmax.f32 %v2090, 0.0
      %v4777 = vmax.f32 %v2092, 0.0
      %v4778 = vmax.f32 %v2251, 0.0
      %v4779 = vmax.f32 %v2253, 0.0
      %v4780 = vmax.f32 %v2412, 0.0
      %v4781 = vmax.f32 %v2414, 0.0
      %v4782 = vmax.f32 %v2573, 0.0
      %v4783 = vmax.f32 %v2575, 0.0
      %v4784 = vmax.f32 %v2734, 0.0
      %v4785 = vmax.f32 %v2736, 0.0
      %v4786 = vmax.f32 %v2895, 0.0
      %v4787 = vmax.f32 %v2897, 0.0
      %v4788 = vmax.f32 %v3056, 0.0
      %v4789 = vmax.f32 %v3058, 0.0
      %v4790 = vmax.f32 %v3217, 0.0
      %v4791 = vmax.f32 %v3219, 0.0
      %v4792 = vmax.f32 %v3378, 0.0
      %v4793 = vmax.f32 %v3380, 0.0
      %v4794 = vmax.f32 %v3539, 0.0
      %v4795 = vmax.f32 %v3541, 0.0
      %v4796 = vmax.f32 %v3700, 0.0
      %v4797 = vmax.f32 %v3702, 0.0
      %v4798 = vmax.f32 %v3861, 0.0
      %v4799 = vmax.f32 %v3863, 0.0
      %v4800 = vmax.f32 %v4022, 0.0
      %v4801 = vmax.f32 %v4024, 0.0
      %v4802 = vmax.f32 %v4183, 0.0
      %v4803 = vmax.f32 %v4185, 0.0
      %v4804 = vmax.f32 %v4344, 0.0
      %v4805 = vmax.f32 %v4346, 0.0
      %v4806 = vmax.f32 %v4505, 0.0
      %v4807 = vmax.f32 %v4507, 0.0
      %v4808 = vmax.f32 %v4666, 0.0
      %v4809 = vmax.f32 %v4668, 0.0
      %v4810 = vmax.f32 %v808, 0.0
      %v4811 = vmax.f32 %v810, 0.0
      %v4812 = vmax.f32 %v969, 0.0
      %v4813 = vmax.f32 %v971, 0.0
      %v4814 = vmax.f32 %v1130, 0.0
      %v4815 = vmax.f32 %v1132, 0.0
      %v4816 = vmax.f32 %v1291, 0.0
      %v4817 = vmax.f32 %v1293, 0.0
      %v4818 = vmax.f32 %v1452, 0.0
      %v4819 = vmax.f32 %v1454, 0.0
      %v4820 = vmax.f32 %v1613, 0.0
      %v4821 = vmax.f32 %v1615, 0.0
      %v4822 = vmax.f32 %v1774, 0.0
      %v4823 = vmax.f32 %v1776, 0.0
      %v4824 = vmax.f32 %v1935, 0.0
      %v4825 = vmax.f32 %v1937, 0.0
      %v4826 = vmax.f32 %v2096, 0.0
      %v4827 = vmax.f32 %v2098, 0.0
      %v4828 = vmax.f32 %v2257, 0.0
      %v4829 = vmax.f32 %v2259, 0.0
      %v4830 = vmax.f32 %v2418, 0.0
      %v4831 = vmax.f32 %v2420, 0.0
      %v4832 = vmax.f32 %v2579, 0.0
      %v4833 = vmax.f32 %v2581, 0.0
      %v4834 = vmax.f32 %v2740, 0.0
      %v4835 = vmax.f32 %v2742, 0.0
      %v4836 = vmax.f32 %v2901, 0.0
      %v4837 = vmax.f32 %v2903, 0.0
      %v4838 = vmax.f32 %v3062, 0.0
      %v4839 = vmax.f32 %v3064, 0.0
      %v4840 = vmax.f32 %v3223, 0.0
      %v4841 = vmax.f32 %v3225, 0.0
      %v4842 = vmax.f32 %v3384, 0.0
      %v4843 = vmax.f32 %v3386, 0.0
      %v4844 = vmax.f32 %v3545, 0.0
      %v4845 = vmax.f32 %v3547, 0.0
      %v4846 = vmax.f32 %v3706, 0.0
      %v4847 = vmax.f32 %v3708, 0.0
      %v4848 = vmax.f32 %v3867, 0.0
      %v4849 = vmax.f32 %v3869, 0.0
      %v4850 = vmax.f32 %v4028, 0.0
      %v4851 = vmax.f32 %v4030, 0.0
      %v4852 = vmax.f32 %v4189, 0.0
      %v4853 = vmax.f32 %v4191, 0.0
      %v4854 = vmax.f32 %v4350, 0.0
      %v4855 = vmax.f32 %v4352, 0.0
      %v4856 = vmax.f32 %v4511, 0.0
      %v4857 = vmax.f32 %v4513, 0.0
      %v4858 = vmax.f32 %v4672, 0.0
      %v4859 = vmax.f32 %v4674, 0.0
      %v4860 = vmax.f32 %v814, 0.0
      %v4861 = vmax.f32 %v816, 0.0
      %v4862 = vmax.f32 %v975, 0.0
      %v4863 = vmax.f32 %v977, 0.0
      %v4864 = vmax.f32 %v1136, 0.0
      %v4865 = vmax.f32 %v1138, 0.0
      %v4866 = vmax.f32 %v1297, 0.0
      %v4867 = vmax.f32 %v1299, 0.0
      %v4868 = vmax.f32 %v1458, 0.0
      %v4869 = vmax.f32 %v1460, 0.0
      %v4870 = vmax.f32 %v1619, 0.0
      %v4871 = vmax.f32 %v1621, 0.0
      %v4872 = vmax.f32 %v1780, 0.0
      %v4873 = vmax.f32 %v1782, 0.0
      %v4874 = vmax.f32 %v1941, 0.0
      %v4875 = vmax.f32 %v1943, 0.0
      %v4876 = vmax.f32 %v2102, 0.0
      %v4877 = vmax.f32 %v2104, 0.0
      %v4878 = vmax.f32 %v2263, 0.0
      %v4879 = vmax.f32 %v2265, 0.0
      %v4880 = vmax.f32 %v2424, 0.0
      %v4881 = vmax.f32 %v2426, 0.0
      %v4882 = vmax.f32 %v2585, 0.0
      %v4883 = vmax.f32 %v2587, 0.0
      %v4884 = vmax.f32 %v2746, 0.0
      %v4885 = vmax.f32 %v2748, 0.0
      %v4886 = vmax.f32 %v2907, 0.0
      %v4887 = vmax.f32 %v2909, 0.0
      %v4888 = vmax.f32 %v3068, 0.0
      %v4889 = vmax.f32 %v3070, 0.0
      %v4890 = vmax.f32 %v3229, 0.0
      %v4891 = vmax.f32 %v3231, 0.0
      %v4892 = vmax.f32 %v3390, 0.0
      %v4893 = vmax.f32 %v3392, 0.0
      %v4894 = vmax.f32 %v3551, 0.0
      %v4895 = vmax.f32 %v3553, 0.0
      %v4896 = vmax.f32 %v3712, 0.0
      %v4897 = vmax.f32 %v3714, 0.0
      %v4898 = vmax.f32 %v3873, 0.0
      %v4899 = vmax.f32 %v3875, 0.0
      %v4900 = vmax.f32 %v4034, 0.0
      %v4901 = vmax.f32 %v4036, 0.0
      %v4902 = vmax.f32 %v4195, 0.0
      %v4903 = vmax.f32 %v4197, 0.0
      %v4904 = vmax.f32 %v4356, 0.0
      %v4905 = vmax.f32 %v4358, 0.0
      %v4906 = vmax.f32 %v4517, 0.0
      %v4907 = vmax.f32 %v4519, 0.0
      %v4908 = vmax.f32 %v4678, 0.0
      %v4909 = vmax.f32 %v4680, 0.0
      %v4910 = vmax.f32 %v820, 0.0
      %v4911 = vmax.f32 %v822, 0.0
      %v4912 = vmax.f32 %v981, 0.0
      %v4913 = vmax.f32 %v983, 0.0
      %v4914 = vmax.f32 %v1142, 0.0
      %v4915 = vmax.f32 %v1144, 0.0
      %v4916 = vmax.f32 %v1303, 0.0
      %v4917 = vmax.f32 %v1305, 0.0
      %v4918 = vmax.f32 %v1464, 0.0
      %v4919 = vmax.f32 %v1466, 0.0
      %v4920 = vmax.f32 %v1625, 0.0
      %v4921 = vmax.f32 %v1627, 0.0
      %v4922 = vmax.f32 %v1786, 0.0
      %v4923 = vmax.f32 %v1788, 0.0
      %v4924 = vmax.f32 %v1947, 0.0
      %v4925 = vmax.f32 %v1949, 0.0
      %v4926 = vmax.f32 %v2108, 0.0
      %v4927 = vmax.f32 %v2110, 0.0
      %v4928 = vmax.f32 %v2269, 0.0
      %v4929 = vmax.f32 %v2271, 0.0
      %v4930 = vmax.f32 %v2430, 0.0
      %v4931 = vmax.f32 %v2432, 0.0
      %v4932 = vmax.f32 %v2591, 0.0
      %v4933 = vmax.f32 %v2593, 0.0
      %v4934 = vmax.f32 %v2752, 0.0
      %v4935 = vmax.f32 %v2754, 0.0
      %v4936 = vmax.f32 %v2913, 0.0
      %v4937 = vmax.f32 %v2915, 0.0
      %v4938 = vmax.f32 %v3074, 0.0
      %v4939 = vmax.f32 %v3076, 0.0
      %v4940 = vmax.f32 %v3235, 0.0
      %v4941 = vmax.f32 %v3237, 0.0
      %v4942 = vmax.f32 %v3396, 0.0
      %v4943 = vmax.f32 %v3398, 0.0
      %v4944 = vmax.f32 %v3557, 0.0
      %v4945 = vmax.f32 %v3559, 0.0
      %v4946 = vmax.f32 %v3718, 0.0
      %v4947 = vmax.f32 %v3720, 0.0
      %v4948 = vmax.f32 %v3879, 0.0
      %v4949 = vmax.f32 %v3881, 0.0
      %v4950 = vmax.f32 %v4040, 0.0
      %v4951 = vmax.f32 %v4042, 0.0
      %v4952 = vmax.f32 %v4201, 0.0
      %v4953 = vmax.f32 %v4203, 0.0
      %v4954 = vmax.f32 %v4362, 0.0
      %v4955 = vmax.f32 %v4364, 0.0
      %v4956 = vmax.f32 %v4523, 0.0
      %v4957 = vmax.f32 %v4525, 0.0
      %v4958 = vmax.f32 %v4684, 0.0
      %v4959 = vmax.f32 %v4686, 0.0
      %v4960 = vmax.f32 %v826, 0.0
      %v4961 = vmax.f32 %v828, 0.0
      %v4962 = vmax.f32 %v987, 0.0
      %v4963 = vmax.f32 %v989, 0.0
      %v4964 = vmax.f32 %v1148, 0.0
      %v4965 = vmax.f32 %v1150, 0.0
      %v4966 = vmax.f32 %v1309, 0.0
      %v4967 = vmax.f32 %v1311, 0.0
      %v4968 = vmax.f32 %v1470, 0.0
      %v4969 = vmax.f32 %v1472, 0.0
      %v4970 = vmax.f32 %v1631, 0.0
      %v4971 = vmax.f32 %v1633, 0.0
      %v4972 = vmax.f32 %v1792, 0.0
      %v4973 = vmax.f32 %v1794, 0.0
      %v4974 = vmax.f32 %v1953, 0.0
      %v4975 = vmax.f32 %v1955, 0.0
      %v4976 = vmax.f32 %v2114, 0.0
      %v4977 = vmax.f32 %v2116, 0.0
      %v4978 = vmax.f32 %v2275, 0.0
      %v4979 = vmax.f32 %v2277, 0.0
      %v4980 = vmax.f32 %v2436, 0.0
      %v4981 = vmax.f32 %v2438, 0.0
      %v4982 = vmax.f32 %v2597, 0.0
      %v4983 = vmax.f32 %v2599, 0.0
      %v4984 = vmax.f32 %v2758, 0.0
      %v4985 = vmax.f32 %v2760, 0.0
      %v4986 = vmax.f32 %v2919, 0.0
      %v4987 = vmax.f32 %v2921, 0.0
      %v4988 = vmax.f32 %v3080, 0.0
      %v4989 = vmax.f32 %v3082, 0.0
      %v4990 = vmax.f32 %v3241, 0.0
      %v4991 = vmax.f32 %v3243, 0.0
      %v4992 = vmax.f32 %v3402, 0.0
      %v4993 = vmax.f32 %v3404, 0.0
      %v4994 = vmax.f32 %v3563, 0.0
      %v4995 = vmax.f32 %v3565, 0.0
      %v4996 = vmax.f32 %v3724, 0.0
      %v4997 = vmax.f32 %v3726, 0.0
      %v4998 = vmax.f32 %v3885, 0.0
      %v4999 = vmax.f32 %v3887, 0.0
      %v5000 = vmax.f32 %v4046, 0.0
      %v5001 = vmax.f32 %v4048, 0.0
      %v5002 = vmax.f32 %v4207, 0.0
      %v5003 = vmax.f32 %v4209, 0.0
      %v5004 = vmax.f32 %v4368, 0.0
      %v5005 = vmax.f32 %v4370, 0.0
      %v5006 = vmax.f32 %v4529, 0.0
      %v5007 = vmax.f32 %v4531, 0.0
      %v5008 = vmax.f32 %v4690, 0.0
      %v5009 = vmax.f32 %v4692, 0.0
      %v5010 = vmax.f32 %v832, 0.0
      %v5011 = vmax.f32 %v834, 0.0
      %v5012 = vmax.f32 %v993, 0.0
      %v5013 = vmax.f32 %v995, 0.0
      %v5014 = vmax.f32 %v1154, 0.0
      %v5015 = vmax.f32 %v1156, 0.0
      %v5016 = vmax.f32 %v1315, 0.0
      %v5017 = vmax.f32 %v1317, 0.0
      %v5018 = vmax.f32 %v1476, 0.0
      %v5019 = vmax.f32 %v1478, 0.0
      %v5020 = vmax.f32 %v1637, 0.0
      %v5021 = vmax.f32 %v1639, 0.0
      %v5022 = vmax.f32 %v1798, 0.0
      %v5023 = vmax.f32 %v1800, 0.0
      %v5024 = vmax.f32 %v1959, 0.0
      %v5025 = vmax.f32 %v1961, 0.0
      %v5026 = vmax.f32 %v2120, 0.0
      %v5027 = vmax.f32 %v2122, 0.0
      %v5028 = vmax.f32 %v2281, 0.0
      %v5029 = vmax.f32 %v2283, 0.0
      %v5030 = vmax.f32 %v2442, 0.0
      %v5031 = vmax.f32 %v2444, 0.0
      %v5032 = vmax.f32 %v2603, 0.0
      %v5033 = vmax.f32 %v2605, 0.0
      %v5034 = vmax.f32 %v2764, 0.0
      %v5035 = vmax.f32 %v2766, 0.0
      %v5036 = vmax.f32 %v2925, 0.0
      %v5037 = vmax.f32 %v2927, 0.0
      %v5038 = vmax.f32 %v3086, 0.0
      %v5039 = vmax.f32 %v3088, 0.0
      %v5040 = vmax.f32 %v3247, 0.0
      %v5041 = vmax.f32 %v3249, 0.0
      %v5042 = vmax.f32 %v3408, 0.0
      %v5043 = vmax.f32 %v3410, 0.0
      %v5044 = vmax.f32 %v3569, 0.0
      %v5045 = vmax.f32 %v3571, 0.0
      %v5046 = vmax.f32 %v3730, 0.0
      %v5047 = vmax.f32 %v3732, 0.0
      %v5048 = vmax.f32 %v3891, 0.0
      %v5049 = vmax.f32 %v3893, 0.0
      %v5050 = vmax.f32 %v4052, 0.0
      %v5051 = vmax.f32 %v4054, 0.0
      %v5052 = vmax.f32 %v4213, 0.0
      %v5053 = vmax.f32 %v4215, 0.0
      %v5054 = vmax.f32 %v4374, 0.0
      %v5055 = vmax.f32 %v4376, 0.0
      %v5056 = vmax.f32 %v4535, 0.0
      %v5057 = vmax.f32 %v4537, 0.0
      %v5058 = vmax.f32 %v4696, 0.0
      %v5059 = vmax.f32 %v4698, 0.0
      %v5060 = vmax.f32 %v838, 0.0
      %v5061 = vmax.f32 %v840, 0.0
      %v5062 = vmax.f32 %v999, 0.0
      %v5063 = vmax.f32 %v1001, 0.0
      %v5064 = vmax.f32 %v1160, 0.0
      %v5065 = vmax.f32 %v1162, 0.0
      %v5066 = vmax.f32 %v1321, 0.0
      %v5067 = vmax.f32 %v1323, 0.0
      %v5068 = vmax.f32 %v1482, 0.0
      %v5069 = vmax.f32 %v1484, 0.0
      %v5070 = vmax.f32 %v1643, 0.0
      %v5071 = vmax.f32 %v1645, 0.0
      %v5072 = vmax.f32 %v1804, 0.0
      %v5073 = vmax.f32 %v1806, 0.0
      %v5074 = vmax.f32 %v1965, 0.0
      %v5075 = vmax.f32 %v1967, 0.0
      %v5076 = vmax.f32 %v2126, 0.0
      %v5077 = vmax.f32 %v2128, 0.0
      %v5078 = vmax.f32 %v2287, 0.0
      %v5079 = vmax.f32 %v2289, 0.0
      %v5080 = vmax.f32 %v2448, 0.0
      %v5081 = vmax.f32 %v2450, 0.0
      %v5082 = vmax.f32 %v2609, 0.0
      %v5083 = vmax.f32 %v2611, 0.0
      %v5084 = vmax.f32 %v2770, 0.0
      %v5085 = vmax.f32 %v2772, 0.0
      %v5086 = vmax.f32 %v2931, 0.0
      %v5087 = vmax.f32 %v2933, 0.0
      %v5088 = vmax.f32 %v3092, 0.0
      %v5089 = vmax.f32 %v3094, 0.0
      %v5090 = vmax.f32 %v3253, 0.0
      %v5091 = vmax.f32 %v3255, 0.0
      %v5092 = vmax.f32 %v3414, 0.0
      %v5093 = vmax.f32 %v3416, 0.0
      %v5094 = vmax.f32 %v3575, 0.0
      %v5095 = vmax.f32 %v3577, 0.0
      %v5096 = vmax.f32 %v3736, 0.0
      %v5097 = vmax.f32 %v3738, 0.0
      %v5098 = vmax.f32 %v3897, 0.0
      %v5099 = vmax.f32 %v3899, 0.0
      %v5100 = vmax.f32 %v4058, 0.0
      %v5101 = vmax.f32 %v4060, 0.0
      %v5102 = vmax.f32 %v4219, 0.0
      %v5103 = vmax.f32 %v4221, 0.0
      %v5104 = vmax.f32 %v4380, 0.0
      %v5105 = vmax.f32 %v4382, 0.0
      %v5106 = vmax.f32 %v4541, 0.0
      %v5107 = vmax.f32 %v4543, 0.0
      %v5108 = vmax.f32 %v4702, 0.0
      %v5109 = vmax.f32 %v4704, 0.0
      %v5110 = vmax.f32 %v844, 0.0
      %v5111 = vmax.f32 %v846, 0.0
      %v5112 = vmax.f32 %v1005, 0.0
      %v5113 = vmax.f32 %v1007, 0.0
      %v5114 = vmax.f32 %v1166, 0.0
      %v5115 = vmax.f32 %v1168, 0.0
      %v5116 = vmax.f32 %v1327, 0.0
      %v5117 = vmax.f32 %v1329, 0.0
      %v5118 = vmax.f32 %v1488, 0.0
      %v5119 = vmax.f32 %v1490, 0.0
      %v5120 = vmax.f32 %v1649, 0.0
      %v5121 = vmax.f32 %v1651, 0.0
      %v5122 = vmax.f32 %v1810, 0.0
      %v5123 = vmax.f32 %v1812, 0.0
      %v5124 = vmax.f32 %v1971, 0.0
      %v5125 = vmax.f32 %v1973, 0.0
      %v5126 = vmax.f32 %v2132, 0.0
      %v5127 = vmax.f32 %v2134, 0.0
      %v5128 = vmax.f32 %v2293, 0.0
      %v5129 = vmax.f32 %v2295, 0.0
      %v5130 = vmax.f32 %v2454, 0.0
      %v5131 = vmax.f32 %v2456, 0.0
      %v5132 = vmax.f32 %v2615, 0.0
      %v5133 = vmax.f32 %v2617, 0.0
      %v5134 = vmax.f32 %v2776, 0.0
      %v5135 = vmax.f32 %v2778, 0.0
      %v5136 = vmax.f32 %v2937, 0.0
      %v5137 = vmax.f32 %v2939, 0.0
      %v5138 = vmax.f32 %v3098, 0.0
      %v5139 = vmax.f32 %v3100, 0.0
      %v5140 = vmax.f32 %v3259, 0.0
      %v5141 = vmax.f32 %v3261, 0.0
      %v5142 = vmax.f32 %v3420, 0.0
      %v5143 = vmax.f32 %v3422, 0.0
      %v5144 = vmax.f32 %v3581, 0.0
      %v5145 = vmax.f32 %v3583, 0.0
      %v5146 = vmax.f32 %v3742, 0.0
      %v5147 = vmax.f32 %v3744, 0.0
      %v5148 = vmax.f32 %v3903, 0.0
      %v5149 = vmax.f32 %v3905, 0.0
      %v5150 = vmax.f32 %v4064, 0.0
      %v5151 = vmax.f32 %v4066, 0.0
      %v5152 = vmax.f32 %v4225, 0.0
      %v5153 = vmax.f32 %v4227, 0.0
      %v5154 = vmax.f32 %v4386, 0.0
      %v5155 = vmax.f32 %v4388, 0.0
      %v5156 = vmax.f32 %v4547, 0.0
      %v5157 = vmax.f32 %v4549, 0.0
      %v5158 = vmax.f32 %v4708, 0.0
      %v5159 = vmax.f32 %v4710, 0.0
      %v5160 = vmax.f32 %v850, 0.0
      %v5161 = vmax.f32 %v852, 0.0
      %v5162 = vmax.f32 %v1011, 0.0
      %v5163 = vmax.f32 %v1013, 0.0
      %v5164 = vmax.f32 %v1172, 0.0
      %v5165 = vmax.f32 %v1174, 0.0
      %v5166 = vmax.f32 %v1333, 0.0
      %v5167 = vmax.f32 %v1335, 0.0
      %v5168 = vmax.f32 %v1494, 0.0
      %v5169 = vmax.f32 %v1496, 0.0
      %v5170 = vmax.f32 %v1655, 0.0
      %v5171 = vmax.f32 %v1657, 0.0
      %v5172 = vmax.f32 %v1816, 0.0
      %v5173 = vmax.f32 %v1818, 0.0
      %v5174 = vmax.f32 %v1977, 0.0
      %v5175 = vmax.f32 %v1979, 0.0
      %v5176 = vmax.f32 %v2138, 0.0
      %v5177 = vmax.f32 %v2140, 0.0
      %v5178 = vmax.f32 %v2299, 0.0
      %v5179 = vmax.f32 %v2301, 0.0
      %v5180 = vmax.f32 %v2460, 0.0
      %v5181 = vmax.f32 %v2462, 0.0
      %v5182 = vmax.f32 %v2621, 0.0
      %v5183 = vmax.f32 %v2623, 0.0
      %v5184 = vmax.f32 %v2782, 0.0
      %v5185 = vmax.f32 %v2784, 0.0
      %v5186 = vmax.f32 %v2943, 0.0
      %v5187 = vmax.f32 %v2945, 0.0
      %v5188 = vmax.f32 %v3104, 0.0
      %v5189 = vmax.f32 %v3106, 0.0
      %v5190 = vmax.f32 %v3265, 0.0
      %v5191 = vmax.f32 %v3267, 0.0
      %v5192 = vmax.f32 %v3426, 0.0
      %v5193 = vmax.f32 %v3428, 0.0
      %v5194 = vmax.f32 %v3587, 0.0
      %v5195 = vmax.f32 %v3589, 0.0
      %v5196 = vmax.f32 %v3748, 0.0
      %v5197 = vmax.f32 %v3750, 0.0
      %v5198 = vmax.f32 %v3909, 0.0
      %v5199 = vmax.f32 %v3911, 0.0
      %v5200 = vmax.f32 %v4070, 0.0
      %v5201 = vmax.f32 %v4072, 0.0
      %v5202 = vmax.f32 %v4231, 0.0
      %v5203 = vmax.f32 %v4233, 0.0
      %v5204 = vmax.f32 %v4392, 0.0
      %v5205 = vmax.f32 %v4394, 0.0
      %v5206 = vmax.f32 %v4553, 0.0
      %v5207 = vmax.f32 %v4555, 0.0
      %v5208 = vmax.f32 %v4714, 0.0
      %v5209 = vmax.f32 %v4716, 0.0
      %v5210 = vmax.f32 %v856, 0.0
      %v5211 = vmax.f32 %v858, 0.0
      %v5212 = vmax.f32 %v1017, 0.0
      %v5213 = vmax.f32 %v1019, 0.0
      %v5214 = vmax.f32 %v1178, 0.0
      %v5215 = vmax.f32 %v1180, 0.0
      %v5216 = vmax.f32 %v1339, 0.0
      %v5217 = vmax.f32 %v1341, 0.0
      %v5218 = vmax.f32 %v1500, 0.0
      %v5219 = vmax.f32 %v1502, 0.0
      %v5220 = vmax.f32 %v1661, 0.0
      %v5221 = vmax.f32 %v1663, 0.0
      %v5222 = vmax.f32 %v1822, 0.0
      %v5223 = vmax.f32 %v1824, 0.0
      %v5224 = vmax.f32 %v1983, 0.0
      %v5225 = vmax.f32 %v1985, 0.0
      %v5226 = vmax.f32 %v2144, 0.0
      %v5227 = vmax.f32 %v2146, 0.0
      %v5228 = vmax.f32 %v2305, 0.0
      %v5229 = vmax.f32 %v2307, 0.0
      %v5230 = vmax.f32 %v2466, 0.0
      %v5231 = vmax.f32 %v2468, 0.0
      %v5232 = vmax.f32 %v2627, 0.0
      %v5233 = vmax.f32 %v2629, 0.0
      %v5234 = vmax.f32 %v2788, 0.0
      %v5235 = vmax.f32 %v2790, 0.0
      %v5236 = vmax.f32 %v2949, 0.0
      %v5237 = vmax.f32 %v2951, 0.0
      %v5238 = vmax.f32 %v3110, 0.0
      %v5239 = vmax.f32 %v3112, 0.0
      %v5240 = vmax.f32 %v3271, 0.0
      %v5241 = vmax.f32 %v3273, 0.0
      %v5242 = vmax.f32 %v3432, 0.0
      %v5243 = vmax.f32 %v3434, 0.0
      %v5244 = vmax.f32 %v3593, 0.0
      %v5245 = vmax.f32 %v3595, 0.0
      %v5246 = vmax.f32 %v3754, 0.0
      %v5247 = vmax.f32 %v3756, 0.0
      %v5248 = vmax.f32 %v3915, 0.0
      %v5249 = vmax.f32 %v3917, 0.0
      %v5250 = vmax.f32 %v4076, 0.0
      %v5251 = vmax.f32 %v4078, 0.0
      %v5252 = vmax.f32 %v4237, 0.0
      %v5253 = vmax.f32 %v4239, 0.0
      %v5254 = vmax.f32 %v4398, 0.0
      %v5255 = vmax.f32 %v4400, 0.0
      %v5256 = vmax.f32 %v4559, 0.0
      %v5257 = vmax.f32 %v4561, 0.0
      %v5258 = vmax.f32 %v4720, 0.0
      %v5259 = vmax.f32 %v4722, 0.0
      %v5260 = vmax.f32 %v862, 0.0
      %v5261 = vmax.f32 %v864, 0.0
      %v5262 = vmax.f32 %v1023, 0.0
      %v5263 = vmax.f32 %v1025, 0.0
      %v5264 = vmax.f32 %v1184, 0.0
      %v5265 = vmax.f32 %v1186, 0.0
      %v5266 = vmax.f32 %v1345, 0.0
      %v5267 = vmax.f32 %v1347, 0.0
      %v5268 = vmax.f32 %v1506, 0.0
      %v5269 = vmax.f32 %v1508, 0.0
      %v5270 = vmax.f32 %v1667, 0.0
      %v5271 = vmax.f32 %v1669, 0.0
      %v5272 = vmax.f32 %v1828, 0.0
      %v5273 = vmax.f32 %v1830, 0.0
      %v5274 = vmax.f32 %v1989, 0.0
      %v5275 = vmax.f32 %v1991, 0.0
      %v5276 = vmax.f32 %v2150, 0.0
      %v5277 = vmax.f32 %v2152, 0.0
      %v5278 = vmax.f32 %v2311, 0.0
      %v5279 = vmax.f32 %v2313, 0.0
      %v5280 = vmax.f32 %v2472, 0.0
      %v5281 = vmax.f32 %v2474, 0.0
      %v5282 = vmax.f32 %v2633, 0.0
      %v5283 = vmax.f32 %v2635, 0.0
      %v5284 = vmax.f32 %v2794, 0.0
      %v5285 = vmax.f32 %v2796, 0.0
      %v5286 = vmax.f32 %v2955, 0.0
      %v5287 = vmax.f32 %v2957, 0.0
      %v5288 = vmax.f32 %v3116, 0.0
      %v5289 = vmax.f32 %v3118, 0.0
      %v5290 = vmax.f32 %v3277, 0.0
      %v5291 = vmax.f32 %v3279, 0.0
      %v5292 = vmax.f32 %v3438, 0.0
      %v5293 = vmax.f32 %v3440, 0.0
      %v5294 = vmax.f32 %v3599, 0.0
      %v5295 = vmax.f32 %v3601, 0.0
      %v5296 = vmax.f32 %v3760, 0.0
      %v5297 = vmax.f32 %v3762, 0.0
      %v5298 = vmax.f32 %v3921, 0.0
      %v5299 = vmax.f32 %v3923, 0.0
      %v5300 = vmax.f32 %v4082, 0.0
      %v5301 = vmax.f32 %v4084, 0.0
      %v5302 = vmax.f32 %v4243, 0.0
      %v5303 = vmax.f32 %v4245, 0.0
      %v5304 = vmax.f32 %v4404, 0.0
      %v5305 = vmax.f32 %v4406, 0.0
      %v5306 = vmax.f32 %v4565, 0.0
      %v5307 = vmax.f32 %v4567, 0.0
      %v5308 = vmax.f32 %v4726, 0.0
      %v5309 = vmax.f32 %v4728, 0.0
      %v5310 = vmax.f32 %v868, 0.0
      %v5311 = vmax.f32 %v870, 0.0
      %v5312 = vmax.f32 %v1029, 0.0
      %v5313 = vmax.f32 %v1031, 0.0
      %v5314 = vmax.f32 %v1190, 0.0
      %v5315 = vmax.f32 %v1192, 0.0
      %v5316 = vmax.f32 %v1351, 0.0
      %v5317 = vmax.f32 %v1353, 0.0
      %v5318 = vmax.f32 %v1512, 0.0
      %v5319 = vmax.f32 %v1514, 0.0
      %v5320 = vmax.f32 %v1673, 0.0
      %v5321 = vmax.f32 %v1675, 0.0
      %v5322 = vmax.f32 %v1834, 0.0
      %v5323 = vmax.f32 %v1836, 0.0
      %v5324 = vmax.f32 %v1995, 0.0
      %v5325 = vmax.f32 %v1997, 0.0
      %v5326 = vmax.f32 %v2156, 0.0
      %v5327 = vmax.f32 %v2158, 0.0
      %v5328 = vmax.f32 %v2317, 0.0
      %v5329 = vmax.f32 %v2319, 0.0
      %v5330 = vmax.f32 %v2478, 0.0
      %v5331 = vmax.f32 %v2480, 0.0
      %v5332 = vmax.f32 %v2639, 0.0
      %v5333 = vmax.f32 %v2641, 0.0
      %v5334 = vmax.f32 %v2800, 0.0
      %v5335 = vmax.f32 %v2802, 0.0
      %v5336 = vmax.f32 %v2961, 0.0
      %v5337 = vmax.f32 %v2963, 0.0
      %v5338 = vmax.f32 %v3122, 0.0
      %v5339 = vmax.f32 %v3124, 0.0
      %v5340 = vmax.f32 %v3283, 0.0
      %v5341 = vmax.f32 %v3285, 0.0
      %v5342 = vmax.f32 %v3444, 0.0
      %v5343 = vmax.f32 %v3446, 0.0
      %v5344 = vmax.f32 %v3605, 0.0
      %v5345 = vmax.f32 %v3607, 0.0
      %v5346 = vmax.f32 %v3766, 0.0
      %v5347 = vmax.f32 %v3768, 0.0
      %v5348 = vmax.f32 %v3927, 0.0
      %v5349 = vmax.f32 %v3929, 0.0
      %v5350 = vmax.f32 %v4088, 0.0
      %v5351 = vmax.f32 %v4090, 0.0
      %v5352 = vmax.f32 %v4249, 0.0
      %v5353 = vmax.f32 %v4251, 0.0
      %v5354 = vmax.f32 %v4410, 0.0
      %v5355 = vmax.f32 %v4412, 0.0
      %v5356 = vmax.f32 %v4571, 0.0
      %v5357 = vmax.f32 %v4573, 0.0
      %v5358 = vmax.f32 %v4732, 0.0
      %v5359 = vmax.f32 %v4734, 0.0
      %v5360 = vmax.f32 %v874, 0.0
      %v5361 = vmax.f32 %v876, 0.0
      %v5362 = vmax.f32 %v1035, 0.0
      %v5363 = vmax.f32 %v1037, 0.0
      %v5364 = vmax.f32 %v1196, 0.0
      %v5365 = vmax.f32 %v1198, 0.0
      %v5366 = vmax.f32 %v1357, 0.0
      %v5367 = vmax.f32 %v1359, 0.0
      %v5368 = vmax.f32 %v1518, 0.0
      %v5369 = vmax.f32 %v1520, 0.0
      %v5370 = vmax.f32 %v1679, 0.0
      %v5371 = vmax.f32 %v1681, 0.0
      %v5372 = vmax.f32 %v1840, 0.0
      %v5373 = vmax.f32 %v1842, 0.0
      %v5374 = vmax.f32 %v2001, 0.0
      %v5375 = vmax.f32 %v2003, 0.0
      %v5376 = vmax.f32 %v2162, 0.0
      %v5377 = vmax.f32 %v2164, 0.0
      %v5378 = vmax.f32 %v2323, 0.0
      %v5379 = vmax.f32 %v2325, 0.0
      %v5380 = vmax.f32 %v2484, 0.0
      %v5381 = vmax.f32 %v2486, 0.0
      %v5382 = vmax.f32 %v2645, 0.0
      %v5383 = vmax.f32 %v2647, 0.0
      %v5384 = vmax.f32 %v2806, 0.0
      %v5385 = vmax.f32 %v2808, 0.0
      %v5386 = vmax.f32 %v2967, 0.0
      %v5387 = vmax.f32 %v2969, 0.0
      %v5388 = vmax.f32 %v3128, 0.0
      %v5389 = vmax.f32 %v3130, 0.0
      %v5390 = vmax.f32 %v3289, 0.0
      %v5391 = vmax.f32 %v3291, 0.0
      %v5392 = vmax.f32 %v3450, 0.0
      %v5393 = vmax.f32 %v3452, 0.0
      %v5394 = vmax.f32 %v3611, 0.0
      %v5395 = vmax.f32 %v3613, 0.0
      %v5396 = vmax.f32 %v3772, 0.0
      %v5397 = vmax.f32 %v3774, 0.0
      %v5398 = vmax.f32 %v3933, 0.0
      %v5399 = vmax.f32 %v3935, 0.0
      %v5400 = vmax.f32 %v4094, 0.0
      %v5401 = vmax.f32 %v4096, 0.0
      %v5402 = vmax.f32 %v4255, 0.0
      %v5403 = vmax.f32 %v4257, 0.0
      %v5404 = vmax.f32 %v4416, 0.0
      %v5405 = vmax.f32 %v4418, 0.0
      %v5406 = vmax.f32 %v4577, 0.0
      %v5407 = vmax.f32 %v4579, 0.0
      %v5408 = vmax.f32 %v4738, 0.0
      %v5409 = vmax.f32 %v4740, 0.0
      %v5410 = vmax.f32 %v880, 0.0
      %v5411 = vmax.f32 %v882, 0.0
      %v5412 = vmax.f32 %v1041, 0.0
      %v5413 = vmax.f32 %v1043, 0.0
      %v5414 = vmax.f32 %v1202, 0.0
      %v5415 = vmax.f32 %v1204, 0.0
      %v5416 = vmax.f32 %v1363, 0.0
      %v5417 = vmax.f32 %v1365, 0.0
      %v5418 = vmax.f32 %v1524, 0.0
      %v5419 = vmax.f32 %v1526, 0.0
      %v5420 = vmax.f32 %v1685, 0.0
      %v5421 = vmax.f32 %v1687, 0.0
      %v5422 = vmax.f32 %v1846, 0.0
      %v5423 = vmax.f32 %v1848, 0.0
      %v5424 = vmax.f32 %v2007, 0.0
      %v5425 = vmax.f32 %v2009, 0.0
      %v5426 = vmax.f32 %v2168, 0.0
      %v5427 = vmax.f32 %v2170, 0.0
      %v5428 = vmax.f32 %v2329, 0.0
      %v5429 = vmax.f32 %v2331, 0.0
      %v5430 = vmax.f32 %v2490, 0.0
      %v5431 = vmax.f32 %v2492, 0.0
      %v5432 = vmax.f32 %v2651, 0.0
      %v5433 = vmax.f32 %v2653, 0.0
      %v5434 = vmax.f32 %v2812, 0.0
      %v5435 = vmax.f32 %v2814, 0.0
      %v5436 = vmax.f32 %v2973, 0.0
      %v5437 = vmax.f32 %v2975, 0.0
      %v5438 = vmax.f32 %v3134, 0.0
      %v5439 = vmax.f32 %v3136, 0.0
      %v5440 = vmax.f32 %v3295, 0.0
      %v5441 = vmax.f32 %v3297, 0.0
      %v5442 = vmax.f32 %v3456, 0.0
      %v5443 = vmax.f32 %v3458, 0.0
      %v5444 = vmax.f32 %v3617, 0.0
      %v5445 = vmax.f32 %v3619, 0.0
      %v5446 = vmax.f32 %v3778, 0.0
      %v5447 = vmax.f32 %v3780, 0.0
      %v5448 = vmax.f32 %v3939, 0.0
      %v5449 = vmax.f32 %v3941, 0.0
      %v5450 = vmax.f32 %v4100, 0.0
      %v5451 = vmax.f32 %v4102, 0.0
      %v5452 = vmax.f32 %v4261, 0.0
      %v5453 = vmax.f32 %v4263, 0.0
      %v5454 = vmax.f32 %v4422, 0.0
      %v5455 = vmax.f32 %v4424, 0.0
      %v5456 = vmax.f32 %v4583, 0.0
      %v5457 = vmax.f32 %v4585, 0.0
      %v5458 = vmax.f32 %v4744, 0.0
      %v5459 = vmax.f32 %v4746, 0.0
      %v5460 = vmax.f32 %v886, 0.0
      %v5461 = vmax.f32 %v888, 0.0
      %v5462 = vmax.f32 %v1047, 0.0
      %v5463 = vmax.f32 %v1049, 0.0
      %v5464 = vmax.f32 %v1208, 0.0
      %v5465 = vmax.f32 %v1210, 0.0
      %v5466 = vmax.f32 %v1369, 0.0
      %v5467 = vmax.f32 %v1371, 0.0
      %v5468 = vmax.f32 %v1530, 0.0
      %v5469 = vmax.f32 %v1532, 0.0
      %v5470 = vmax.f32 %v1691, 0.0
      %v5471 = vmax.f32 %v1693, 0.0
      %v5472 = vmax.f32 %v1852, 0.0
      %v5473 = vmax.f32 %v1854, 0.0
      %v5474 = vmax.f32 %v2013, 0.0
      %v5475 = vmax.f32 %v2015, 0.0
      %v5476 = vmax.f32 %v2174, 0.0
      %v5477 = vmax.f32 %v2176, 0.0
      %v5478 = vmax.f32 %v2335, 0.0
      %v5479 = vmax.f32 %v2337, 0.0
      %v5480 = vmax.f32 %v2496, 0.0
      %v5481 = vmax.f32 %v2498, 0.0
      %v5482 = vmax.f32 %v2657, 0.0
      %v5483 = vmax.f32 %v2659, 0.0
      %v5484 = vmax.f32 %v2818, 0.0
      %v5485 = vmax.f32 %v2820, 0.0
      %v5486 = vmax.f32 %v2979, 0.0
      %v5487 = vmax.f32 %v2981, 0.0
      %v5488 = vmax.f32 %v3140, 0.0
      %v5489 = vmax.f32 %v3142, 0.0
      %v5490 = vmax.f32 %v3301, 0.0
      %v5491 = vmax.f32 %v3303, 0.0
      %v5492 = vmax.f32 %v3462, 0.0
      %v5493 = vmax.f32 %v3464, 0.0
      %v5494 = vmax.f32 %v3623, 0.0
      %v5495 = vmax.f32 %v3625, 0.0
      %v5496 = vmax.f32 %v3784, 0.0
      %v5497 = vmax.f32 %v3786, 0.0
      %v5498 = vmax.f32 %v3945, 0.0
      %v5499 = vmax.f32 %v3947, 0.0
      %v5500 = vmax.f32 %v4106, 0.0
      %v5501 = vmax.f32 %v4108, 0.0
      %v5502 = vmax.f32 %v4267, 0.0
      %v5503 = vmax.f32 %v4269, 0.0
      %v5504 = vmax.f32 %v4428, 0.0
      %v5505 = vmax.f32 %v4430, 0.0
      %v5506 = vmax.f32 %v4589, 0.0
      %v5507 = vmax.f32 %v4591, 0.0
      %v5508 = vmax.f32 %v4750, 0.0
      %v5509 = vmax.f32 %v4752, 0.0
      %v5510 = vmax.f32 %v892, 0.0
      %v5511 = vmax.f32 %v894, 0.0
      %v5512 = vmax.f32 %v1053, 0.0
      %v5513 = vmax.f32 %v1055, 0.0
      %v5514 = vmax.f32 %v1214, 0.0
      %v5515 = vmax.f32 %v1216, 0.0
      %v5516 = vmax.f32 %v1375, 0.0
      %v5517 = vmax.f32 %v1377, 0.0
      %v5518 = vmax.f32 %v1536, 0.0
      %v5519 = vmax.f32 %v1538, 0.0
      %v5520 = vmax.f32 %v1697, 0.0
      %v5521 = vmax.f32 %v1699, 0.0
      %v5522 = vmax.f32 %v1858, 0.0
      %v5523 = vmax.f32 %v1860, 0.0
      %v5524 = vmax.f32 %v2019, 0.0
      %v5525 = vmax.f32 %v2021, 0.0
      %v5526 = vmax.f32 %v2180, 0.0
      %v5527 = vmax.f32 %v2182, 0.0
      %v5528 = vmax.f32 %v2341, 0.0
      %v5529 = vmax.f32 %v2343, 0.0
      %v5530 = vmax.f32 %v2502, 0.0
      %v5531 = vmax.f32 %v2504, 0.0
      %v5532 = vmax.f32 %v2663, 0.0
      %v5533 = vmax.f32 %v2665, 0.0
      %v5534 = vmax.f32 %v2824, 0.0
      %v5535 = vmax.f32 %v2826, 0.0
      %v5536 = vmax.f32 %v2985, 0.0
      %v5537 = vmax.f32 %v2987, 0.0
      %v5538 = vmax.f32 %v3146, 0.0
      %v5539 = vmax.f32 %v3148, 0.0
      %v5540 = vmax.f32 %v3307, 0.0
      %v5541 = vmax.f32 %v3309, 0.0
      %v5542 = vmax.f32 %v3468, 0.0
      %v5543 = vmax.f32 %v3470, 0.0
      %v5544 = vmax.f32 %v3629, 0.0
      %v5545 = vmax.f32 %v3631, 0.0
      %v5546 = vmax.f32 %v3790, 0.0
      %v5547 = vmax.f32 %v3792, 0.0
      %v5548 = vmax.f32 %v3951, 0.0
      %v5549 = vmax.f32 %v3953, 0.0
      %v5550 = vmax.f32 %v4112, 0.0
      %v5551 = vmax.f32 %v4114, 0.0
      %v5552 = vmax.f32 %v4273, 0.0
      %v5553 = vmax.f32 %v4275, 0.0
      %v5554 = vmax.f32 %v4434, 0.0
      %v5555 = vmax.f32 %v4436, 0.0
      %v5556 = vmax.f32 %v4595, 0.0
      %v5557 = vmax.f32 %v4597, 0.0
      %v5558 = vmax.f32 %v4756, 0.0
      %v5559 = vmax.f32 %v4758, 0.0
      %v5560 = vadd.f32 %v4760, %v4761
      %v5561 = vadd.f32 %v5560, %v4762
      %v5562 = vadd.f32 %v5561, %v4763
      %v5563 = vadd.f32 %v5562, %v4764
      %v5564 = vadd.f32 %v5563, %v4765
      %v5565 = vadd.f32 %v5564, %v4766
      %v5566 = vadd.f32 %v5565, %v4767
      %v5567 = vadd.f32 %v5566, %v4768
      %v5568 = vadd.f32 %v5567, %v4769
      %v5569 = vadd.f32 %v5568, %v4770
      %v5570 = vadd.f32 %v5569, %v4771
      %v5571 = vadd.f32 %v5570, %v4772
      %v5572 = vadd.f32 %v5571, %v4773
      %v5573 = vadd.f32 %v5572, %v4774
      %v5574 = vadd.f32 %v5573, %v4775
      %v5575 = vadd.f32 %v5574, %v4776
      %v5576 = vadd.f32 %v5575, %v4777
      %v5577 = vadd.f32 %v5576, %v4778
      %v5578 = vadd.f32 %v5577, %v4779
      %v5579 = vadd.f32 %v5578, %v4780
      %v5580 = vadd.f32 %v5579, %v4781
      %v5581 = vadd.f32 %v5580, %v4782
      %v5582 = vadd.f32 %v5581, %v4783
      %v5583 = vadd.f32 %v5582, %v4784
      %v5584 = vadd.f32 %v5583, %v4785
      %v5585 = vadd.f32 %v5584, %v4786
      %v5586 = vadd.f32 %v5585, %v4787
      %v5587 = vadd.f32 %v5586, %v4788
      %v5588 = vadd.f32 %v5587, %v4789
      %v5589 = vadd.f32 %v5588, %v4790
      %v5590 = vadd.f32 %v5589, %v4791
      %v5591 = vadd.f32 %v5590, %v4792
      %v5592 = vadd.f32 %v5591, %v4793
      %v5593 = vadd.f32 %v5592, %v4794
      %v5594 = vadd.f32 %v5593, %v4795
      %v5595 = vadd.f32 %v5594, %v4796
      %v5596 = vadd.f32 %v5595, %v4797
      %v5597 = vadd.f32 %v5596, %v4798
      %v5598 = vadd.f32 %v5597, %v4799
      %v5599 = vadd.f32 %v5598, %v4800
      %v5600 = vadd.f32 %v5599, %v4801
      %v5601 = vadd.f32 %v5600, %v4802
      %v5602 = vadd.f32 %v5601, %v4803
      %v5603 = vadd.f32 %v5602, %v4804
      %v5604 = vadd.f32 %v5603, %v4805
      %v5605 = vadd.f32 %v5604, %v4806
      %v5606 = vadd.f32 %v5605, %v4807
      %v5607 = vadd.f32 %v5606, %v4808
      %v5608 = vadd.f32 %v5607, %v4809
      %5609 = vadd.xlane.f32.xlu0 %v5608
      %v5610 = vpop.xlane.xlu0 %5609
      %v5611 = vadd.f32 %v4810, %v4811
      %v5612 = vadd.f32 %v5611, %v4812
      %v5613 = vadd.f32 %v5612, %v4813
      %v5614 = vadd.f32 %v5613, %v4814
      %v5615 = vadd.f32 %v5614, %v4815
      %v5616 = vadd.f32 %v5615, %v4816
      %v5617 = vadd.f32 %v5616, %v4817
      %v5618 = vadd.f32 %v5617, %v4818
      %v5619 = vadd.f32 %v5618, %v4819
      %v5620 = vadd.f32 %v5619, %v4820
      %v5621 = vadd.f32 %v5620, %v4821
      %v5622 = vadd.f32 %v5621, %v4822
      %v5623 = vadd.f32 %v5622, %v4823
      %v5624 = vadd.f32 %v5623, %v4824
      %v5625 = vadd.f32 %v5624, %v4825
      %v5626 = vadd.f32 %v5625, %v4826
      %v5627 = vadd.f32 %v5626, %v4827
      %v5628 = vadd.f32 %v5627, %v4828
      %v5629 = vadd.f32 %v5628, %v4829
      %v5630 = vadd.f32 %v5629, %v4830
      %v5631 = vadd.f32 %v5630, %v4831
      %v5632 = vadd.f32 %v5631, %v4832
      %v5633 = vadd.f32 %v5632, %v4833
      %v5634 = vadd.f32 %v5633, %v4834
      %v5635 = vadd.f32 %v5634, %v4835
      %v5636 = vadd.f32 %v5635, %v4836
      %v5637 = vadd.f32 %v5636, %v4837
      %v5638 = vadd.f32 %v5637, %v4838
      %v5639 = vadd.f32 %v5638, %v4839
      %v5640 = vadd.f32 %v5639, %v4840
      %v5641 = vadd.f32 %v5640, %v4841
      %v5642 = vadd.f32 %v5641, %v4842
      %v5643 = vadd.f32 %v5642, %v4843
      %v5644 = vadd.f32 %v5643, %v4844
      %v5645 = vadd.f32 %v5644, %v4845
      %v5646 = vadd.f32 %v5645, %v4846
      %v5647 = vadd.f32 %v5646, %v4847
      %v5648 = vadd.f32 %v5647, %v4848
      %v5649 = vadd.f32 %v5648, %v4849
      %v5650 = vadd.f32 %v5649, %v4850
      %v5651 = vadd.f32 %v5650, %v4851
      %v5652 = vadd.f32 %v5651, %v4852
      %v5653 = vadd.f32 %v5652, %v4853
      %v5654 = vadd.f32 %v5653, %v4854
      %v5655 = vadd.f32 %v5654, %v4855
      %v5656 = vadd.f32 %v5655, %v4856
      %v5657 = vadd.f32 %v5656, %v4857
      %v5658 = vadd.f32 %v5657, %v4858
      %v5659 = vadd.f32 %v5658, %v4859
      %5660 = vadd.xlane.f32.xlu0 %v5659
      %v5661 = vpop.xlane.xlu0 %5660
      %v5662 = vadd.f32 %v4860, %v4861
      %v5663 = vadd.f32 %v5662, %v4862
      %v5664 = vadd.f32 %v5663, %v4863
      %v5665 = vadd.f32 %v5664, %v4864
      %v5666 = vadd.f32 %v5665, %v4865
      %v5667 = vadd.f32 %v5666, %v4866
      %v5668 = vadd.f32 %v5667, %v4867
      %v5669 = vadd.f32 %v5668, %v4868
      %v5670 = vadd.f32 %v5669, %v4869
      %v5671 = vadd.f32 %v5670, %v4870
      %v5672 = vadd.f32 %v5671, %v4871
      %v5673 = vadd.f32 %v5672, %v4872
      %v5674 = vadd.f32 %v5673, %v4873
      %v5675 = vadd.f32 %v5674, %v4874
      %v5676 = vadd.f32 %v5675, %v4875
      %v5677 = vadd.f32 %v5676, %v4876
      %v5678 = vadd.f32 %v5677, %v4877
      %v5679 = vadd.f32 %v5678, %v4878
      %v5680 = vadd.f32 %v5679, %v4879
      %v5681 = vadd.f32 %v5680, %v4880
      %v5682 = vadd.f32 %v5681, %v4881
      %v5683 = vadd.f32 %v5682, %v4882
      %v5684 = vadd.f32 %v5683, %v4883
      %v5685 = vadd.f32 %v5684, %v4884
      %v5686 = vadd.f32 %v5685, %v4885
      %v5687 = vadd.f32 %v5686, %v4886
      %v5688 = vadd.f32 %v5687, %v4887
      %v5689 = vadd.f32 %v5688, %v4888
      %v5690 = vadd.f32 %v5689, %v4889
      %v5691 = vadd.f32 %v5690, %v4890
      %v5692 = vadd.f32 %v5691, %v4891
      %v5693 = vadd.f32 %v5692, %v4892
      %v5694 = vadd.f32 %v5693, %v4893
      %v5695 = vadd.f32 %v5694, %v4894
      %v5696 = vadd.f32 %v5695, %v4895
      %v5697 = vadd.f32 %v5696, %v4896
      %v5698 = vadd.f32 %v5697, %v4897
      %v5699 = vadd.f32 %v5698, %v4898
      %v5700 = vadd.f32 %v5699, %v4899
      %v5701 = vadd.f32 %v5700, %v4900
      %v5702 = vadd.f32 %v5701, %v4901
      %v5703 = vadd.f32 %v5702, %v4902
      %v5704 = vadd.f32 %v5703, %v4903
      %v5705 = vadd.f32 %v5704, %v4904
      %v5706 = vadd.f32 %v5705, %v4905
      %v5707 = vadd.f32 %v5706, %v4906
      %v5708 = vadd.f32 %v5707, %v4907
      %v5709 = vadd.f32 %v5708, %v4908
      %v5710 = vadd.f32 %v5709, %v4909
      %5711 = vadd.xlane.f32.xlu0 %v5710
      %v5712 = vpop.xlane.xlu0 %5711
      %v5713 = vadd.f32 %v4910, %v4911
      %v5714 = vadd.f32 %v5713, %v4912
      %v5715 = vadd.f32 %v5714, %v4913
      %v5716 = vadd.f32 %v5715, %v4914
      %v5717 = vadd.f32 %v5716, %v4915
      %v5718 = vadd.f32 %v5717, %v4916
      %v5719 = vadd.f32 %v5718, %v4917
      %v5720 = vadd.f32 %v5719, %v4918
      %v5721 = vadd.f32 %v5720, %v4919
      %v5722 = vadd.f32 %v5721, %v4920
      %v5723 = vadd.f32 %v5722, %v4921
      %v5724 = vadd.f32 %v5723, %v4922
      %v5725 = vadd.f32 %v5724, %v4923
      %v5726 = vadd.f32 %v5725, %v4924
      %v5727 = vadd.f32 %v5726, %v4925
      %v5728 = vadd.f32 %v5727, %v4926
      %v5729 = vadd.f32 %v5728, %v4927
      %v5730 = vadd.f32 %v5729, %v4928
      %v5731 = vadd.f32 %v5730, %v4929
      %v5732 = vadd.f32 %v5731, %v4930
      %v5733 = vadd.f32 %v5732, %v4931
      %v5734 = vadd.f32 %v5733, %v4932
      %v5735 = vadd.f32 %v5734, %v4933
      %v5736 = vadd.f32 %v5735, %v4934
      %v5737 = vadd.f32 %v5736, %v4935
      %v5738 = vadd.f32 %v5737, %v4936
      %v5739 = vadd.f32 %v5738, %v4937
      %v5740 = vadd.f32 %v5739, %v4938
      %v5741 = vadd.f32 %v5740, %v4939
      %v5742 = vadd.f32 %v5741, %v4940
      %v5743 = vadd.f32 %v5742, %v4941
      %v5744 = vadd.f32 %v5743, %v4942
      %v5745 = vadd.f32 %v5744, %v4943
      %v5746 = vadd.f32 %v5745, %v4944
      %v5747 = vadd.f32 %v5746, %v4945
      %v5748 = vadd.f32 %v5747, %v4946
      %v5749 = vadd.f32 %v5748, %v4947
      %v5750 = vadd.f32 %v5749, %v4948
      %v5751 = vadd.f32 %v5750, %v4949
      %v5752 = vadd.f32 %v5751, %v4950
      %v5753 = vadd.f32 %v5752, %v4951
      %v5754 = vadd.f32 %v5753, %v4952
      %v5755 = vadd.f32 %v5754, %v4953
      %v5756 = vadd.f32 %v5755, %v4954
      %v5757 = vadd.f32 %v5756, %v4955
      %v5758 = vadd.f32 %v5757, %v4956
      %v5759 = vadd.f32 %v5758, %v4957
      %v5760 = vadd.f32 %v5759, %v4958
      %v5761 = vadd.f32 %v5760, %v4959
      %5762 = vadd.xlane.f32.xlu0 %v5761
      %v5763 = vpop.xlane.xlu0 %5762
      %v5764 = vadd.f32 %v4960, %v4961
      %v5765 = vadd.f32 %v5764, %v4962
      %v5766 = vadd.f32 %v5765, %v4963
      %v5767 = vadd.f32 %v5766, %v4964
      %v5768 = vadd.f32 %v5767, %v4965
      %v5769 = vadd.f32 %v5768, %v4966
      %v5770 = vadd.f32 %v5769, %v4967
      %v5771 = vadd.f32 %v5770, %v4968
      %v5772 = vadd.f32 %v5771, %v4969
      %v5773 = vadd.f32 %v5772, %v4970
      %v5774 = vadd.f32 %v5773, %v4971
      %v5775 = vadd.f32 %v5774, %v4972
      %v5776 = vadd.f32 %v5775, %v4973
      %v5777 = vadd.f32 %v5776, %v4974
      %v5778 = vadd.f32 %v5777, %v4975
      %v5779 = vadd.f32 %v5778, %v4976
      %v5780 = vadd.f32 %v5779, %v4977
      %v5781 = vadd.f32 %v5780, %v4978
      %v5782 = vadd.f32 %v5781, %v4979
      %v5783 = vadd.f32 %v5782, %v4980
      %v5784 = vadd.f32 %v5783, %v4981
      %v5785 = vadd.f32 %v5784, %v4982
      %v5786 = vadd.f32 %v5785, %v4983
      %v5787 = vadd.f32 %v5786, %v4984
      %v5788 = vadd.f32 %v5787, %v4985
      %v5789 = vadd.f32 %v5788, %v4986
      %v5790 = vadd.f32 %v5789, %v4987
      %v5791 = vadd.f32 %v5790, %v4988
      %v5792 = vadd.f32 %v5791, %v4989
      %v5793 = vadd.f32 %v5792, %v4990
      %v5794 = vadd.f32 %v5793, %v4991
      %v5795 = vadd.f32 %v5794, %v4992
      %v5796 = vadd.f32 %v5795, %v4993
      %v5797 = vadd.f32 %v5796, %v4994
      %v5798 = vadd.f32 %v5797, %v4995
      %v5799 = vadd.f32 %v5798, %v4996
      %v5800 = vadd.f32 %v5799, %v4997
      %v5801 = vadd.f32 %v5800, %v4998
      %v5802 = vadd.f32 %v5801, %v4999
      %v5803 = vadd.f32 %v5802, %v5000
      %v5804 = vadd.f32 %v5803, %v5001
      %v5805 = vadd.f32 %v5804, %v5002
      %v5806 = vadd.f32 %v5805, %v5003
      %v5807 = vadd.f32 %v5806, %v5004
      %v5808 = vadd.f32 %v5807, %v5005
      %v5809 = vadd.f32 %v5808, %v5006
      %v5810 = vadd.f32 %v5809, %v5007
      %v5811 = vadd.f32 %v5810, %v5008
      %v5812 = vadd.f32 %v5811, %v5009
      %5813 = vadd.xlane.f32.xlu0 %v5812
      %v5814 = vpop.xlane.xlu0 %5813
      %v5815 = vadd.f32 %v5010, %v5011
      %v5816 = vadd.f32 %v5815, %v5012
      %v5817 = vadd.f32 %v5816, %v5013
      %v5818 = vadd.f32 %v5817, %v5014
      %v5819 = vadd.f32 %v5818, %v5015
      %v5820 = vadd.f32 %v5819, %v5016
      %v5821 = vadd.f32 %v5820, %v5017
      %v5822 = vadd.f32 %v5821, %v5018
      %v5823 = vadd.f32 %v5822, %v5019
      %v5824 = vadd.f32 %v5823, %v5020
      %v5825 = vadd.f32 %v5824, %v5021
      %v5826 = vadd.f32 %v5825, %v5022
      %v5827 = vadd.f32 %v5826, %v5023
      %v5828 = vadd.f32 %v5827, %v5024
      %v5829 = vadd.f32 %v5828, %v5025
      %v5830 = vadd.f32 %v5829, %v5026
      %v5831 = vadd.f32 %v5830, %v5027
      %v5832 = vadd.f32 %v5831, %v5028
      %v5833 = vadd.f32 %v5832, %v5029
      %v5834 = vadd.f32 %v5833, %v5030
      %v5835 = vadd.f32 %v5834, %v5031
      %v5836 = vadd.f32 %v5835, %v5032
      %v5837 = vadd.f32 %v5836, %v5033
      %v5838 = vadd.f32 %v5837, %v5034
      %v5839 = vadd.f32 %v5838, %v5035
      %v5840 = vadd.f32 %v5839, %v5036
      %v5841 = vadd.f32 %v5840, %v5037
      %v5842 = vadd.f32 %v5841, %v5038
      %v5843 = vadd.f32 %v5842, %v5039
      %v5844 = vadd.f32 %v5843, %v5040
      %v5845 = vadd.f32 %v5844, %v5041
      %v5846 = vadd.f32 %v5845, %v5042
      %v5847 = vadd.f32 %v5846, %v5043
      %v5848 = vadd.f32 %v5847, %v5044
      %v5849 = vadd.f32 %v5848, %v5045
      %v5850 = vadd.f32 %v5849, %v5046
      %v5851 = vadd.f32 %v5850, %v5047
      %v5852 = vadd.f32 %v5851, %v5048
      %v5853 = vadd.f32 %v5852, %v5049
      %v5854 = vadd.f32 %v5853, %v5050
      %v5855 = vadd.f32 %v5854, %v5051
      %v5856 = vadd.f32 %v5855, %v5052
      %v5857 = vadd.f32 %v5856, %v5053
      %v5858 = vadd.f32 %v5857, %v5054
      %v5859 = vadd.f32 %v5858, %v5055
      %v5860 = vadd.f32 %v5859, %v5056
      %v5861 = vadd.f32 %v5860, %v5057
      %v5862 = vadd.f32 %v5861, %v5058
      %v5863 = vadd.f32 %v5862, %v5059
      %5864 = vadd.xlane.f32.xlu0 %v5863
      %v5865 = vpop.xlane.xlu0 %5864
      %v5866 = vadd.f32 %v5060, %v5061
      %v5867 = vadd.f32 %v5866, %v5062
      %v5868 = vadd.f32 %v5867, %v5063
      %v5869 = vadd.f32 %v5868, %v5064
      %v5870 = vadd.f32 %v5869, %v5065
      %v5871 = vadd.f32 %v5870, %v5066
      %v5872 = vadd.f32 %v5871, %v5067
      %v5873 = vadd.f32 %v5872, %v5068
      %v5874 = vadd.f32 %v5873, %v5069
      %v5875 = vadd.f32 %v5874, %v5070
      %v5876 = vadd.f32 %v5875, %v5071
      %v5877 = vadd.f32 %v5876, %v5072
      %v5878 = vadd.f32 %v5877, %v5073
      %v5879 = vadd.f32 %v5878, %v5074
      %v5880 = vadd.f32 %v5879, %v5075
      %v5881 = vadd.f32 %v5880, %v5076
      %v5882 = vadd.f32 %v5881, %v5077
      %v5883 = vadd.f32 %v5882, %v5078
      %v5884 = vadd.f32 %v5883, %v5079
      %v5885 = vadd.f32 %v5884, %v5080
      %v5886 = vadd.f32 %v5885, %v5081
      %v5887 = vadd.f32 %v5886, %v5082
      %v5888 = vadd.f32 %v5887, %v5083
      %v5889 = vadd.f32 %v5888, %v5084
      %v5890 = vadd.f32 %v5889, %v5085
      %v5891 = vadd.f32 %v5890, %v5086
      %v5892 = vadd.f32 %v5891, %v5087
      %v5893 = vadd.f32 %v5892, %v5088
      %v5894 = vadd.f32 %v5893, %v5089
      %v5895 = vadd.f32 %v5894, %v5090
      %v5896 = vadd.f32 %v5895, %v5091
      %v5897 = vadd.f32 %v5896, %v5092
      %v5898 = vadd.f32 %v5897, %v5093
      %v5899 = vadd.f32 %v5898, %v5094
      %v5900 = vadd.f32 %v5899, %v5095
      %v5901 = vadd.f32 %v5900, %v5096
      %v5902 = vadd.f32 %v5901, %v5097
      %v5903 = vadd.f32 %v5902, %v5098
      %v5904 = vadd.f32 %v5903, %v5099
      %v5905 = vadd.f32 %v5904, %v5100
      %v5906 = vadd.f32 %v5905, %v5101
      %v5907 = vadd.f32 %v5906, %v5102
      %v5908 = vadd.f32 %v5907, %v5103
      %v5909 = vadd.f32 %v5908, %v5104
      %v5910 = vadd.f32 %v5909, %v5105
      %v5911 = vadd.f32 %v5910, %v5106
      %v5912 = vadd.f32 %v5911, %v5107
      %v5913 = vadd.f32 %v5912, %v5108
      %v5914 = vadd.f32 %v5913, %v5109
      %5915 = vadd.xlane.f32.xlu0 %v5914
      %v5916 = vpop.xlane.xlu0 %5915
      %v5917 = vadd.f32 %v5110, %v5111
      %v5918 = vadd.f32 %v5917, %v5112
      %v5919 = vadd.f32 %v5918, %v5113
      %v5920 = vadd.f32 %v5919, %v5114
      %v5921 = vadd.f32 %v5920, %v5115
      %v5922 = vadd.f32 %v5921, %v5116
      %v5923 = vadd.f32 %v5922, %v5117
      %v5924 = vadd.f32 %v5923, %v5118
      %v5925 = vadd.f32 %v5924, %v5119
      %v5926 = vadd.f32 %v5925, %v5120
      %v5927 = vadd.f32 %v5926, %v5121
      %v5928 = vadd.f32 %v5927, %v5122
      %v5929 = vadd.f32 %v5928, %v5123
      %v5930 = vadd.f32 %v5929, %v5124
      %v5931 = vadd.f32 %v5930, %v5125
      %v5932 = vadd.f32 %v5931, %v5126
      %v5933 = vadd.f32 %v5932, %v5127
      %v5934 = vadd.f32 %v5933, %v5128
      %v5935 = vadd.f32 %v5934, %v5129
      %v5936 = vadd.f32 %v5935, %v5130
      %v5937 = vadd.f32 %v5936, %v5131
      %v5938 = vadd.f32 %v5937, %v5132
      %v5939 = vadd.f32 %v5938, %v5133
      %v5940 = vadd.f32 %v5939, %v5134
      %v5941 = vadd.f32 %v5940, %v5135
      %v5942 = vadd.f32 %v5941, %v5136
      %v5943 = vadd.f32 %v5942, %v5137
      %v5944 = vadd.f32 %v5943, %v5138
      %v5945 = vadd.f32 %v5944, %v5139
      %v5946 = vadd.f32 %v5945, %v5140
      %v5947 = vadd.f32 %v5946, %v5141
      %v5948 = vadd.f32 %v5947, %v5142
      %v5949 = vadd.f32 %v5948, %v5143
      %v5950 = vadd.f32 %v5949, %v5144
      %v5951 = vadd.f32 %v5950, %v5145
      %v5952 = vadd.f32 %v5951, %v5146
      %v5953 = vadd.f32 %v5952, %v5147
      %v5954 = vadd.f32 %v5953, %v5148
      %v5955 = vadd.f32 %v5954, %v5149
      %v5956 = vadd.f32 %v5955, %v5150
      %v5957 = vadd.f32 %v5956, %v5151
      %v5958 = vadd.f32 %v5957, %v5152
      %v5959 = vadd.f32 %v5958, %v5153
      %v5960 = vadd.f32 %v5959, %v5154
      %v5961 = vadd.f32 %v5960, %v5155
      %v5962 = vadd.f32 %v5961, %v5156
      %v5963 = vadd.f32 %v5962, %v5157
      %v5964 = vadd.f32 %v5963, %v5158
      %v5965 = vadd.f32 %v5964, %v5159
      %5966 = vadd.xlane.f32.xlu0 %v5965
      %v5967 = vpop.xlane.xlu0 %5966
      %v5968 = vadd.f32 %v5160, %v5161
      %v5969 = vadd.f32 %v5968, %v5162
      %v5970 = vadd.f32 %v5969, %v5163
      %v5971 = vadd.f32 %v5970, %v5164
      %v5972 = vadd.f32 %v5971, %v5165
      %v5973 = vadd.f32 %v5972, %v5166
      %v5974 = vadd.f32 %v5973, %v5167
      %v5975 = vadd.f32 %v5974, %v5168
      %v5976 = vadd.f32 %v5975, %v5169
      %v5977 = vadd.f32 %v5976, %v5170
      %v5978 = vadd.f32 %v5977, %v5171
      %v5979 = vadd.f32 %v5978, %v5172
      %v5980 = vadd.f32 %v5979, %v5173
      %v5981 = vadd.f32 %v5980, %v5174
      %v5982 = vadd.f32 %v5981, %v5175
      %v5983 = vadd.f32 %v5982, %v5176
      %v5984 = vadd.f32 %v5983, %v5177
      %v5985 = vadd.f32 %v5984, %v5178
      %v5986 = vadd.f32 %v5985, %v5179
      %v5987 = vadd.f32 %v5986, %v5180
      %v5988 = vadd.f32 %v5987, %v5181
      %v5989 = vadd.f32 %v5988, %v5182
      %v5990 = vadd.f32 %v5989, %v5183
      %v5991 = vadd.f32 %v5990, %v5184
      %v5992 = vadd.f32 %v5991, %v5185
      %v5993 = vadd.f32 %v5992, %v5186
      %v5994 = vadd.f32 %v5993, %v5187
      %v5995 = vadd.f32 %v5994, %v5188
      %v5996 = vadd.f32 %v5995, %v5189
      %v5997 = vadd.f32 %v5996, %v5190
      %v5998 = vadd.f32 %v5997, %v5191
      %v5999 = vadd.f32 %v5998, %v5192
      %v6000 = vadd.f32 %v5999, %v5193
      %v6001 = vadd.f32 %v6000, %v5194
      %v6002 = vadd.f32 %v6001, %v5195
      %v6003 = vadd.f32 %v6002, %v5196
      %v6004 = vadd.f32 %v6003, %v5197
      %v6005 = vadd.f32 %v6004, %v5198
      %v6006 = vadd.f32 %v6005, %v5199
      %v6007 = vadd.f32 %v6006, %v5200
      %v6008 = vadd.f32 %v6007, %v5201
      %v6009 = vadd.f32 %v6008, %v5202
      %v6010 = vadd.f32 %v6009, %v5203
      %v6011 = vadd.f32 %v6010, %v5204
      %v6012 = vadd.f32 %v6011, %v5205
      %v6013 = vadd.f32 %v6012, %v5206
      %v6014 = vadd.f32 %v6013, %v5207
      %v6015 = vadd.f32 %v6014, %v5208
      %v6016 = vadd.f32 %v6015, %v5209
      %6017 = vadd.xlane.f32.xlu0 %v6016
      %v6018 = vpop.xlane.xlu0 %6017
      %v6019 = vadd.f32 %v5210, %v5211
      %v6020 = vadd.f32 %v6019, %v5212
      %v6021 = vadd.f32 %v6020, %v5213
      %v6022 = vadd.f32 %v6021, %v5214
      %v6023 = vadd.f32 %v6022, %v5215
      %v6024 = vadd.f32 %v6023, %v5216
      %v6025 = vadd.f32 %v6024, %v5217
      %v6026 = vadd.f32 %v6025, %v5218
      %v6027 = vadd.f32 %v6026, %v5219
      %v6028 = vadd.f32 %v6027, %v5220
      %v6029 = vadd.f32 %v6028, %v5221
      %v6030 = vadd.f32 %v6029, %v5222
      %v6031 = vadd.f32 %v6030, %v5223
      %v6032 = vadd.f32 %v6031, %v5224
      %v6033 = vadd.f32 %v6032, %v5225
      %v6034 = vadd.f32 %v6033, %v5226
      %v6035 = vadd.f32 %v6034, %v5227
      %v6036 = vadd.f32 %v6035, %v5228
      %v6037 = vadd.f32 %v6036, %v5229
      %v6038 = vadd.f32 %v6037, %v5230
      %v6039 = vadd.f32 %v6038, %v5231
      %v6040 = vadd.f32 %v6039, %v5232
      %v6041 = vadd.f32 %v6040, %v5233
      %v6042 = vadd.f32 %v6041, %v5234
      %v6043 = vadd.f32 %v6042, %v5235
      %v6044 = vadd.f32 %v6043, %v5236
      %v6045 = vadd.f32 %v6044, %v5237
      %v6046 = vadd.f32 %v6045, %v5238
      %v6047 = vadd.f32 %v6046, %v5239
      %v6048 = vadd.f32 %v6047, %v5240
      %v6049 = vadd.f32 %v6048, %v5241
      %v6050 = vadd.f32 %v6049, %v5242
      %v6051 = vadd.f32 %v6050, %v5243
      %v6052 = vadd.f32 %v6051, %v5244
      %v6053 = vadd.f32 %v6052, %v5245
      %v6054 = vadd.f32 %v6053, %v5246
      %v6055 = vadd.f32 %v6054, %v5247
      %v6056 = vadd.f32 %v6055, %v5248
      %v6057 = vadd.f32 %v6056, %v5249
      %v6058 = vadd.f32 %v6057, %v5250
      %v6059 = vadd.f32 %v6058, %v5251
      %v6060 = vadd.f32 %v6059, %v5252
      %v6061 = vadd.f32 %v6060, %v5253
      %v6062 = vadd.f32 %v6061, %v5254
      %v6063 = vadd.f32 %v6062, %v5255
      %v6064 = vadd.f32 %v6063, %v5256
      %v6065 = vadd.f32 %v6064, %v5257
      %v6066 = vadd.f32 %v6065, %v5258
      %v6067 = vadd.f32 %v6066, %v5259
      %6068 = vadd.xlane.f32.xlu0 %v6067
      %v6069 = vpop.xlane.xlu0 %6068
      %v6070 = vadd.f32 %v5260, %v5261
      %v6071 = vadd.f32 %v6070, %v5262
      %v6072 = vadd.f32 %v6071, %v5263
      %v6073 = vadd.f32 %v6072, %v5264
      %v6074 = vadd.f32 %v6073, %v5265
      %v6075 = vadd.f32 %v6074, %v5266
      %v6076 = vadd.f32 %v6075, %v5267
      %v6077 = vadd.f32 %v6076, %v5268
      %v6078 = vadd.f32 %v6077, %v5269
      %v6079 = vadd.f32 %v6078, %v5270
      %v6080 = vadd.f32 %v6079, %v5271
      %v6081 = vadd.f32 %v6080, %v5272
      %v6082 = vadd.f32 %v6081, %v5273
      %v6083 = vadd.f32 %v6082, %v5274
      %v6084 = vadd.f32 %v6083, %v5275
      %v6085 = vadd.f32 %v6084, %v5276
      %v6086 = vadd.f32 %v6085, %v5277
      %v6087 = vadd.f32 %v6086, %v5278
      %v6088 = vadd.f32 %v6087, %v5279
      %v6089 = vadd.f32 %v6088, %v5280
      %v6090 = vadd.f32 %v6089, %v5281
      %v6091 = vadd.f32 %v6090, %v5282
      %v6092 = vadd.f32 %v6091, %v5283
      %v6093 = vadd.f32 %v6092, %v5284
      %v6094 = vadd.f32 %v6093, %v5285
      %v6095 = vadd.f32 %v6094, %v5286
      %v6096 = vadd.f32 %v6095, %v5287
      %v6097 = vadd.f32 %v6096, %v5288
      %v6098 = vadd.f32 %v6097, %v5289
      %v6099 = vadd.f32 %v6098, %v5290
      %v6100 = vadd.f32 %v6099, %v5291
      %v6101 = vadd.f32 %v6100, %v5292
      %v6102 = vadd.f32 %v6101, %v5293
      %v6103 = vadd.f32 %v6102, %v5294
      %v6104 = vadd.f32 %v6103, %v5295
      %v6105 = vadd.f32 %v6104, %v5296
      %v6106 = vadd.f32 %v6105, %v5297
      %v6107 = vadd.f32 %v6106, %v5298
      %v6108 = vadd.f32 %v6107, %v5299
      %v6109 = vadd.f32 %v6108, %v5300
      %v6110 = vadd.f32 %v6109, %v5301
      %v6111 = vadd.f32 %v6110, %v5302
      %v6112 = vadd.f32 %v6111, %v5303
      %v6113 = vadd.f32 %v6112, %v5304
      %v6114 = vadd.f32 %v6113, %v5305
      %v6115 = vadd.f32 %v6114, %v5306
      %v6116 = vadd.f32 %v6115, %v5307
      %v6117 = vadd.f32 %v6116, %v5308
      %v6118 = vadd.f32 %v6117, %v5309
      %6119 = vadd.xlane.f32.xlu0 %v6118
      %v6120 = vpop.xlane.xlu0 %6119
      %v6121 = vadd.f32 %v5310, %v5311
      %v6122 = vadd.f32 %v6121, %v5312
      %v6123 = vadd.f32 %v6122, %v5313
      %v6124 = vadd.f32 %v6123, %v5314
      %v6125 = vadd.f32 %v6124, %v5315
      %v6126 = vadd.f32 %v6125, %v5316
      %v6127 = vadd.f32 %v6126, %v5317
      %v6128 = vadd.f32 %v6127, %v5318
      %v6129 = vadd.f32 %v6128, %v5319
      %v6130 = vadd.f32 %v6129, %v5320
      %v6131 = vadd.f32 %v6130, %v5321
      %v6132 = vadd.f32 %v6131, %v5322
      %v6133 = vadd.f32 %v6132, %v5323
      %v6134 = vadd.f32 %v6133, %v5324
      %v6135 = vadd.f32 %v6134, %v5325
      %v6136 = vadd.f32 %v6135, %v5326
      %v6137 = vadd.f32 %v6136, %v5327
      %v6138 = vadd.f32 %v6137, %v5328
      %v6139 = vadd.f32 %v6138, %v5329
      %v6140 = vadd.f32 %v6139, %v5330
      %v6141 = vadd.f32 %v6140, %v5331
      %v6142 = vadd.f32 %v6141, %v5332
      %v6143 = vadd.f32 %v6142, %v5333
      %v6144 = vadd.f32 %v6143, %v5334
      %v6145 = vadd.f32 %v6144, %v5335
      %v6146 = vadd.f32 %v6145, %v5336
      %v6147 = vadd.f32 %v6146, %v5337
      %v6148 = vadd.f32 %v6147, %v5338
      %v6149 = vadd.f32 %v6148, %v5339
      %v6150 = vadd.f32 %v6149, %v5340
      %v6151 = vadd.f32 %v6150, %v5341
      %v6152 = vadd.f32 %v6151, %v5342
      %v6153 = vadd.f32 %v6152, %v5343
      %v6154 = vadd.f32 %v6153, %v5344
      %v6155 = vadd.f32 %v6154, %v5345
      %v6156 = vadd.f32 %v6155, %v5346
      %v6157 = vadd.f32 %v6156, %v5347
      %v6158 = vadd.f32 %v6157, %v5348
      %v6159 = vadd.f32 %v6158, %v5349
      %v6160 = vadd.f32 %v6159, %v5350
      %v6161 = vadd.f32 %v6160, %v5351
      %v6162 = vadd.f32 %v6161, %v5352
      %v6163 = vadd.f32 %v6162, %v5353
      %v6164 = vadd.f32 %v6163, %v5354
      %v6165 = vadd.f32 %v6164, %v5355
      %v6166 = vadd.f32 %v6165, %v5356
      %v6167 = vadd.f32 %v6166, %v5357
      %v6168 = vadd.f32 %v6167, %v5358
      %v6169 = vadd.f32 %v6168, %v5359
      %6170 = vadd.xlane.f32.xlu0 %v6169
      %v6171 = vpop.xlane.xlu0 %6170
      %v6172 = vadd.f32 %v5360, %v5361
      %v6173 = vadd.f32 %v6172, %v5362
      %v6174 = vadd.f32 %v6173, %v5363
      %v6175 = vadd.f32 %v6174, %v5364
      %v6176 = vadd.f32 %v6175, %v5365
      %v6177 = vadd.f32 %v6176, %v5366
      %v6178 = vadd.f32 %v6177, %v5367
      %v6179 = vadd.f32 %v6178, %v5368
      %v6180 = vadd.f32 %v6179, %v5369
      %v6181 = vadd.f32 %v6180, %v5370
      %v6182 = vadd.f32 %v6181, %v5371
      %v6183 = vadd.f32 %v6182, %v5372
      %v6184 = vadd.f32 %v6183, %v5373
      %v6185 = vadd.f32 %v6184, %v5374
      %v6186 = vadd.f32 %v6185, %v5375
      %v6187 = vadd.f32 %v6186, %v5376
      %v6188 = vadd.f32 %v6187, %v5377
      %v6189 = vadd.f32 %v6188, %v5378
      %v6190 = vadd.f32 %v6189, %v5379
      %v6191 = vadd.f32 %v6190, %v5380
      %v6192 = vadd.f32 %v6191, %v5381
      %v6193 = vadd.f32 %v6192, %v5382
      %v6194 = vadd.f32 %v6193, %v5383
      %v6195 = vadd.f32 %v6194, %v5384
      %v6196 = vadd.f32 %v6195, %v5385
      %v6197 = vadd.f32 %v6196, %v5386
      %v6198 = vadd.f32 %v6197, %v5387
      %v6199 = vadd.f32 %v6198, %v5388
      %v6200 = vadd.f32 %v6199, %v5389
      %v6201 = vadd.f32 %v6200, %v5390
      %v6202 = vadd.f32 %v6201, %v5391
      %v6203 = vadd.f32 %v6202, %v5392
      %v6204 = vadd.f32 %v6203, %v5393
      %v6205 = vadd.f32 %v6204, %v5394
      %v6206 = vadd.f32 %v6205, %v5395
      %v6207 = vadd.f32 %v6206, %v5396
      %v6208 = vadd.f32 %v6207, %v5397
      %v6209 = vadd.f32 %v6208, %v5398
      %v6210 = vadd.f32 %v6209, %v5399
      %v6211 = vadd.f32 %v6210, %v5400
      %v6212 = vadd.f32 %v6211, %v5401
      %v6213 = vadd.f32 %v6212, %v5402
      %v6214 = vadd.f32 %v6213, %v5403
      %v6215 = vadd.f32 %v6214, %v5404
      %v6216 = vadd.f32 %v6215, %v5405
      %v6217 = vadd.f32 %v6216, %v5406
      %v6218 = vadd.f32 %v6217, %v5407
      %v6219 = vadd.f32 %v6218, %v5408
      %v6220 = vadd.f32 %v6219, %v5409
      %6221 = vadd.xlane.f32.xlu0 %v6220
      %v6222 = vpop.xlane.xlu0 %6221
      %v6223 = vadd.f32 %v5410, %v5411
      %v6224 = vadd.f32 %v6223, %v5412
      %v6225 = vadd.f32 %v6224, %v5413
      %v6226 = vadd.f32 %v6225, %v5414
      %v6227 = vadd.f32 %v6226, %v5415
      %v6228 = vadd.f32 %v6227, %v5416
      %v6229 = vadd.f32 %v6228, %v5417
      %v6230 = vadd.f32 %v6229, %v5418
      %v6231 = vadd.f32 %v6230, %v5419
      %v6232 = vadd.f32 %v6231, %v5420
      %v6233 = vadd.f32 %v6232, %v5421
      %v6234 = vadd.f32 %v6233, %v5422
      %v6235 = vadd.f32 %v6234, %v5423
      %v6236 = vadd.f32 %v6235, %v5424
      %v6237 = vadd.f32 %v6236, %v5425
      %v6238 = vadd.f32 %v6237, %v5426
      %v6239 = vadd.f32 %v6238, %v5427
      %v6240 = vadd.f32 %v6239, %v5428
      %v6241 = vadd.f32 %v6240, %v5429
      %v6242 = vadd.f32 %v6241, %v5430
      %v6243 = vadd.f32 %v6242, %v5431
      %v6244 = vadd.f32 %v6243, %v5432
      %v6245 = vadd.f32 %v6244, %v5433
      %v6246 = vadd.f32 %v6245, %v5434
      %v6247 = vadd.f32 %v6246, %v5435
      %v6248 = vadd.f32 %v6247, %v5436
      %v6249 = vadd.f32 %v6248, %v5437
      %v6250 = vadd.f32 %v6249, %v5438
      %v6251 = vadd.f32 %v6250, %v5439
      %v6252 = vadd.f32 %v6251, %v5440
      %v6253 = vadd.f32 %v6252, %v5441
      %v6254 = vadd.f32 %v6253, %v5442
      %v6255 = vadd.f32 %v6254, %v5443
      %v6256 = vadd.f32 %v6255, %v5444
      %v6257 = vadd.f32 %v6256, %v5445
      %v6258 = vadd.f32 %v6257, %v5446
      %v6259 = vadd.f32 %v6258, %v5447
      %v6260 = vadd.f32 %v6259, %v5448
      %v6261 = vadd.f32 %v6260, %v5449
      %v6262 = vadd.f32 %v6261, %v5450
      %v6263 = vadd.f32 %v6262, %v5451
      %v6264 = vadd.f32 %v6263, %v5452
      %v6265 = vadd.f32 %v6264, %v5453
      %v6266 = vadd.f32 %v6265, %v5454
      %v6267 = vadd.f32 %v6266, %v5455
      %v6268 = vadd.f32 %v6267, %v5456
      %v6269 = vadd.f32 %v6268, %v5457
      %v6270 = vadd.f32 %v6269, %v5458
      %v6271 = vadd.f32 %v6270, %v5459
      %6272 = vadd.xlane.f32.xlu0 %v6271
      %v6273 = vpop.xlane.xlu0 %6272
      %v6274 = vadd.f32 %v5460, %v5461
      %v6275 = vadd.f32 %v6274, %v5462
      %v6276 = vadd.f32 %v6275, %v5463
      %v6277 = vadd.f32 %v6276, %v5464
      %v6278 = vadd.f32 %v6277, %v5465
      %v6279 = vadd.f32 %v6278, %v5466
      %v6280 = vadd.f32 %v6279, %v5467
      %v6281 = vadd.f32 %v6280, %v5468
      %v6282 = vadd.f32 %v6281, %v5469
      %v6283 = vadd.f32 %v6282, %v5470
      %v6284 = vadd.f32 %v6283, %v5471
      %v6285 = vadd.f32 %v6284, %v5472
      %v6286 = vadd.f32 %v6285, %v5473
      %v6287 = vadd.f32 %v6286, %v5474
      %v6288 = vadd.f32 %v6287, %v5475
      %v6289 = vadd.f32 %v6288, %v5476
      %v6290 = vadd.f32 %v6289, %v5477
      %v6291 = vadd.f32 %v6290, %v5478
      %v6292 = vadd.f32 %v6291, %v5479
      %v6293 = vadd.f32 %v6292, %v5480
      %v6294 = vadd.f32 %v6293, %v5481
      %v6295 = vadd.f32 %v6294, %v5482
      %v6296 = vadd.f32 %v6295, %v5483
      %v6297 = vadd.f32 %v6296, %v5484
      %v6298 = vadd.f32 %v6297, %v5485
      %v6299 = vadd.f32 %v6298, %v5486
      %v6300 = vadd.f32 %v6299, %v5487
      %v6301 = vadd.f32 %v6300, %v5488
      %v6302 = vadd.f32 %v6301, %v5489
      %v6303 = vadd.f32 %v6302, %v5490
      %v6304 = vadd.f32 %v6303, %v5491
      %v6305 = vadd.f32 %v6304, %v5492
      %v6306 = vadd.f32 %v6305, %v5493
      %v6307 = vadd.f32 %v6306, %v5494
      %v6308 = vadd.f32 %v6307, %v5495
      %v6309 = vadd.f32 %v6308, %v5496
      %v6310 = vadd.f32 %v6309, %v5497
      %v6311 = vadd.f32 %v6310, %v5498
      %v6312 = vadd.f32 %v6311, %v5499
      %v6313 = vadd.f32 %v6312, %v5500
      %v6314 = vadd.f32 %v6313, %v5501
      %v6315 = vadd.f32 %v6314, %v5502
      %v6316 = vadd.f32 %v6315, %v5503
      %v6317 = vadd.f32 %v6316, %v5504
      %v6318 = vadd.f32 %v6317, %v5505
      %v6319 = vadd.f32 %v6318, %v5506
      %v6320 = vadd.f32 %v6319, %v5507
      %v6321 = vadd.f32 %v6320, %v5508
      %v6322 = vadd.f32 %v6321, %v5509
      %6323 = vadd.xlane.f32.xlu0 %v6322
      %v6324 = vpop.xlane.xlu0 %6323
      %v6325 = vadd.f32 %v5510, %v5511
      %v6326 = vadd.f32 %v6325, %v5512
      %v6327 = vadd.f32 %v6326, %v5513
      %v6328 = vadd.f32 %v6327, %v5514
      %v6329 = vadd.f32 %v6328, %v5515
      %v6330 = vadd.f32 %v6329, %v5516
      %v6331 = vadd.f32 %v6330, %v5517
      %v6332 = vadd.f32 %v6331, %v5518
      %v6333 = vadd.f32 %v6332, %v5519
      %v6334 = vadd.f32 %v6333, %v5520
      %v6335 = vadd.f32 %v6334, %v5521
      %v6336 = vadd.f32 %v6335, %v5522
      %v6337 = vadd.f32 %v6336, %v5523
      %v6338 = vadd.f32 %v6337, %v5524
      %v6339 = vadd.f32 %v6338, %v5525
      %v6340 = vadd.f32 %v6339, %v5526
      %v6341 = vadd.f32 %v6340, %v5527
      %v6342 = vadd.f32 %v6341, %v5528
      %v6343 = vadd.f32 %v6342, %v5529
      %v6344 = vadd.f32 %v6343, %v5530
      %v6345 = vadd.f32 %v6344, %v5531
      %v6346 = vadd.f32 %v6345, %v5532
      %v6347 = vadd.f32 %v6346, %v5533
      %v6348 = vadd.f32 %v6347, %v5534
      %v6349 = vadd.f32 %v6348, %v5535
      %v6350 = vadd.f32 %v6349, %v5536
      %v6351 = vadd.f32 %v6350, %v5537
      %v6352 = vadd.f32 %v6351, %v5538
      %v6353 = vadd.f32 %v6352, %v5539
      %v6354 = vadd.f32 %v6353, %v5540
      %v6355 = vadd.f32 %v6354, %v5541
      %v6356 = vadd.f32 %v6355, %v5542
      %v6357 = vadd.f32 %v6356, %v5543
      %v6358 = vadd.f32 %v6357, %v5544
      %v6359 = vadd.f32 %v6358, %v5545
      %v6360 = vadd.f32 %v6359, %v5546
      %v6361 = vadd.f32 %v6360, %v5547
      %v6362 = vadd.f32 %v6361, %v5548
      %v6363 = vadd.f32 %v6362, %v5549
      %v6364 = vadd.f32 %v6363, %v5550
      %v6365 = vadd.f32 %v6364, %v5551
      %v6366 = vadd.f32 %v6365, %v5552
      %v6367 = vadd.f32 %v6366, %v5553
      %v6368 = vadd.f32 %v6367, %v5554
      %v6369 = vadd.f32 %v6368, %v5555
      %v6370 = vadd.f32 %v6369, %v5556
      %v6371 = vadd.f32 %v6370, %v5557
      %v6372 = vadd.f32 %v6371, %v5558
      %v6373 = vadd.f32 %v6372, %v5559
      %6374 = vadd.xlane.f32.xlu0 %v6373
      %v6375 = vpop.xlane.xlu0 %6374
      %v6376 = vld [vmem:[%s3] sm:$0xff]
      %v6377 = vld [vmem:[%s4] sm:$0xff]
      %6378 = vmatprep.subr.mxu0 0.0
      %6379 = vmatpush1.msra.mxu0 %v5610
      %6380 = vmatprep.subr.mxu0 0.0
      %6381 = vmatpush1.msra.mxu0 %v5661
      %6382 = vmatprep.subr.mxu0 0.0
      %6383 = vmatpush1.msra.mxu0 %v5712
      %6384 = vmatprep.subr.mxu0 0.0
      %6385 = vmatpush1.msra.mxu0 %v5763
      %6386 = vmatprep.subr.mxu0 0.0
      %6387 = vmatpush1.msra.mxu0 %v5814
      %6388 = vmatprep.subr.mxu0 0.0
      %6389 = vmatpush1.msra.mxu0 %v5865
      %6390 = vmatprep.subr.mxu0 0.0
      %6391 = vmatpush1.msra.mxu0 %v5916
      %6392 = vmatprep.subr.mxu0 0.0
      %6393 = vmatpush1.msra.mxu0 %v5967
      %6394 = vmatprep.subr.mxu0 0.0
      %6395 = vmatpush1.msra.mxu0 %v6018
      %6396 = vmatprep.subr.mxu0 0.0
      %6397 = vmatpush1.msra.mxu0 %v6069
      %6398 = vmatprep.subr.mxu0 0.0
      %6399 = vmatpush1.msra.mxu0 %v6120
      %6400 = vmatprep.subr.mxu0 0.0
      %6401 = vmatpush1.msra.mxu0 %v6171
      %6402 = vmatprep.subr.mxu0 0.0
      %6403 = vmatpush1.msra.mxu0 %v6222
      %6404 = vmatprep.subr.mxu0 0.0
      %6405 = vmatpush1.msra.mxu0 %v6273
      %6406 = vmatprep.subr.mxu0 0.0
      %6407 = vmatpush1.msra.mxu0 %v6324
      %6408 = vmatprep.subr.mxu0 0.0
      %6409 = vmatpush1.msra.mxu0 %v6375
      %6410 = vmatprep.subr.mxu0 0.0
      %6411 = vmatpush1.msra.mxu0 0.0
      %6412 = vmatprep.subr.mxu0 0.0
      %6413 = vmatpush1.msra.mxu0 0.0
      %6414 = vmatprep.subr.mxu0 0.0
      %6415 = vmatpush1.msra.mxu0 0.0
      %6416 = vmatprep.subr.mxu0 0.0
      %6417 = vmatpush1.msra.mxu0 0.0
      %6418 = vmatprep.subr.mxu0 0.0
      %6419 = vmatpush1.msra.mxu0 0.0
      %6420 = vmatprep.subr.mxu0 0.0
      %6421 = vmatpush1.msra.mxu0 0.0
      %6422 = vmatprep.subr.mxu0 0.0
      %6423 = vmatpush1.msra.mxu0 0.0
      %6424 = vmatprep.subr.mxu0 0.0
      %6425 = vmatpush1.msra.mxu0 0.0
      %6426 = vmatprep.subr.mxu0 0.0
      %6427 = vmatpush1.msra.mxu0 0.0
      %6428 = vmatprep.subr.mxu0 0.0
      %6429 = vmatpush1.msra.mxu0 0.0
      %6430 = vmatprep.subr.mxu0 0.0
      %6431 = vmatpush1.msra.mxu0 0.0
      %6432 = vmatprep.subr.mxu0 0.0
      %6433 = vmatpush1.msra.mxu0 0.0
      %6434 = vmatprep.subr.mxu0 0.0
      %6435 = vmatpush1.msra.mxu0 0.0
      %6436 = vmatprep.subr.mxu0 0.0
      %6437 = vmatpush1.msra.mxu0 0.0
      %6438 = vmatprep.subr.mxu0 0.0
      %6439 = vmatpush1.msra.mxu0 0.0
      %6440 = vmatprep.subr.mxu0 0.0
      %6441 = vmatpush1.msra.mxu0 0.0
      %6442 = vmatprep.mubr.f32.mxu0 0.0
      %6443 = vmatmul.mubr.f32.gmra.mrb[0].mxu0 %v6376
      %v6444 = vpop.f32.mrb[0].mxu0
      %v6445 = vadd.f32 %v6377, %v6444
      %v6446 = vpop.f32.mrb[0].mxu0
      %6447 = vdwg.mxu0
      %v6448 = vlaneseq
      %v6449 = vshrl.u32 %v6448, 7
      %vm6450 = vcmp.lt.s32.totalorder %v6449, 3
      %v6451 = vsel %vm6450, %v6445, -1e+30
      %vm6452 = vcmask 7168
      %v6453 = vsel %vm6452, %v6451, -inf
      %v6454 = vrot.slane %v6453, 4
      %v6455 = vmax.f32 %v6453, %v6454
      %v6456 = vrot.slane %v6455, 2
      %v6457 = vmax.f32 %v6455, %v6456
      %v6458 = vrot.slane %v6457, 1
      %v6459 = vmax.f32 %v6457, %v6458
      %v6460 = vsub.f32 %v6451, %v6459
      %v6461 = vmul.f32 %v6460, 1.442695
      %v6462 = vpow.pop %v6461
      %v6463 = vsel %vm6450, %v6462, 0.0
      %v6464 = vsel %vm6452, %v6463, 0.0
      %v6465 = vrot.slane %v6464, 4
      %v6466 = vadd.f32 %v6464, %v6465
      %v6467 = vrot.slane %v6466, 2
      %v6468 = vadd.f32 %v6466, %v6467
      %v6469 = vrot.slane %v6468, 1
      %v6470 = vadd.f32 %v6468, %v6469
      %v6471 = vrcp.pop %v6470
      %v6472 = vmul.f32 %v6463, %v6471
      %6473 = vst.msk [vmem:[%s222] sm:$0xff] %vm6452, %v6472
      %p6474 = scmp.lt.s32.totalorder %s16, 1
      %s6475 = scalar_select %p6474, %s16, 1
      %s6476 = smul.addr %s6475, 8
      %s6477 = scalar_lea.vmem %s5, %s6476
      // Predicated region
      $region41: #{tpu_custom_call.1} parent=39 // pred_check
        %p6478 = pneg %p144
      $region42: #{tpu_custom_call.1} parent=39 // pred_check_branch
        %6480 = sbr.rel (%p6478) target = $region44
      $region43: #{tpu_custom_call.1} parent=39 // pred_region
        _
      $region44: #{tpu_custom_call.1} parent=39 // pred_fallthru
        _
    $region40: #{tpu_custom_call.1} parent=5 // pred_fallthru
      _
    %p6481 = scmp.le.s32.totalorder 2, %s11
    // Predicated region
    $region45: #{tpu_custom_call.1} parent=5 // pred_check
      %p6482 = pneg %p6481
    $region46: #{tpu_custom_call.1} parent=5 // pred_check_branch
      %6484 = sbr.rel (%p6482) target = $region48
    $region47: #{tpu_custom_call.1} parent=5 // pred_region
      %s6485 = ssub.s32 %s11, 2
      // Predicated region
      $region49: #{tpu_custom_call.1} parent=47 // pred_check
        %p6486 = pneg %p150
      $region50: #{tpu_custom_call.1} parent=47 // pred_check_branch
        %6488 = sbr.rel (%p6486) target = $region52
      $region51: #{tpu_custom_call.1} parent=47 // pred_region
        %p6489 = scmp.lt.s32.totalorder %s17, 1
        %s6490 = scalar_select %p6489, %s17, 1
        %s6491 = smul.addr %s6490, 8
        %s6492 = scalar_lea.vmem %s5, %s6491
      $region52: #{tpu_custom_call.1} parent=47 // pred_fallthru
        _
    $region48: #{tpu_custom_call.1} parent=5 // pred_fallthru
      _
  $region6: #{tpu_custom_call.1} parent=0 // loop_footer
    %s15 = sadd.s32 1, %s11
  $region7: #{tpu_custom_call.1} parent=0 // loop_footer_branch
    %10 = sbr.rel target = $region3
  $region8: #{tpu_custom_call.1} parent=0 // loop_exit
    _

</llo_original>
